<compile_context>
chip_gen: v5e
topology: v5e:2x2
jax: 0.10.0
libtpu: 0.0.40
codegen_flags: <defaults>
</compile_context>

<pallas_src>
import functools
import math

import jax
import jax.numpy as jnp
from jax.experimental import pallas as pl
from jax.experimental.pallas import tpu as pltpu

PER_LAYER = 8   # w_in, conv_w, conv_b, w_x_fused, b_dt, (-exp(A_log))^T tiled, D tiled, w_out
_VMEM = pl.BlockSpec(memory_space=pltpu.MemorySpace.VMEM)


# --------------------------------------------------------------------------------------- #
# Fused decoder kernel
# --------------------------------------------------------------------------------------- #
def _decoder_kernel(n_layers, *refs):
    bi_ref, feat_ref, mtok_ref, pos_ref = refs[0:4]
    w_refs = refs[4:4 + PER_LAYER * n_layers]
    dec_w_ref, dec_b_ref = refs[4 + PER_LAYER * n_layers: 6 + PER_LAYER * n_layers]
    patch_ref, mask_ref, cls_ref = refs[6 + PER_LAYER * n_layers: 9 + PER_LAYER * n_layers]
    h_scr = refs[9 + PER_LAYER * n_layers]            # VMEM scratch (Tp, N, B*Di)

    f32 = jnp.float32
    Tvis, B, D = feat_ref.shape
    Np = bi_ref.shape[0]                              # ADT_component
    Tp = Np + 1                                       # sequence length through the Mamba stack
    E = dec_w_ref.shape[1]                            # emb_ADT
    Di = w_refs[0].shape[1] // 2                      # d_inner
    L = B * Di                                        # packed (batch, channel) lane axis

    # ---------------- token assembly: mask-token fill + gather + positional embedding ----
    bi = bi_ref[...]                                  # (Np, B) int32
    feat = feat_ref[...]                              # (Tvis, B, D)
    mtok = mtok_ref[...]                              # (1, D)
    pos = pos_ref[...]                                # (Tp, D)

    j_row = jax.lax.broadcasted_iota(jnp.int32, (1, Tvis), 1)
    cls_row = (j_row == 0).astype(f32)                # t = 0 always reads source token 0 (cls)

    x_rows = []
    for b in range(B):
        src = bi[:, b:b + 1] + 1                      # (Np, 1) source index for t >= 1
        one_hot = jnp.concatenate([cls_row, (src == j_row).astype(f32)], axis=0)    # (Tp, Tvis)
        use_mask = jnp.concatenate([jnp.zeros((1, 1), f32),
                                    (src >= Tvis).astype(f32)], axis=0)             # (Tp, 1)
        xb = jnp.dot(one_hot, feat[:, b, :], preferred_element_type=f32)            # (Tp, D)
        x_rows.append(xb + use_mask * mtok + pos)
    x = jnp.concatenate(x_rows, axis=0)               # (B*Tp, D), token rows = b*Tp + t

    # lane-block selectors: which lanes of the packed (B*Di) axis belong to which batch b
    lane_io = jax.lax.broadcasted_iota(jnp.int32, (1, 1, L), 2)
    sel_f = [((lane_io >= b * Di) & (lane_io < (b + 1) * Di)).astype(f32) for b in range(B)]

    # ---------------- one Mamba block (weights already in kernel layout) ------------------
    def mamba_block(x_tok, w_in, cw, cb, w_xf, bdt, neg_a, d_skip, w_out):
        K = cw.shape[0]                               # d_conv
        N = neg_a.shape[0]                            # d_state

        xz = jnp.dot(x_tok, w_in, preferred_element_type=f32)        # (B*Tp, 2*Di)
        z = xz[:, Di:]                                                # gate input, token rows

        # wide lane-dense layout: (Tp, L), lanes = [b0: Di chans | b1: Di chans | ...]
        x_in_l = jnp.concatenate([xz[b * Tp:(b + 1) * Tp, :Di] for b in range(B)], axis=1)

        # causal depthwise conv along time via K-1 shifted adds (weights pre-tiled to (K, L))
        acc = cb + x_in_l * cw[K - 1:K, :]
        for s in range(1, K):
            shifted = jnp.concatenate([jnp.zeros((s, L), f32), x_in_l[:Tp - s, :]], axis=0)
            acc = acc + shifted * cw[K - 1 - s:K - s, :]
        xa_l = acc * jax.nn.sigmoid(acc)                              # SiLU, (Tp, L)

        # x_proj with the dt projection folded in offline: single (Di, Di+2N) matmul
        xa_tok = jnp.concatenate([xa_l[:, b * Di:(b + 1) * Di] for b in range(B)], axis=0)
        xdbl = jnp.dot(xa_tok, w_xf, preferred_element_type=f32)      # (B*Tp, Di + 2N)

        dt_l = jax.nn.softplus(
            jnp.concatenate([xdbl[b * Tp:(b + 1) * Tp, :Di] for b in range(B)], axis=1) + bdt)

        # B(t) broadcast over each batch block's Di lanes (hoisted out of the scan)
        B_exp = jnp.zeros((Tp, N, L), f32)
        for b in range(B):
            Bb = xdbl[b * Tp:(b + 1) * Tp, Di:Di + N]                 # (Tp, N)
            B_exp = B_exp + sel_f[b] * Bb[:, :, None]

        # hoisted transcendentals: one exp over (Tp, N, L) instead of Tp tiny ones
        dA = jnp.exp(dt_l[:, None, :] * neg_a[None, :, :])            # (Tp, N, L)
        dBx = (dt_l * xa_l)[:, None, :] * B_exp                       # (Tp, N, L)

        # selective scan: per-step work is two vector ops on an (N, L) = (16, 128) state
        h = jnp.zeros((N, L), f32)
        for t in range(Tp):
            h = h * dA[t] + dBx[t]
            h_scr[t] = h

        # C(t) broadcast + reduction over the state axis, once for all t
        C_exp = jnp.zeros((Tp, N, L), f32)
        for b in range(B):
            Cb = xdbl[b * Tp:(b + 1) * Tp, Di + N:Di + 2 * N]         # (Tp, N)
            C_exp = C_exp + sel_f[b] * Cb[:, :, None]
        y_l = jnp.sum(h_scr[...] * C_exp, axis=1) + d_skip * xa_l     # (Tp, L)

        # back to token rows, gate with SiLU(z), out-project
        y_tok = jnp.concatenate([y_l[:, b * Di:(b + 1) * Di] for b in range(B)], axis=0)
        y_tok = y_tok * (z * jax.nn.sigmoid(z))
        return jnp.dot(y_tok, w_out, preferred_element_type=f32)      # (B*Tp, D)

    for li in range(n_layers):
        lw = [r[...] for r in w_refs[li * PER_LAYER:(li + 1) * PER_LAYER]]
        x = mamba_block(x, *lw)

    # ---------------- outputs: cls token, decoded patches, reconstruction mask ------------
    cls_ref[...] = jnp.concatenate([x[b * Tp:b * Tp + 1, :] for b in range(B)], axis=0)

    patches_tok = jnp.concatenate([x[b * Tp + 1:(b + 1) * Tp, :] for b in range(B)], axis=0)
    dec = jnp.dot(patches_tok, dec_w_ref[...], preferred_element_type=f32) + dec_b_ref[...]
    patch_ref[...] = dec.reshape(B, Np, E)

    masked = (bi >= (Tvis - 1)).astype(f32)                            # (Np, B)
    mask3 = jnp.concatenate(
        [jnp.broadcast_to(masked[:, b:b + 1], (Np, E))[None] for b in range(B)], axis=0)
    mask_ref[...] = mask3                                              # (B, Np, E)


# --------------------------------------------------------------------------------------- #
# Wrapper
# --------------------------------------------------------------------------------------- #
def adt_decoder_forward(features, backward_indexes, params):
    """features: (T, B, emb_dim) f32 (seq-first); backward_indexes: (ADT_component, B) int32."""
    Tvis, B, D = features.shape
    Np = backward_indexes.shape[0]
    Tp = Np + 1
    assert Tvis <= Tp, "more visible tokens than ADT_component + 1"

    layers = params["mamba_layers"]
    n_layers = len(layers)
    Di = layers[0][0].shape[1] // 2
    N_state, L = layers[0][5].shape
    assert L == B * Di, "params were prepared for a different batch size"
    E = params["dec_w"].shape[1]

    flat = [w for layer in layers for w in layer]
    kernel = functools.partial(_decoder_kernel, n_layers)

    patches, mask, cls = pl.pallas_call(
        kernel,
        out_shape=(jax.ShapeDtypeStruct((B, Np, E), jnp.float32),
                   jax.ShapeDtypeStruct((B, Np, E), jnp.float32),
                   jax.ShapeDtypeStruct((B, D), jnp.float32)),
        in_specs=[_VMEM] * (6 + len(flat)),
        out_specs=(_VMEM, _VMEM, _VMEM),
        scratch_shapes=[pltpu.VMEM((Tp, N_state, L), jnp.float32)],
    )(backward_indexes, features, params["mask_token"], params["pos_embedding"],
      *flat, params["dec_w"], params["dec_b"])

    # contiguous (bitcast) reshapes to the module's (B, 1, ADT_component*emb_ADT) convention
    patches = patches.reshape(B, 1, Np * E)
    mask = mask.reshape(B, 1, Np * E)
    return patches, mask, [cls]


# --------------------------------------------------------------------------------------- #
# Synthetic parameters (PyTorch-equivalent layout) + offline prep into kernel layout
# --------------------------------------------------------------------------------------- #
def init_raw_params(key, emb_dim, emb_ADT, ADT_component, decoder_layer,
                    d_state=16, d_conv=4, expand=2):
    d_inner = expand * emb_dim
    dt_rank = math.ceil(emb_dim / 16)
    ks = jax.random.split(key, 3 + decoder_layer)
    layers = []
    for i in range(decoder_layer):
        lk = jax.random.split(ks[2 + i], 6)
        layers.append(dict(
            w_in=0.18 * jax.random.normal(lk[0], (emb_dim, 2 * d_inner), jnp.float32),
            conv_w=0.30 * jax.random.normal(lk[1], (d_conv, d_inner), jnp.float32),
            conv_b=jnp.zeros((1, d_inner), jnp.float32),
            w_x=0.15 * jax.random.normal(lk[2], (d_inner, dt_rank + 2 * d_state), jnp.float32),
            w_dt=0.50 * jax.random.normal(lk[3], (dt_rank, d_inner), jnp.float32),
            b_dt=0.10 * jax.random.normal(lk[4], (1, d_inner), jnp.float32),
            a_log=jnp.log(jnp.broadcast_to(
                jnp.arange(1, d_state + 1, dtype=jnp.float32), (d_inner, d_state))),
            d=jnp.ones((1, d_inner), jnp.float32),
            w_out=0.15 * jax.random.normal(lk[5], (d_inner, emb_dim), jnp.float32)))
    return dict(
        mask_token=0.02 * jax.random.normal(ks[0], (1, 1, emb_dim), jnp.float32),
        pos_embedding=0.02 * jax.random.normal(ks[1], (ADT_component + 1, 1, emb_dim), jnp.float32),
        mamba_layers=tuple(layers),
        dec_w=0.18 * jax.random.normal(ks[-1], (emb_dim, emb_ADT), jnp.float32),
        dec_b=jnp.zeros((1, emb_ADT), jnp.float32))


def prepare_params(raw, batch):
    """Fold / re-tile parameters into the fused-kernel layout (done once, offline)."""
    tile = lambda a: jnp.concatenate([a] * batch, axis=1)    # lane-tile over batch blocks
    layers = []
    for p in raw["mamba_layers"]:
        r = p["w_dt"].shape[0]
        w_xf = jnp.concatenate([p["w_x"][:, :r] @ p["w_dt"], p["w_x"][:, r:]], axis=1)
        neg_a_t = -(jnp.exp(p["a_log"]).T)                   # (N, Di)
        layers.append((p["w_in"], tile(p["conv_w"]), tile(p["conv_b"]), w_xf,
                       tile(p["b_dt"]), tile(neg_a_t), tile(p["d"]), p["w_out"]))
    return dict(
        mask_token=raw["mask_token"].reshape(1, -1),
        pos_embedding=raw["pos_embedding"].reshape(raw["pos_embedding"].shape[0], -1),
        mamba_layers=tuple(layers),
        dec_w=raw["dec_w"], dec_b=raw["dec_b"])


# --------------------------------------------------------------------------------------- #
# Pure-JAX reference (mirrors the PyTorch module) -- verification only
# --------------------------------------------------------------------------------------- #
def _reference_mamba(x, p):
    B, T, Dm = x.shape
    Di = p["w_in"].shape[1] // 2
    K = p["conv_w"].shape[0]
    N = p["a_log"].shape[1]
    r = p["w_dt"].shape[0]

    xz = (x.reshape(B * T, Dm) @ p["w_in"]).reshape(B, T, 2 * Di)
    x_in, z = xz[:, :, :Di], xz[:, :, Di:]

    x_pad = jnp.concatenate([jnp.zeros((B, K - 1, Di), jnp.float32), x_in], axis=1)
    acc = p["conv_b"].reshape(1, 1, Di)
    for k in range(K):
        acc = acc + x_pad[:, k:k + T, :] * p["conv_w"][k].reshape(1, 1, Di)
    xa = acc * jax.nn.sigmoid(acc)

    xdbl = xa.reshape(B * T, Di) @ p["w_x"]
    dt = jax.nn.softplus(xdbl[:, :r] @ p["w_dt"] + p["b_dt"]).reshape(B, T, Di)
    Bm = xdbl[:, r:r + N].reshape(B, T, N)
    Cm = xdbl[:, r + N:].reshape(B, T, N)

    A = -jnp.exp(p["a_log"])
    h = jnp.zeros((B, Di, N), jnp.float32)
    ys = []
    for t in range(T):
        dA = jnp.exp(dt[:, t, :, None] * A[None])
        h = h * dA + dt[:, t, :, None] * Bm[:, t, None, :] * xa[:, t, :, None]
        ys.append(jnp.sum(h * Cm[:, t, None, :], axis=-1) + p["d"] * xa[:, t, :])
    y = jnp.stack(ys, axis=1)
    y = y * (z * jax.nn.sigmoid(z))
    return (y.reshape(B * T, Di) @ p["w_out"]).reshape(B, T, Dm)


def _reference_forward(features, backward_indexes, raw):
    Tvis, B, Dm = features.shape
    bi = jnp.concatenate(
        [jnp.zeros((1, B), backward_indexes.dtype), backward_indexes + 1], axis=0)
    Tp = bi.shape[0]
    feats = jnp.concatenate(
        [features, jnp.broadcast_to(raw["mask_token"], (Tp - Tvis, B, Dm))], axis=0)
    feats = jnp.take_along_axis(feats, jnp.broadcast_to(bi[:, :, None], (Tp, B, Dm)), axis=0)
    feats = feats + raw["pos_embedding"]

    x = jnp.transpose(feats, (1, 0, 2))
    for p in raw["mamba_layers"]:
        x = _reference_mamba(x, p)
    feats = jnp.transpose(x, (1, 0, 2))

    cls = feats[0]
    patches = feats[1:] @ raw["dec_w"] + raw["dec_b"]
    mask = jnp.zeros_like(patches).at[Tvis - 1:].set(1.0)
    mask = jnp.take_along_axis(
        mask, jnp.broadcast_to(backward_indexes[:, :, None], patches.shape), axis=0)

    patches = jnp.transpose(patches, (1, 0, 2)).reshape(B, 1, -1)
    mask = jnp.transpose(mask, (1, 0, 2)).reshape(B, 1, -1)
    return patches, mask, cls


# --------------------------------------------------------------------------------------- #
if __name__ == "__main__":
    emb_dim, emb_ADT, ADT_component, decoder_layer = 32, 10, 11, 2
    B, T_vis = 2, 5   # cls token + 4 visible ADT components from the encoder

    key = jax.random.PRNGKey(0)
    k_feat, k_idx, k_par = jax.random.split(key, 3)

    features = jax.random.normal(k_feat, (T_vis, B, emb_dim), jnp.float32)
    backward_indexes = jnp.stack(
        [jax.random.permutation(jax.random.fold_in(k_idx, b), ADT_component)
         for b in range(B)], axis=1).astype(jnp.int32)                  # (11, 2)

    raw = init_raw_params(k_par, emb_dim, emb_ADT, ADT_component, decoder_layer)
    params = prepare_params(raw, B)

    fwd = jax.jit(adt_decoder_forward)
    patches, mask, all_cls = fwd(features, backward_indexes, params)
    jax.block_until_ready((patches, mask, all_cls))

    assert patches.shape == (B, 1, ADT_component * emb_ADT)
    assert mask.shape == (B, 1, ADT_component * emb_ADT)
    assert all_cls[0].shape == (B, emb_dim)

    # numerical check against a pure-JAX/XLA mirror of the PyTorch forward
    # (loose tolerance: TPU default matmul precision rounds MXU inputs to ~bf16)
    ref_patches, ref_mask, ref_cls = _reference_forward(features, backward_indexes, raw)
    assert bool(jnp.allclose(patches, ref_patches, rtol=5e-2, atol=5e-2)), "patches mismatch"
    assert bool(jnp.allclose(mask, ref_mask)), "mask mismatch"
    assert bool(jnp.allclose(all_cls[0], ref_cls, rtol=5e-2, atol=5e-2)), "cls mismatch"

    print("KERNEL_OK")
</pallas_src>

<mosaic_0001>
module attributes {stable_mosaic.version = 11 : i64} {
  func.func @_decoder_kernel(%arg0: memref<11x2xi32, #tpu.memory_space<vmem>>, %arg1: memref<5x2x32xf32, #tpu.memory_space<vmem>>, %arg2: memref<1x32xf32, #tpu.memory_space<vmem>>, %arg3: memref<12x32xf32, #tpu.memory_space<vmem>>, %arg4: memref<32x128xf32, #tpu.memory_space<vmem>>, %arg5: memref<4x128xf32, #tpu.memory_space<vmem>>, %arg6: memref<1x128xf32, #tpu.memory_space<vmem>>, %arg7: memref<64x96xf32, #tpu.memory_space<vmem>>, %arg8: memref<1x128xf32, #tpu.memory_space<vmem>>, %arg9: memref<16x128xf32, #tpu.memory_space<vmem>>, %arg10: memref<1x128xf32, #tpu.memory_space<vmem>>, %arg11: memref<64x32xf32, #tpu.memory_space<vmem>>, %arg12: memref<32x128xf32, #tpu.memory_space<vmem>>, %arg13: memref<4x128xf32, #tpu.memory_space<vmem>>, %arg14: memref<1x128xf32, #tpu.memory_space<vmem>>, %arg15: memref<64x96xf32, #tpu.memory_space<vmem>>, %arg16: memref<1x128xf32, #tpu.memory_space<vmem>>, %arg17: memref<16x128xf32, #tpu.memory_space<vmem>>, %arg18: memref<1x128xf32, #tpu.memory_space<vmem>>, %arg19: memref<64x32xf32, #tpu.memory_space<vmem>>, %arg20: memref<32x10xf32, #tpu.memory_space<vmem>>, %arg21: memref<1x10xf32, #tpu.memory_space<vmem>>, %arg22: memref<2x11x10xf32, #tpu.memory_space<vmem>>, %arg23: memref<2x11x10xf32, #tpu.memory_space<vmem>>, %arg24: memref<2x32xf32, #tpu.memory_space<vmem>>, %arg25: memref<12x16x128xf32, #tpu.memory_space<vmem>>) attributes {dimension_semantics = [], scalar_prefetch = 0 : i64, scratch_operands = 1 : i64, tpu.core_type = #tpu.core_type<tc>} {
    %c0 = arith.constant 0 : index
    %c0_0 = arith.constant 0 : index
    %0 = vector.load %arg0[%c0, %c0_0] : memref<11x2xi32, #tpu.memory_space<vmem>>, vector<11x2xi32>
    %c0_1 = arith.constant 0 : index
    %c0_2 = arith.constant 0 : index
    %c0_3 = arith.constant 0 : index
    %1 = vector.load %arg1[%c0_1, %c0_2, %c0_3] : memref<5x2x32xf32, #tpu.memory_space<vmem>>, vector<5x2x32xf32>
    %c0_4 = arith.constant 0 : index
    %c0_5 = arith.constant 0 : index
    %2 = vector.load %arg2[%c0_4, %c0_5] : memref<1x32xf32, #tpu.memory_space<vmem>>, vector<1x32xf32>
    %c0_6 = arith.constant 0 : index
    %c0_7 = arith.constant 0 : index
    %3 = vector.load %arg3[%c0_6, %c0_7] : memref<12x32xf32, #tpu.memory_space<vmem>>, vector<12x32xf32>
    %4 = tpu.iota {dimensions = array<i32: 1>} : vector<1x5xi32>
    %c0_i32 = arith.constant 0 : i32
    %5 = vector.broadcast %c0_i32 : i32 to vector<1x5xi32>
    %6 = arith.cmpi eq, %4, %5 : vector<1x5xi32>
    %7 = arith.extui %6 : vector<1x5xi1> to vector<1x5xi32>
    %8 = arith.sitofp %7 : vector<1x5xi32> to vector<1x5xf32>
    %9 = vector.extract_strided_slice %0 {offsets = [0, 0], sizes = [11, 1], strides = [1, 1]} : vector<11x2xi32> to vector<11x1xi32>
    %c1_i32 = arith.constant 1 : i32
    %10 = vector.broadcast %c1_i32 : i32 to vector<11x1xi32>
    %11 = arith.addi %9, %10 : vector<11x1xi32>
    %12 = vector.broadcast %11 : vector<11x1xi32> to vector<11x5xi32>
    %13 = vector.broadcast %4 : vector<1x5xi32> to vector<11x5xi32>
    %14 = arith.cmpi eq, %12, %13 : vector<11x5xi32>
    %15 = arith.extui %14 : vector<11x5xi1> to vector<11x5xi32>
    %16 = arith.sitofp %15 : vector<11x5xi32> to vector<11x5xf32>
    %17 = tpu.concatenate %8, %16 in 0 : vector<1x5xf32>, vector<11x5xf32> -> vector<12x5xf32>
    %cst = arith.constant 0.000000e+00 : f32
    %18 = vector.broadcast %cst : f32 to vector<1x1xf32>
    %c5_i32 = arith.constant 5 : i32
    %19 = vector.broadcast %c5_i32 : i32 to vector<11x1xi32>
    %20 = arith.cmpi sge, %11, %19 : vector<11x1xi32>
    %21 = arith.extui %20 : vector<11x1xi1> to vector<11x1xi32>
    %22 = arith.sitofp %21 : vector<11x1xi32> to vector<11x1xf32>
    %23 = tpu.concatenate %18, %22 in 0 : vector<1x1xf32>, vector<11x1xf32> -> vector<12x1xf32>
    %24 = vector.extract_strided_slice %1 {offsets = [0, 0, 0], sizes = [5, 1, 32], strides = [1, 1, 1]} : vector<5x2x32xf32> to vector<5x1x32xf32>
    %25 = vector.shape_cast %24 : vector<5x1x32xf32> to vector<5x32xf32>
    %cst_8 = arith.constant dense<0.000000e+00> : vector<12x32xf32>
    %26 = tpu.matmul %17, %25, %cst_8 {dimension_numbers = #tpu.dot_dimension_numbers<[1], [0], [0], [1], [0, 0, 1, 1], [], []>} : vector<12x5xf32>, vector<5x32xf32>, vector<12x32xf32> -> vector<12x32xf32>
    %27 = vector.broadcast %23 : vector<12x1xf32> to vector<12x32xf32>
    %28 = vector.broadcast %2 : vector<1x32xf32> to vector<12x32xf32>
    %29 = arith.mulf %27, %28 : vector<12x32xf32>
    %30 = arith.addf %26, %29 : vector<12x32xf32>
    %31 = arith.addf %30, %3 : vector<12x32xf32>
    %32 = vector.extract_strided_slice %0 {offsets = [0, 1], sizes = [11, 1], strides = [1, 1]} : vector<11x2xi32> to vector<11x1xi32>
    %c1_i32_9 = arith.constant 1 : i32
    %33 = vector.broadcast %c1_i32_9 : i32 to vector<11x1xi32>
    %34 = arith.addi %32, %33 : vector<11x1xi32>
    %35 = vector.broadcast %34 : vector<11x1xi32> to vector<11x5xi32>
    %36 = vector.broadcast %4 : vector<1x5xi32> to vector<11x5xi32>
    %37 = arith.cmpi eq, %35, %36 : vector<11x5xi32>
    %38 = arith.extui %37 : vector<11x5xi1> to vector<11x5xi32>
    %39 = arith.sitofp %38 : vector<11x5xi32> to vector<11x5xf32>
    %40 = tpu.concatenate %8, %39 in 0 : vector<1x5xf32>, vector<11x5xf32> -> vector<12x5xf32>
    %cst_10 = arith.constant 0.000000e+00 : f32
    %41 = vector.broadcast %cst_10 : f32 to vector<1x1xf32>
    %c5_i32_11 = arith.constant 5 : i32
    %42 = vector.broadcast %c5_i32_11 : i32 to vector<11x1xi32>
    %43 = arith.cmpi sge, %34, %42 : vector<11x1xi32>
    %44 = arith.extui %43 : vector<11x1xi1> to vector<11x1xi32>
    %45 = arith.sitofp %44 : vector<11x1xi32> to vector<11x1xf32>
    %46 = tpu.concatenate %41, %45 in 0 : vector<1x1xf32>, vector<11x1xf32> -> vector<12x1xf32>
    %47 = vector.extract_strided_slice %1 {offsets = [0, 1, 0], sizes = [5, 1, 32], strides = [1, 1, 1]} : vector<5x2x32xf32> to vector<5x1x32xf32>
    %48 = vector.shape_cast %47 : vector<5x1x32xf32> to vector<5x32xf32>
    %cst_12 = arith.constant dense<0.000000e+00> : vector<12x32xf32>
    %49 = tpu.matmul %40, %48, %cst_12 {dimension_numbers = #tpu.dot_dimension_numbers<[1], [0], [0], [1], [0, 0, 1, 1], [], []>} : vector<12x5xf32>, vector<5x32xf32>, vector<12x32xf32> -> vector<12x32xf32>
    %50 = vector.broadcast %46 : vector<12x1xf32> to vector<12x32xf32>
    %51 = vector.broadcast %2 : vector<1x32xf32> to vector<12x32xf32>
    %52 = arith.mulf %50, %51 : vector<12x32xf32>
    %53 = arith.addf %49, %52 : vector<12x32xf32>
    %54 = arith.addf %53, %3 : vector<12x32xf32>
    %55 = tpu.concatenate %31, %54 in 0 : vector<12x32xf32>, vector<12x32xf32> -> vector<24x32xf32>
    %56 = tpu.iota {dimensions = array<i32: 2>} : vector<1x1x128xi32>
    %c0_i32_13 = arith.constant 0 : i32
    %57 = vector.broadcast %c0_i32_13 : i32 to vector<1x1x128xi32>
    %58 = arith.cmpi sge, %56, %57 : vector<1x1x128xi32>
    %c64_i32 = arith.constant 64 : i32
    %59 = vector.broadcast %c64_i32 : i32 to vector<1x1x128xi32>
    %60 = arith.cmpi slt, %56, %59 : vector<1x1x128xi32>
    %61 = arith.andi %58, %60 : vector<1x1x128xi1>
    %62 = arith.extui %61 : vector<1x1x128xi1> to vector<1x1x128xi32>
    %63 = arith.sitofp %62 : vector<1x1x128xi32> to vector<1x1x128xf32>
    %c64_i32_14 = arith.constant 64 : i32
    %64 = vector.broadcast %c64_i32_14 : i32 to vector<1x1x128xi32>
    %65 = arith.cmpi sge, %56, %64 : vector<1x1x128xi32>
    %c128_i32 = arith.constant 128 : i32
    %66 = vector.broadcast %c128_i32 : i32 to vector<1x1x128xi32>
    %67 = arith.cmpi slt, %56, %66 : vector<1x1x128xi32>
    %68 = arith.andi %65, %67 : vector<1x1x128xi1>
    %69 = arith.extui %68 : vector<1x1x128xi1> to vector<1x1x128xi32>
    %70 = arith.sitofp %69 : vector<1x1x128xi32> to vector<1x1x128xf32>
    %c0_15 = arith.constant 0 : index
    %c0_16 = arith.constant 0 : index
    %71 = vector.load %arg4[%c0_15, %c0_16] : memref<32x128xf32, #tpu.memory_space<vmem>>, vector<32x128xf32>
    %c0_17 = arith.constant 0 : index
    %c0_18 = arith.constant 0 : index
    %72 = vector.load %arg5[%c0_17, %c0_18] : memref<4x128xf32, #tpu.memory_space<vmem>>, vector<4x128xf32>
    %c0_19 = arith.constant 0 : index
    %c0_20 = arith.constant 0 : index
    %73 = vector.load %arg6[%c0_19, %c0_20] : memref<1x128xf32, #tpu.memory_space<vmem>>, vector<1x128xf32>
    %c0_21 = arith.constant 0 : index
    %c0_22 = arith.constant 0 : index
    %74 = vector.load %arg7[%c0_21, %c0_22] : memref<64x96xf32, #tpu.memory_space<vmem>>, vector<64x96xf32>
    %c0_23 = arith.constant 0 : index
    %c0_24 = arith.constant 0 : index
    %75 = vector.load %arg8[%c0_23, %c0_24] : memref<1x128xf32, #tpu.memory_space<vmem>>, vector<1x128xf32>
    %c0_25 = arith.constant 0 : index
    %c0_26 = arith.constant 0 : index
    %76 = vector.load %arg9[%c0_25, %c0_26] : memref<16x128xf32, #tpu.memory_space<vmem>>, vector<16x128xf32>
    %c0_27 = arith.constant 0 : index
    %c0_28 = arith.constant 0 : index
    %77 = vector.load %arg10[%c0_27, %c0_28] : memref<1x128xf32, #tpu.memory_space<vmem>>, vector<1x128xf32>
    %c0_29 = arith.constant 0 : index
    %c0_30 = arith.constant 0 : index
    %78 = vector.load %arg11[%c0_29, %c0_30] : memref<64x32xf32, #tpu.memory_space<vmem>>, vector<64x32xf32>
    %cst_31 = arith.constant dense<0.000000e+00> : vector<24x128xf32>
    %79 = tpu.matmul %55, %71, %cst_31 {dimension_numbers = #tpu.dot_dimension_numbers<[1], [0], [0], [1], [0, 0, 1, 1], [], []>} : vector<24x32xf32>, vector<32x128xf32>, vector<24x128xf32> -> vector<24x128xf32>
    %80 = vector.extract_strided_slice %79 {offsets = [0, 64], sizes = [24, 64], strides = [1, 1]} : vector<24x128xf32> to vector<24x64xf32>
    %81 = vector.extract_strided_slice %79 {offsets = [0, 0], sizes = [12, 64], strides = [1, 1]} : vector<24x128xf32> to vector<12x64xf32>
    %82 = vector.extract_strided_slice %79 {offsets = [12, 0], sizes = [12, 64], strides = [1, 1]} : vector<24x128xf32> to vector<12x64xf32>
    %83 = tpu.concatenate %81, %82 in 1 : vector<12x64xf32>, vector<12x64xf32> -> vector<12x128xf32>
    %84 = vector.extract_strided_slice %72 {offsets = [3, 0], sizes = [1, 128], strides = [1, 1]} : vector<4x128xf32> to vector<1x128xf32>
    %85 = vector.broadcast %84 : vector<1x128xf32> to vector<12x128xf32>
    %86 = arith.mulf %83, %85 : vector<12x128xf32>
    %87 = vector.broadcast %73 : vector<1x128xf32> to vector<12x128xf32>
    %88 = arith.addf %87, %86 : vector<12x128xf32>
    %cst_32 = arith.constant 0.000000e+00 : f32
    %89 = vector.broadcast %cst_32 : f32 to vector<1x128xf32>
    %90 = vector.extract_strided_slice %83 {offsets = [0, 0], sizes = [11, 128], strides = [1, 1]} : vector<12x128xf32> to vector<11x128xf32>
    %91 = tpu.concatenate %89, %90 in 0 : vector<1x128xf32>, vector<11x128xf32> -> vector<12x128xf32>
    %92 = vector.extract_strided_slice %72 {offsets = [2, 0], sizes = [1, 128], strides = [1, 1]} : vector<4x128xf32> to vector<1x128xf32>
    %93 = vector.broadcast %92 : vector<1x128xf32> to vector<12x128xf32>
    %94 = arith.mulf %91, %93 : vector<12x128xf32>
    %95 = arith.addf %88, %94 : vector<12x128xf32>
    %cst_33 = arith.constant 0.000000e+00 : f32
    %96 = vector.broadcast %cst_33 : f32 to vector<2x128xf32>
    %97 = vector.extract_strided_slice %83 {offsets = [0, 0], sizes = [10, 128], strides = [1, 1]} : vector<12x128xf32> to vector<10x128xf32>
    %98 = tpu.concatenate %96, %97 in 0 : vector<2x128xf32>, vector<10x128xf32> -> vector<12x128xf32>
    %99 = vector.extract_strided_slice %72 {offsets = [1, 0], sizes = [1, 128], strides = [1, 1]} : vector<4x128xf32> to vector<1x128xf32>
    %100 = vector.broadcast %99 : vector<1x128xf32> to vector<12x128xf32>
    %101 = arith.mulf %98, %100 : vector<12x128xf32>
    %102 = arith.addf %95, %101 : vector<12x128xf32>
    %cst_34 = arith.constant 0.000000e+00 : f32
    %103 = vector.broadcast %cst_34 : f32 to vector<3x128xf32>
    %104 = vector.extract_strided_slice %83 {offsets = [0, 0], sizes = [9, 128], strides = [1, 1]} : vector<12x128xf32> to vector<9x128xf32>
    %105 = tpu.concatenate %103, %104 in 0 : vector<3x128xf32>, vector<9x128xf32> -> vector<12x128xf32>
    %106 = vector.extract_strided_slice %72 {offsets = [0, 0], sizes = [1, 128], strides = [1, 1]} : vector<4x128xf32> to vector<1x128xf32>
    %107 = vector.broadcast %106 : vector<1x128xf32> to vector<12x128xf32>
    %108 = arith.mulf %105, %107 : vector<12x128xf32>
    %109 = arith.addf %102, %108 : vector<12x128xf32>
    %110 = arith.negf %109 : vector<12x128xf32>
    %111 = math.exp %110 : vector<12x128xf32>
    %cst_35 = arith.constant 1.000000e+00 : f32
    %112 = vector.broadcast %cst_35 : f32 to vector<12x128xf32>
    %113 = arith.addf %112, %111 : vector<12x128xf32>
    %114 = arith.divf %112, %113 : vector<12x128xf32>
    %115 = arith.mulf %109, %114 : vector<12x128xf32>
    %116 = vector.extract_strided_slice %115 {offsets = [0, 0], sizes = [12, 64], strides = [1, 1]} : vector<12x128xf32> to vector<12x64xf32>
    %117 = vector.extract_strided_slice %115 {offsets = [0, 64], sizes = [12, 64], strides = [1, 1]} : vector<12x128xf32> to vector<12x64xf32>
    %118 = tpu.concatenate %116, %117 in 0 : vector<12x64xf32>, vector<12x64xf32> -> vector<24x64xf32>
    %cst_36 = arith.constant dense<0.000000e+00> : vector<24x96xf32>
    %119 = tpu.matmul %118, %74, %cst_36 {dimension_numbers = #tpu.dot_dimension_numbers<[1], [0], [0], [1], [0, 0, 1, 1], [], []>} : vector<24x64xf32>, vector<64x96xf32>, vector<24x96xf32> -> vector<24x96xf32>
    %120 = vector.extract_strided_slice %119 {offsets = [0, 0], sizes = [12, 64], strides = [1, 1]} : vector<24x96xf32> to vector<12x64xf32>
    %121 = vector.extract_strided_slice %119 {offsets = [12, 0], sizes = [12, 64], strides = [1, 1]} : vector<24x96xf32> to vector<12x64xf32>
    %122 = tpu.concatenate %120, %121 in 1 : vector<12x64xf32>, vector<12x64xf32> -> vector<12x128xf32>
    %123 = vector.broadcast %75 : vector<1x128xf32> to vector<12x128xf32>
    %124 = arith.addf %122, %123 : vector<12x128xf32>
    %cst_37 = arith.constant 0.000000e+00 : f32
    %125 = vector.broadcast %cst_37 : f32 to vector<12x128xf32>
    %126 = arith.maximumf %124, %125 : vector<12x128xf32>
    %127 = vector.broadcast %cst_37 : f32 to vector<12x128xf32>
    %128 = arith.subf %124, %127 : vector<12x128xf32>
    %129 = arith.cmpf one, %128, %128 : vector<12x128xf32>
    %130 = vector.broadcast %cst_37 : f32 to vector<12x128xf32>
    %131 = arith.addf %124, %130 : vector<12x128xf32>
    %132 = math.absf %128 : vector<12x128xf32>
    %cst_38 = arith.constant 0.000000e+00 : f32
    %133 = vector.broadcast %cst_38 : f32 to vector<12x128xf32>
    %134 = arith.subf %133, %132 : vector<12x128xf32>
    %135 = math.exp %134 : vector<12x128xf32>
    %136 = math.log1p %135 : vector<12x128xf32>
    %137 = arith.addf %126, %136 : vector<12x128xf32>
    %138 = arith.select %129, %131, %137 : vector<12x128xi1>, vector<12x128xf32>
    %cst_39 = arith.constant 0.000000e+00 : f32
    %139 = vector.broadcast %cst_39 : f32 to vector<12x16x128xf32>
    %140 = vector.extract_strided_slice %119 {offsets = [0, 64], sizes = [12, 16], strides = [1, 1]} : vector<24x96xf32> to vector<12x16xf32>
    %141 = vector.shape_cast %140 : vector<12x16xf32> to vector<12x16x1xf32>
    %142 = vector.broadcast %63 : vector<1x1x128xf32> to vector<12x16x128xf32>
    %143 = vector.broadcast %141 : vector<12x16x1xf32> to vector<12x16x128xf32>
    %144 = arith.mulf %142, %143 : vector<12x16x128xf32>
    %145 = arith.addf %139, %144 : vector<12x16x128xf32>
    %146 = vector.extract_strided_slice %119 {offsets = [12, 64], sizes = [12, 16], strides = [1, 1]} : vector<24x96xf32> to vector<12x16xf32>
    %147 = vector.shape_cast %146 : vector<12x16xf32> to vector<12x16x1xf32>
    %148 = vector.broadcast %70 : vector<1x1x128xf32> to vector<12x16x128xf32>
    %149 = vector.broadcast %147 : vector<12x16x1xf32> to vector<12x16x128xf32>
    %150 = arith.mulf %148, %149 : vector<12x16x128xf32>
    %151 = arith.addf %145, %150 : vector<12x16x128xf32>
    %152 = vector.shape_cast %138 : vector<12x128xf32> to vector<12x1x128xf32>
    %153 = vector.shape_cast %76 : vector<16x128xf32> to vector<1x16x128xf32>
    %154 = vector.broadcast %152 : vector<12x1x128xf32> to vector<12x16x128xf32>
    %155 = vector.broadcast %153 : vector<1x16x128xf32> to vector<12x16x128xf32>
    %156 = arith.mulf %154, %155 : vector<12x16x128xf32>
    %157 = math.exp %156 : vector<12x16x128xf32>
    %158 = arith.mulf %138, %115 : vector<12x128xf32>
    %159 = vector.shape_cast %158 : vector<12x128xf32> to vector<12x1x128xf32>
    %160 = vector.broadcast %159 : vector<12x1x128xf32> to vector<12x16x128xf32>
    %161 = arith.mulf %160, %151 : vector<12x16x128xf32>
    %cst_40 = arith.constant 0.000000e+00 : f32
    %162 = vector.broadcast %cst_40 : f32 to vector<16x128xf32>
    %163 = vector.extract_strided_slice %157 {offsets = [0, 0, 0], sizes = [1, 16, 128], strides = [1, 1, 1]} : vector<12x16x128xf32> to vector<1x16x128xf32>
    %164 = vector.shape_cast %163 : vector<1x16x128xf32> to vector<16x128xf32>
    %165 = arith.mulf %162, %164 : vector<16x128xf32>
    %166 = vector.extract_strided_slice %161 {offsets = [0, 0, 0], sizes = [1, 16, 128], strides = [1, 1, 1]} : vector<12x16x128xf32> to vector<1x16x128xf32>
    %167 = vector.shape_cast %166 : vector<1x16x128xf32> to vector<16x128xf32>
    %168 = arith.addf %165, %167 : vector<16x128xf32>
    %c0_41 = arith.constant 0 : index
    %c0_42 = arith.constant 0 : index
    %c0_43 = arith.constant 0 : index
    %169 = vector.load %arg25[%c0_41, %c0_42, %c0_43] : memref<12x16x128xf32, #tpu.memory_space<vmem>>, vector<1x16x128xf32>
    %170 = vector.shape_cast %169 : vector<1x16x128xf32> to vector<16x128xf32>
    %171 = vector.shape_cast %168 : vector<16x128xf32> to vector<1x16x128xf32>
    tpu.vector_store %arg25[%c0_41, %c0_42, %c0_43], %171 {strides = array<i32>} : memref<12x16x128xf32, #tpu.memory_space<vmem>>, vector<1x16x128xf32>,
    %172 = vector.extract_strided_slice %157 {offsets = [1, 0, 0], sizes = [1, 16, 128], strides = [1, 1, 1]} : vector<12x16x128xf32> to vector<1x16x128xf32>
    %173 = vector.shape_cast %172 : vector<1x16x128xf32> to vector<16x128xf32>
    %174 = arith.mulf %168, %173 : vector<16x128xf32>
    %175 = vector.extract_strided_slice %161 {offsets = [1, 0, 0], sizes = [1, 16, 128], strides = [1, 1, 1]} : vector<12x16x128xf32> to vector<1x16x128xf32>
    %176 = vector.shape_cast %175 : vector<1x16x128xf32> to vector<16x128xf32>
    %177 = arith.addf %174, %176 : vector<16x128xf32>
    %c1 = arith.constant 1 : index
    %c0_44 = arith.constant 0 : index
    %c0_45 = arith.constant 0 : index
    %178 = vector.load %arg25[%c1, %c0_44, %c0_45] : memref<12x16x128xf32, #tpu.memory_space<vmem>>, vector<1x16x128xf32>
    %179 = vector.shape_cast %178 : vector<1x16x128xf32> to vector<16x128xf32>
    %180 = vector.shape_cast %177 : vector<16x128xf32> to vector<1x16x128xf32>
    tpu.vector_store %arg25[%c1, %c0_44, %c0_45], %180 {strides = array<i32>} : memref<12x16x128xf32, #tpu.memory_space<vmem>>, vector<1x16x128xf32>,
    %181 = vector.extract_strided_slice %157 {offsets = [2, 0, 0], sizes = [1, 16, 128], strides = [1, 1, 1]} : vector<12x16x128xf32> to vector<1x16x128xf32>
    %182 = vector.shape_cast %181 : vector<1x16x128xf32> to vector<16x128xf32>
    %183 = arith.mulf %177, %182 : vector<16x128xf32>
    %184 = vector.extract_strided_slice %161 {offsets = [2, 0, 0], sizes = [1, 16, 128], strides = [1, 1, 1]} : vector<12x16x128xf32> to vector<1x16x128xf32>
    %185 = vector.shape_cast %184 : vector<1x16x128xf32> to vector<16x128xf32>
    %186 = arith.addf %183, %185 : vector<16x128xf32>
    %c2 = arith.constant 2 : index
    %c0_46 = arith.constant 0 : index
    %c0_47 = arith.constant 0 : index
    %187 = vector.load %arg25[%c2, %c0_46, %c0_47] : memref<12x16x128xf32, #tpu.memory_space<vmem>>, vector<1x16x128xf32>
    %188 = vector.shape_cast %187 : vector<1x16x128xf32> to vector<16x128xf32>
    %189 = vector.shape_cast %186 : vector<16x128xf32> to vector<1x16x128xf32>
    tpu.vector_store %arg25[%c2, %c0_46, %c0_47], %189 {strides = array<i32>} : memref<12x16x128xf32, #tpu.memory_space<vmem>>, vector<1x16x128xf32>,
    %190 = vector.extract_strided_slice %157 {offsets = [3, 0, 0], sizes = [1, 16, 128], strides = [1, 1, 1]} : vector<12x16x128xf32> to vector<1x16x128xf32>
    %191 = vector.shape_cast %190 : vector<1x16x128xf32> to vector<16x128xf32>
    %192 = arith.mulf %186, %191 : vector<16x128xf32>
    %193 = vector.extract_strided_slice %161 {offsets = [3, 0, 0], sizes = [1, 16, 128], strides = [1, 1, 1]} : vector<12x16x128xf32> to vector<1x16x128xf32>
    %194 = vector.shape_cast %193 : vector<1x16x128xf32> to vector<16x128xf32>
    %195 = arith.addf %192, %194 : vector<16x128xf32>
    %c3 = arith.constant 3 : index
    %c0_48 = arith.constant 0 : index
    %c0_49 = arith.constant 0 : index
    %196 = vector.load %arg25[%c3, %c0_48, %c0_49] : memref<12x16x128xf32, #tpu.memory_space<vmem>>, vector<1x16x128xf32>
    %197 = vector.shape_cast %196 : vector<1x16x128xf32> to vector<16x128xf32>
    %198 = vector.shape_cast %195 : vector<16x128xf32> to vector<1x16x128xf32>
    tpu.vector_store %arg25[%c3, %c0_48, %c0_49], %198 {strides = array<i32>} : memref<12x16x128xf32, #tpu.memory_space<vmem>>, vector<1x16x128xf32>,
    %199 = vector.extract_strided_slice %157 {offsets = [4, 0, 0], sizes = [1, 16, 128], strides = [1, 1, 1]} : vector<12x16x128xf32> to vector<1x16x128xf32>
    %200 = vector.shape_cast %199 : vector<1x16x128xf32> to vector<16x128xf32>
    %201 = arith.mulf %195, %200 : vector<16x128xf32>
    %202 = vector.extract_strided_slice %161 {offsets = [4, 0, 0], sizes = [1, 16, 128], strides = [1, 1, 1]} : vector<12x16x128xf32> to vector<1x16x128xf32>
    %203 = vector.shape_cast %202 : vector<1x16x128xf32> to vector<16x128xf32>
    %204 = arith.addf %201, %203 : vector<16x128xf32>
    %c4 = arith.constant 4 : index
    %c0_50 = arith.constant 0 : index
    %c0_51 = arith.constant 0 : index
    %205 = vector.load %arg25[%c4, %c0_50, %c0_51] : memref<12x16x128xf32, #tpu.memory_space<vmem>>, vector<1x16x128xf32>
    %206 = vector.shape_cast %205 : vector<1x16x128xf32> to vector<16x128xf32>
    %207 = vector.shape_cast %204 : vector<16x128xf32> to vector<1x16x128xf32>
    tpu.vector_store %arg25[%c4, %c0_50, %c0_51], %207 {strides = array<i32>} : memref<12x16x128xf32, #tpu.memory_space<vmem>>, vector<1x16x128xf32>,
    %208 = vector.extract_strided_slice %157 {offsets = [5, 0, 0], sizes = [1, 16, 128], strides = [1, 1, 1]} : vector<12x16x128xf32> to vector<1x16x128xf32>
    %209 = vector.shape_cast %208 : vector<1x16x128xf32> to vector<16x128xf32>
    %210 = arith.mulf %204, %209 : vector<16x128xf32>
    %211 = vector.extract_strided_slice %161 {offsets = [5, 0, 0], sizes = [1, 16, 128], strides = [1, 1, 1]} : vector<12x16x128xf32> to vector<1x16x128xf32>
    %212 = vector.shape_cast %211 : vector<1x16x128xf32> to vector<16x128xf32>
    %213 = arith.addf %210, %212 : vector<16x128xf32>
    %c5 = arith.constant 5 : index
    %c0_52 = arith.constant 0 : index
    %c0_53 = arith.constant 0 : index
    %214 = vector.load %arg25[%c5, %c0_52, %c0_53] : memref<12x16x128xf32, #tpu.memory_space<vmem>>, vector<1x16x128xf32>
    %215 = vector.shape_cast %214 : vector<1x16x128xf32> to vector<16x128xf32>
    %216 = vector.shape_cast %213 : vector<16x128xf32> to vector<1x16x128xf32>
    tpu.vector_store %arg25[%c5, %c0_52, %c0_53], %216 {strides = array<i32>} : memref<12x16x128xf32, #tpu.memory_space<vmem>>, vector<1x16x128xf32>,
    %217 = vector.extract_strided_slice %157 {offsets = [6, 0, 0], sizes = [1, 16, 128], strides = [1, 1, 1]} : vector<12x16x128xf32> to vector<1x16x128xf32>
    %218 = vector.shape_cast %217 : vector<1x16x128xf32> to vector<16x128xf32>
    %219 = arith.mulf %213, %218 : vector<16x128xf32>
    %220 = vector.extract_strided_slice %161 {offsets = [6, 0, 0], sizes = [1, 16, 128], strides = [1, 1, 1]} : vector<12x16x128xf32> to vector<1x16x128xf32>
    %221 = vector.shape_cast %220 : vector<1x16x128xf32> to vector<16x128xf32>
    %222 = arith.addf %219, %221 : vector<16x128xf32>
    %c6 = arith.constant 6 : index
    %c0_54 = arith.constant 0 : index
    %c0_55 = arith.constant 0 : index
    %223 = vector.load %arg25[%c6, %c0_54, %c0_55] : memref<12x16x128xf32, #tpu.memory_space<vmem>>, vector<1x16x128xf32>
    %224 = vector.shape_cast %223 : vector<1x16x128xf32> to vector<16x128xf32>
    %225 = vector.shape_cast %222 : vector<16x128xf32> to vector<1x16x128xf32>
    tpu.vector_store %arg25[%c6, %c0_54, %c0_55], %225 {strides = array<i32>} : memref<12x16x128xf32, #tpu.memory_space<vmem>>, vector<1x16x128xf32>,
    %226 = vector.extract_strided_slice %157 {offsets = [7, 0, 0], sizes = [1, 16, 128], strides = [1, 1, 1]} : vector<12x16x128xf32> to vector<1x16x128xf32>
    %227 = vector.shape_cast %226 : vector<1x16x128xf32> to vector<16x128xf32>
    %228 = arith.mulf %222, %227 : vector<16x128xf32>
    %229 = vector.extract_strided_slice %161 {offsets = [7, 0, 0], sizes = [1, 16, 128], strides = [1, 1, 1]} : vector<12x16x128xf32> to vector<1x16x128xf32>
    %230 = vector.shape_cast %229 : vector<1x16x128xf32> to vector<16x128xf32>
    %231 = arith.addf %228, %230 : vector<16x128xf32>
    %c7 = arith.constant 7 : index
    %c0_56 = arith.constant 0 : index
    %c0_57 = arith.constant 0 : index
    %232 = vector.load %arg25[%c7, %c0_56, %c0_57] : memref<12x16x128xf32, #tpu.memory_space<vmem>>, vector<1x16x128xf32>
    %233 = vector.shape_cast %232 : vector<1x16x128xf32> to vector<16x128xf32>
    %234 = vector.shape_cast %231 : vector<16x128xf32> to vector<1x16x128xf32>
    tpu.vector_store %arg25[%c7, %c0_56, %c0_57], %234 {strides = array<i32>} : memref<12x16x128xf32, #tpu.memory_space<vmem>>, vector<1x16x128xf32>,
    %235 = vector.extract_strided_slice %157 {offsets = [8, 0, 0], sizes = [1, 16, 128], strides = [1, 1, 1]} : vector<12x16x128xf32> to vector<1x16x128xf32>
    %236 = vector.shape_cast %235 : vector<1x16x128xf32> to vector<16x128xf32>
    %237 = arith.mulf %231, %236 : vector<16x128xf32>
    %238 = vector.extract_strided_slice %161 {offsets = [8, 0, 0], sizes = [1, 16, 128], strides = [1, 1, 1]} : vector<12x16x128xf32> to vector<1x16x128xf32>
    %239 = vector.shape_cast %238 : vector<1x16x128xf32> to vector<16x128xf32>
    %240 = arith.addf %237, %239 : vector<16x128xf32>
    %c8 = arith.constant 8 : index
    %c0_58 = arith.constant 0 : index
    %c0_59 = arith.constant 0 : index
    %241 = vector.load %arg25[%c8, %c0_58, %c0_59] : memref<12x16x128xf32, #tpu.memory_space<vmem>>, vector<1x16x128xf32>
    %242 = vector.shape_cast %241 : vector<1x16x128xf32> to vector<16x128xf32>
    %243 = vector.shape_cast %240 : vector<16x128xf32> to vector<1x16x128xf32>
    tpu.vector_store %arg25[%c8, %c0_58, %c0_59], %243 {strides = array<i32>} : memref<12x16x128xf32, #tpu.memory_space<vmem>>, vector<1x16x128xf32>,
    %244 = vector.extract_strided_slice %157 {offsets = [9, 0, 0], sizes = [1, 16, 128], strides = [1, 1, 1]} : vector<12x16x128xf32> to vector<1x16x128xf32>
    %245 = vector.shape_cast %244 : vector<1x16x128xf32> to vector<16x128xf32>
    %246 = arith.mulf %240, %245 : vector<16x128xf32>
    %247 = vector.extract_strided_slice %161 {offsets = [9, 0, 0], sizes = [1, 16, 128], strides = [1, 1, 1]} : vector<12x16x128xf32> to vector<1x16x128xf32>
    %248 = vector.shape_cast %247 : vector<1x16x128xf32> to vector<16x128xf32>
    %249 = arith.addf %246, %248 : vector<16x128xf32>
    %c9 = arith.constant 9 : index
    %c0_60 = arith.constant 0 : index
    %c0_61 = arith.constant 0 : index
    %250 = vector.load %arg25[%c9, %c0_60, %c0_61] : memref<12x16x128xf32, #tpu.memory_space<vmem>>, vector<1x16x128xf32>
    %251 = vector.shape_cast %250 : vector<1x16x128xf32> to vector<16x128xf32>
    %252 = vector.shape_cast %249 : vector<16x128xf32> to vector<1x16x128xf32>
    tpu.vector_store %arg25[%c9, %c0_60, %c0_61], %252 {strides = array<i32>} : memref<12x16x128xf32, #tpu.memory_space<vmem>>, vector<1x16x128xf32>,
    %253 = vector.extract_strided_slice %157 {offsets = [10, 0, 0], sizes = [1, 16, 128], strides = [1, 1, 1]} : vector<12x16x128xf32> to vector<1x16x128xf32>
    %254 = vector.shape_cast %253 : vector<1x16x128xf32> to vector<16x128xf32>
    %255 = arith.mulf %249, %254 : vector<16x128xf32>
    %256 = vector.extract_strided_slice %161 {offsets = [10, 0, 0], sizes = [1, 16, 128], strides = [1, 1, 1]} : vector<12x16x128xf32> to vector<1x16x128xf32>
    %257 = vector.shape_cast %256 : vector<1x16x128xf32> to vector<16x128xf32>
    %258 = arith.addf %255, %257 : vector<16x128xf32>
    %c10 = arith.constant 10 : index
    %c0_62 = arith.constant 0 : index
    %c0_63 = arith.constant 0 : index
    %259 = vector.load %arg25[%c10, %c0_62, %c0_63] : memref<12x16x128xf32, #tpu.memory_space<vmem>>, vector<1x16x128xf32>
    %260 = vector.shape_cast %259 : vector<1x16x128xf32> to vector<16x128xf32>
    %261 = vector.shape_cast %258 : vector<16x128xf32> to vector<1x16x128xf32>
    tpu.vector_store %arg25[%c10, %c0_62, %c0_63], %261 {strides = array<i32>} : memref<12x16x128xf32, #tpu.memory_space<vmem>>, vector<1x16x128xf32>,
    %262 = vector.extract_strided_slice %157 {offsets = [11, 0, 0], sizes = [1, 16, 128], strides = [1, 1, 1]} : vector<12x16x128xf32> to vector<1x16x128xf32>
    %263 = vector.shape_cast %262 : vector<1x16x128xf32> to vector<16x128xf32>
    %264 = arith.mulf %258, %263 : vector<16x128xf32>
    %265 = vector.extract_strided_slice %161 {offsets = [11, 0, 0], sizes = [1, 16, 128], strides = [1, 1, 1]} : vector<12x16x128xf32> to vector<1x16x128xf32>
    %266 = vector.shape_cast %265 : vector<1x16x128xf32> to vector<16x128xf32>
    %267 = arith.addf %264, %266 : vector<16x128xf32>
    %c11 = arith.constant 11 : index
    %c0_64 = arith.constant 0 : index
    %c0_65 = arith.constant 0 : index
    %268 = vector.load %arg25[%c11, %c0_64, %c0_65] : memref<12x16x128xf32, #tpu.memory_space<vmem>>, vector<1x16x128xf32>
    %269 = vector.shape_cast %268 : vector<1x16x128xf32> to vector<16x128xf32>
    %270 = vector.shape_cast %267 : vector<16x128xf32> to vector<1x16x128xf32>
    tpu.vector_store %arg25[%c11, %c0_64, %c0_65], %270 {strides = array<i32>} : memref<12x16x128xf32, #tpu.memory_space<vmem>>, vector<1x16x128xf32>,
    %cst_66 = arith.constant 0.000000e+00 : f32
    %271 = vector.broadcast %cst_66 : f32 to vector<12x16x128xf32>
    %272 = vector.extract_strided_slice %119 {offsets = [0, 80], sizes = [12, 16], strides = [1, 1]} : vector<24x96xf32> to vector<12x16xf32>
    %273 = vector.shape_cast %272 : vector<12x16xf32> to vector<12x16x1xf32>
    %274 = vector.broadcast %63 : vector<1x1x128xf32> to vector<12x16x128xf32>
    %275 = vector.broadcast %273 : vector<12x16x1xf32> to vector<12x16x128xf32>
    %276 = arith.mulf %274, %275 : vector<12x16x128xf32>
    %277 = arith.addf %271, %276 : vector<12x16x128xf32>
    %278 = vector.extract_strided_slice %119 {offsets = [12, 80], sizes = [12, 16], strides = [1, 1]} : vector<24x96xf32> to vector<12x16xf32>
    %279 = vector.shape_cast %278 : vector<12x16xf32> to vector<12x16x1xf32>
    %280 = vector.broadcast %70 : vector<1x1x128xf32> to vector<12x16x128xf32>
    %281 = vector.broadcast %279 : vector<12x16x1xf32> to vector<12x16x128xf32>
    %282 = arith.mulf %280, %281 : vector<12x16x128xf32>
    %283 = arith.addf %277, %282 : vector<12x16x128xf32>
    %c0_67 = arith.constant 0 : index
    %c0_68 = arith.constant 0 : index
    %c0_69 = arith.constant 0 : index
    %284 = vector.load %arg25[%c0_67, %c0_68, %c0_69] : memref<12x16x128xf32, #tpu.memory_space<vmem>>, vector<12x16x128xf32>
    %285 = arith.mulf %284, %283 : vector<12x16x128xf32>
    %cst_70 = arith.constant dense<0.000000e+00> : vector<12x128xf32>
    %286 = vector.multi_reduction <add>, %285, %cst_70 [1] : vector<12x16x128xf32> to vector<12x128xf32>
    %287 = vector.broadcast %77 : vector<1x128xf32> to vector<12x128xf32>
    %288 = arith.mulf %287, %115 : vector<12x128xf32>
    %289 = arith.addf %286, %288 : vector<12x128xf32>
    %290 = vector.extract_strided_slice %289 {offsets = [0, 0], sizes = [12, 64], strides = [1, 1]} : vector<12x128xf32> to vector<12x64xf32>
    %291 = vector.extract_strided_slice %289 {offsets = [0, 64], sizes = [12, 64], strides = [1, 1]} : vector<12x128xf32> to vector<12x64xf32>
    %292 = tpu.concatenate %290, %291 in 0 : vector<12x64xf32>, vector<12x64xf32> -> vector<24x64xf32>
    %293 = arith.negf %80 : vector<24x64xf32>
    %294 = math.exp %293 : vector<24x64xf32>
    %cst_71 = arith.constant 1.000000e+00 : f32
    %295 = vector.broadcast %cst_71 : f32 to vector<24x64xf32>
    %296 = arith.addf %295, %294 : vector<24x64xf32>
    %297 = arith.divf %295, %296 : vector<24x64xf32>
    %298 = arith.mulf %80, %297 : vector<24x64xf32>
    %299 = arith.mulf %292, %298 : vector<24x64xf32>
    %cst_72 = arith.constant dense<0.000000e+00> : vector<24x32xf32>
    %300 = tpu.matmul %299, %78, %cst_72 {dimension_numbers = #tpu.dot_dimension_numbers<[1], [0], [0], [1], [0, 0, 1, 1], [], []>} : vector<24x64xf32>, vector<64x32xf32>, vector<24x32xf32> -> vector<24x32xf32>
    %c0_73 = arith.constant 0 : index
    %c0_74 = arith.constant 0 : index
    %301 = vector.load %arg12[%c0_73, %c0_74] : memref<32x128xf32, #tpu.memory_space<vmem>>, vector<32x128xf32>
    %c0_75 = arith.constant 0 : index
    %c0_76 = arith.constant 0 : index
    %302 = vector.load %arg13[%c0_75, %c0_76] : memref<4x128xf32, #tpu.memory_space<vmem>>, vector<4x128xf32>
    %c0_77 = arith.constant 0 : index
    %c0_78 = arith.constant 0 : index
    %303 = vector.load %arg14[%c0_77, %c0_78] : memref<1x128xf32, #tpu.memory_space<vmem>>, vector<1x128xf32>
    %c0_79 = arith.constant 0 : index
    %c0_80 = arith.constant 0 : index
    %304 = vector.load %arg15[%c0_79, %c0_80] : memref<64x96xf32, #tpu.memory_space<vmem>>, vector<64x96xf32>
    %c0_81 = arith.constant 0 : index
    %c0_82 = arith.constant 0 : index
    %305 = vector.load %arg16[%c0_81, %c0_82] : memref<1x128xf32, #tpu.memory_space<vmem>>, vector<1x128xf32>
    %c0_83 = arith.constant 0 : index
    %c0_84 = arith.constant 0 : index
    %306 = vector.load %arg17[%c0_83, %c0_84] : memref<16x128xf32, #tpu.memory_space<vmem>>, vector<16x128xf32>
    %c0_85 = arith.constant 0 : index
    %c0_86 = arith.constant 0 : index
    %307 = vector.load %arg18[%c0_85, %c0_86] : memref<1x128xf32, #tpu.memory_space<vmem>>, vector<1x128xf32>
    %c0_87 = arith.constant 0 : index
    %c0_88 = arith.constant 0 : index
    %308 = vector.load %arg19[%c0_87, %c0_88] : memref<64x32xf32, #tpu.memory_space<vmem>>, vector<64x32xf32>
    %cst_89 = arith.constant dense<0.000000e+00> : vector<24x128xf32>
    %309 = tpu.matmul %300, %301, %cst_89 {dimension_numbers = #tpu.dot_dimension_numbers<[1], [0], [0], [1], [0, 0, 1, 1], [], []>} : vector<24x32xf32>, vector<32x128xf32>, vector<24x128xf32> -> vector<24x128xf32>
    %310 = vector.extract_strided_slice %309 {offsets = [0, 64], sizes = [24, 64], strides = [1, 1]} : vector<24x128xf32> to vector<24x64xf32>
    %311 = vector.extract_strided_slice %309 {offsets = [0, 0], sizes = [12, 64], strides = [1, 1]} : vector<24x128xf32> to vector<12x64xf32>
    %312 = vector.extract_strided_slice %309 {offsets = [12, 0], sizes = [12, 64], strides = [1, 1]} : vector<24x128xf32> to vector<12x64xf32>
    %313 = tpu.concatenate %311, %312 in 1 : vector<12x64xf32>, vector<12x64xf32> -> vector<12x128xf32>
    %314 = vector.extract_strided_slice %302 {offsets = [3, 0], sizes = [1, 128], strides = [1, 1]} : vector<4x128xf32> to vector<1x128xf32>
    %315 = vector.broadcast %314 : vector<1x128xf32> to vector<12x128xf32>
    %316 = arith.mulf %313, %315 : vector<12x128xf32>
    %317 = vector.broadcast %303 : vector<1x128xf32> to vector<12x128xf32>
    %318 = arith.addf %317, %316 : vector<12x128xf32>
    %cst_90 = arith.constant 0.000000e+00 : f32
    %319 = vector.broadcast %cst_90 : f32 to vector<1x128xf32>
    %320 = vector.extract_strided_slice %313 {offsets = [0, 0], sizes = [11, 128], strides = [1, 1]} : vector<12x128xf32> to vector<11x128xf32>
    %321 = tpu.concatenate %319, %320 in 0 : vector<1x128xf32>, vector<11x128xf32> -> vector<12x128xf32>
    %322 = vector.extract_strided_slice %302 {offsets = [2, 0], sizes = [1, 128], strides = [1, 1]} : vector<4x128xf32> to vector<1x128xf32>
    %323 = vector.broadcast %322 : vector<1x128xf32> to vector<12x128xf32>
    %324 = arith.mulf %321, %323 : vector<12x128xf32>
    %325 = arith.addf %318, %324 : vector<12x128xf32>
    %cst_91 = arith.constant 0.000000e+00 : f32
    %326 = vector.broadcast %cst_91 : f32 to vector<2x128xf32>
    %327 = vector.extract_strided_slice %313 {offsets = [0, 0], sizes = [10, 128], strides = [1, 1]} : vector<12x128xf32> to vector<10x128xf32>
    %328 = tpu.concatenate %326, %327 in 0 : vector<2x128xf32>, vector<10x128xf32> -> vector<12x128xf32>
    %329 = vector.extract_strided_slice %302 {offsets = [1, 0], sizes = [1, 128], strides = [1, 1]} : vector<4x128xf32> to vector<1x128xf32>
    %330 = vector.broadcast %329 : vector<1x128xf32> to vector<12x128xf32>
    %331 = arith.mulf %328, %330 : vector<12x128xf32>
    %332 = arith.addf %325, %331 : vector<12x128xf32>
    %cst_92 = arith.constant 0.000000e+00 : f32
    %333 = vector.broadcast %cst_92 : f32 to vector<3x128xf32>
    %334 = vector.extract_strided_slice %313 {offsets = [0, 0], sizes = [9, 128], strides = [1, 1]} : vector<12x128xf32> to vector<9x128xf32>
    %335 = tpu.concatenate %333, %334 in 0 : vector<3x128xf32>, vector<9x128xf32> -> vector<12x128xf32>
    %336 = vector.extract_strided_slice %302 {offsets = [0, 0], sizes = [1, 128], strides = [1, 1]} : vector<4x128xf32> to vector<1x128xf32>
    %337 = vector.broadcast %336 : vector<1x128xf32> to vector<12x128xf32>
    %338 = arith.mulf %335, %337 : vector<12x128xf32>
    %339 = arith.addf %332, %338 : vector<12x128xf32>
    %340 = arith.negf %339 : vector<12x128xf32>
    %341 = math.exp %340 : vector<12x128xf32>
    %cst_93 = arith.constant 1.000000e+00 : f32
    %342 = vector.broadcast %cst_93 : f32 to vector<12x128xf32>
    %343 = arith.addf %342, %341 : vector<12x128xf32>
    %344 = arith.divf %342, %343 : vector<12x128xf32>
    %345 = arith.mulf %339, %344 : vector<12x128xf32>
    %346 = vector.extract_strided_slice %345 {offsets = [0, 0], sizes = [12, 64], strides = [1, 1]} : vector<12x128xf32> to vector<12x64xf32>
    %347 = vector.extract_strided_slice %345 {offsets = [0, 64], sizes = [12, 64], strides = [1, 1]} : vector<12x128xf32> to vector<12x64xf32>
    %348 = tpu.concatenate %346, %347 in 0 : vector<12x64xf32>, vector<12x64xf32> -> vector<24x64xf32>
    %cst_94 = arith.constant dense<0.000000e+00> : vector<24x96xf32>
    %349 = tpu.matmul %348, %304, %cst_94 {dimension_numbers = #tpu.dot_dimension_numbers<[1], [0], [0], [1], [0, 0, 1, 1], [], []>} : vector<24x64xf32>, vector<64x96xf32>, vector<24x96xf32> -> vector<24x96xf32>
    %350 = vector.extract_strided_slice %349 {offsets = [0, 0], sizes = [12, 64], strides = [1, 1]} : vector<24x96xf32> to vector<12x64xf32>
    %351 = vector.extract_strided_slice %349 {offsets = [12, 0], sizes = [12, 64], strides = [1, 1]} : vector<24x96xf32> to vector<12x64xf32>
    %352 = tpu.concatenate %350, %351 in 1 : vector<12x64xf32>, vector<12x64xf32> -> vector<12x128xf32>
    %353 = vector.broadcast %305 : vector<1x128xf32> to vector<12x128xf32>
    %354 = arith.addf %352, %353 : vector<12x128xf32>
    %cst_95 = arith.constant 0.000000e+00 : f32
    %355 = vector.broadcast %cst_95 : f32 to vector<12x128xf32>
    %356 = arith.maximumf %354, %355 : vector<12x128xf32>
    %357 = vector.broadcast %cst_95 : f32 to vector<12x128xf32>
    %358 = arith.subf %354, %357 : vector<12x128xf32>
    %359 = arith.cmpf one, %358, %358 : vector<12x128xf32>
    %360 = vector.broadcast %cst_95 : f32 to vector<12x128xf32>
    %361 = arith.addf %354, %360 : vector<12x128xf32>
    %362 = math.absf %358 : vector<12x128xf32>
    %cst_96 = arith.constant 0.000000e+00 : f32
    %363 = vector.broadcast %cst_96 : f32 to vector<12x128xf32>
    %364 = arith.subf %363, %362 : vector<12x128xf32>
    %365 = math.exp %364 : vector<12x128xf32>
    %366 = math.log1p %365 : vector<12x128xf32>
    %367 = arith.addf %356, %366 : vector<12x128xf32>
    %368 = arith.select %359, %361, %367 : vector<12x128xi1>, vector<12x128xf32>
    %cst_97 = arith.constant 0.000000e+00 : f32
    %369 = vector.broadcast %cst_97 : f32 to vector<12x16x128xf32>
    %370 = vector.extract_strided_slice %349 {offsets = [0, 64], sizes = [12, 16], strides = [1, 1]} : vector<24x96xf32> to vector<12x16xf32>
    %371 = vector.shape_cast %370 : vector<12x16xf32> to vector<12x16x1xf32>
    %372 = vector.broadcast %63 : vector<1x1x128xf32> to vector<12x16x128xf32>
    %373 = vector.broadcast %371 : vector<12x16x1xf32> to vector<12x16x128xf32>
    %374 = arith.mulf %372, %373 : vector<12x16x128xf32>
    %375 = arith.addf %369, %374 : vector<12x16x128xf32>
    %376 = vector.extract_strided_slice %349 {offsets = [12, 64], sizes = [12, 16], strides = [1, 1]} : vector<24x96xf32> to vector<12x16xf32>
    %377 = vector.shape_cast %376 : vector<12x16xf32> to vector<12x16x1xf32>
    %378 = vector.broadcast %70 : vector<1x1x128xf32> to vector<12x16x128xf32>
    %379 = vector.broadcast %377 : vector<12x16x1xf32> to vector<12x16x128xf32>
    %380 = arith.mulf %378, %379 : vector<12x16x128xf32>
    %381 = arith.addf %375, %380 : vector<12x16x128xf32>
    %382 = vector.shape_cast %368 : vector<12x128xf32> to vector<12x1x128xf32>
    %383 = vector.shape_cast %306 : vector<16x128xf32> to vector<1x16x128xf32>
    %384 = vector.broadcast %382 : vector<12x1x128xf32> to vector<12x16x128xf32>
    %385 = vector.broadcast %383 : vector<1x16x128xf32> to vector<12x16x128xf32>
    %386 = arith.mulf %384, %385 : vector<12x16x128xf32>
    %387 = math.exp %386 : vector<12x16x128xf32>
    %388 = arith.mulf %368, %345 : vector<12x128xf32>
    %389 = vector.shape_cast %388 : vector<12x128xf32> to vector<12x1x128xf32>
    %390 = vector.broadcast %389 : vector<12x1x128xf32> to vector<12x16x128xf32>
    %391 = arith.mulf %390, %381 : vector<12x16x128xf32>
    %cst_98 = arith.constant 0.000000e+00 : f32
    %392 = vector.broadcast %cst_98 : f32 to vector<16x128xf32>
    %393 = vector.extract_strided_slice %387 {offsets = [0, 0, 0], sizes = [1, 16, 128], strides = [1, 1, 1]} : vector<12x16x128xf32> to vector<1x16x128xf32>
    %394 = vector.shape_cast %393 : vector<1x16x128xf32> to vector<16x128xf32>
    %395 = arith.mulf %392, %394 : vector<16x128xf32>
    %396 = vector.extract_strided_slice %391 {offsets = [0, 0, 0], sizes = [1, 16, 128], strides = [1, 1, 1]} : vector<12x16x128xf32> to vector<1x16x128xf32>
    %397 = vector.shape_cast %396 : vector<1x16x128xf32> to vector<16x128xf32>
    %398 = arith.addf %395, %397 : vector<16x128xf32>
    %c0_99 = arith.constant 0 : index
    %c0_100 = arith.constant 0 : index
    %c0_101 = arith.constant 0 : index
    %399 = vector.load %arg25[%c0_99, %c0_100, %c0_101] : memref<12x16x128xf32, #tpu.memory_space<vmem>>, vector<1x16x128xf32>
    %400 = vector.shape_cast %399 : vector<1x16x128xf32> to vector<16x128xf32>
    %401 = vector.shape_cast %398 : vector<16x128xf32> to vector<1x16x128xf32>
    tpu.vector_store %arg25[%c0_99, %c0_100, %c0_101], %401 {strides = array<i32>} : memref<12x16x128xf32, #tpu.memory_space<vmem>>, vector<1x16x128xf32>,
    %402 = vector.extract_strided_slice %387 {offsets = [1, 0, 0], sizes = [1, 16, 128], strides = [1, 1, 1]} : vector<12x16x128xf32> to vector<1x16x128xf32>
    %403 = vector.shape_cast %402 : vector<1x16x128xf32> to vector<16x128xf32>
    %404 = arith.mulf %398, %403 : vector<16x128xf32>
    %405 = vector.extract_strided_slice %391 {offsets = [1, 0, 0], sizes = [1, 16, 128], strides = [1, 1, 1]} : vector<12x16x128xf32> to vector<1x16x128xf32>
    %406 = vector.shape_cast %405 : vector<1x16x128xf32> to vector<16x128xf32>
    %407 = arith.addf %404, %406 : vector<16x128xf32>
    %c1_102 = arith.constant 1 : index
    %c0_103 = arith.constant 0 : index
    %c0_104 = arith.constant 0 : index
    %408 = vector.load %arg25[%c1_102, %c0_103, %c0_104] : memref<12x16x128xf32, #tpu.memory_space<vmem>>, vector<1x16x128xf32>
    %409 = vector.shape_cast %408 : vector<1x16x128xf32> to vector<16x128xf32>
    %410 = vector.shape_cast %407 : vector<16x128xf32> to vector<1x16x128xf32>
    tpu.vector_store %arg25[%c1_102, %c0_103, %c0_104], %410 {strides = array<i32>} : memref<12x16x128xf32, #tpu.memory_space<vmem>>, vector<1x16x128xf32>,
    %411 = vector.extract_strided_slice %387 {offsets = [2, 0, 0], sizes = [1, 16, 128], strides = [1, 1, 1]} : vector<12x16x128xf32> to vector<1x16x128xf32>
    %412 = vector.shape_cast %411 : vector<1x16x128xf32> to vector<16x128xf32>
    %413 = arith.mulf %407, %412 : vector<16x128xf32>
    %414 = vector.extract_strided_slice %391 {offsets = [2, 0, 0], sizes = [1, 16, 128], strides = [1, 1, 1]} : vector<12x16x128xf32> to vector<1x16x128xf32>
    %415 = vector.shape_cast %414 : vector<1x16x128xf32> to vector<16x128xf32>
    %416 = arith.addf %413, %415 : vector<16x128xf32>
    %c2_105 = arith.constant 2 : index
    %c0_106 = arith.constant 0 : index
    %c0_107 = arith.constant 0 : index
    %417 = vector.load %arg25[%c2_105, %c0_106, %c0_107] : memref<12x16x128xf32, #tpu.memory_space<vmem>>, vector<1x16x128xf32>
    %418 = vector.shape_cast %417 : vector<1x16x128xf32> to vector<16x128xf32>
    %419 = vector.shape_cast %416 : vector<16x128xf32> to vector<1x16x128xf32>
    tpu.vector_store %arg25[%c2_105, %c0_106, %c0_107], %419 {strides = array<i32>} : memref<12x16x128xf32, #tpu.memory_space<vmem>>, vector<1x16x128xf32>,
    %420 = vector.extract_strided_slice %387 {offsets = [3, 0, 0], sizes = [1, 16, 128], strides = [1, 1, 1]} : vector<12x16x128xf32> to vector<1x16x128xf32>
    %421 = vector.shape_cast %420 : vector<1x16x128xf32> to vector<16x128xf32>
    %422 = arith.mulf %416, %421 : vector<16x128xf32>
    %423 = vector.extract_strided_slice %391 {offsets = [3, 0, 0], sizes = [1, 16, 128], strides = [1, 1, 1]} : vector<12x16x128xf32> to vector<1x16x128xf32>
    %424 = vector.shape_cast %423 : vector<1x16x128xf32> to vector<16x128xf32>
    %425 = arith.addf %422, %424 : vector<16x128xf32>
    %c3_108 = arith.constant 3 : index
    %c0_109 = arith.constant 0 : index
    %c0_110 = arith.constant 0 : index
    %426 = vector.load %arg25[%c3_108, %c0_109, %c0_110] : memref<12x16x128xf32, #tpu.memory_space<vmem>>, vector<1x16x128xf32>
    %427 = vector.shape_cast %426 : vector<1x16x128xf32> to vector<16x128xf32>
    %428 = vector.shape_cast %425 : vector<16x128xf32> to vector<1x16x128xf32>
    tpu.vector_store %arg25[%c3_108, %c0_109, %c0_110], %428 {strides = array<i32>} : memref<12x16x128xf32, #tpu.memory_space<vmem>>, vector<1x16x128xf32>,
    %429 = vector.extract_strided_slice %387 {offsets = [4, 0, 0], sizes = [1, 16, 128], strides = [1, 1, 1]} : vector<12x16x128xf32> to vector<1x16x128xf32>
    %430 = vector.shape_cast %429 : vector<1x16x128xf32> to vector<16x128xf32>
    %431 = arith.mulf %425, %430 : vector<16x128xf32>
    %432 = vector.extract_strided_slice %391 {offsets = [4, 0, 0], sizes = [1, 16, 128], strides = [1, 1, 1]} : vector<12x16x128xf32> to vector<1x16x128xf32>
    %433 = vector.shape_cast %432 : vector<1x16x128xf32> to vector<16x128xf32>
    %434 = arith.addf %431, %433 : vector<16x128xf32>
    %c4_111 = arith.constant 4 : index
    %c0_112 = arith.constant 0 : index
    %c0_113 = arith.constant 0 : index
    %435 = vector.load %arg25[%c4_111, %c0_112, %c0_113] : memref<12x16x128xf32, #tpu.memory_space<vmem>>, vector<1x16x128xf32>
    %436 = vector.shape_cast %435 : vector<1x16x128xf32> to vector<16x128xf32>
    %437 = vector.shape_cast %434 : vector<16x128xf32> to vector<1x16x128xf32>
    tpu.vector_store %arg25[%c4_111, %c0_112, %c0_113], %437 {strides = array<i32>} : memref<12x16x128xf32, #tpu.memory_space<vmem>>, vector<1x16x128xf32>,
    %438 = vector.extract_strided_slice %387 {offsets = [5, 0, 0], sizes = [1, 16, 128], strides = [1, 1, 1]} : vector<12x16x128xf32> to vector<1x16x128xf32>
    %439 = vector.shape_cast %438 : vector<1x16x128xf32> to vector<16x128xf32>
    %440 = arith.mulf %434, %439 : vector<16x128xf32>
    %441 = vector.extract_strided_slice %391 {offsets = [5, 0, 0], sizes = [1, 16, 128], strides = [1, 1, 1]} : vector<12x16x128xf32> to vector<1x16x128xf32>
    %442 = vector.shape_cast %441 : vector<1x16x128xf32> to vector<16x128xf32>
    %443 = arith.addf %440, %442 : vector<16x128xf32>
    %c5_114 = arith.constant 5 : index
    %c0_115 = arith.constant 0 : index
    %c0_116 = arith.constant 0 : index
    %444 = vector.load %arg25[%c5_114, %c0_115, %c0_116] : memref<12x16x128xf32, #tpu.memory_space<vmem>>, vector<1x16x128xf32>
    %445 = vector.shape_cast %444 : vector<1x16x128xf32> to vector<16x128xf32>
    %446 = vector.shape_cast %443 : vector<16x128xf32> to vector<1x16x128xf32>
    tpu.vector_store %arg25[%c5_114, %c0_115, %c0_116], %446 {strides = array<i32>} : memref<12x16x128xf32, #tpu.memory_space<vmem>>, vector<1x16x128xf32>,
    %447 = vector.extract_strided_slice %387 {offsets = [6, 0, 0], sizes = [1, 16, 128], strides = [1, 1, 1]} : vector<12x16x128xf32> to vector<1x16x128xf32>
    %448 = vector.shape_cast %447 : vector<1x16x128xf32> to vector<16x128xf32>
    %449 = arith.mulf %443, %448 : vector<16x128xf32>
    %450 = vector.extract_strided_slice %391 {offsets = [6, 0, 0], sizes = [1, 16, 128], strides = [1, 1, 1]} : vector<12x16x128xf32> to vector<1x16x128xf32>
    %451 = vector.shape_cast %450 : vector<1x16x128xf32> to vector<16x128xf32>
    %452 = arith.addf %449, %451 : vector<16x128xf32>
    %c6_117 = arith.constant 6 : index
    %c0_118 = arith.constant 0 : index
    %c0_119 = arith.constant 0 : index
    %453 = vector.load %arg25[%c6_117, %c0_118, %c0_119] : memref<12x16x128xf32, #tpu.memory_space<vmem>>, vector<1x16x128xf32>
    %454 = vector.shape_cast %453 : vector<1x16x128xf32> to vector<16x128xf32>
    %455 = vector.shape_cast %452 : vector<16x128xf32> to vector<1x16x128xf32>
    tpu.vector_store %arg25[%c6_117, %c0_118, %c0_119], %455 {strides = array<i32>} : memref<12x16x128xf32, #tpu.memory_space<vmem>>, vector<1x16x128xf32>,
    %456 = vector.extract_strided_slice %387 {offsets = [7, 0, 0], sizes = [1, 16, 128], strides = [1, 1, 1]} : vector<12x16x128xf32> to vector<1x16x128xf32>
    %457 = vector.shape_cast %456 : vector<1x16x128xf32> to vector<16x128xf32>
    %458 = arith.mulf %452, %457 : vector<16x128xf32>
    %459 = vector.extract_strided_slice %391 {offsets = [7, 0, 0], sizes = [1, 16, 128], strides = [1, 1, 1]} : vector<12x16x128xf32> to vector<1x16x128xf32>
    %460 = vector.shape_cast %459 : vector<1x16x128xf32> to vector<16x128xf32>
    %461 = arith.addf %458, %460 : vector<16x128xf32>
    %c7_120 = arith.constant 7 : index
    %c0_121 = arith.constant 0 : index
    %c0_122 = arith.constant 0 : index
    %462 = vector.load %arg25[%c7_120, %c0_121, %c0_122] : memref<12x16x128xf32, #tpu.memory_space<vmem>>, vector<1x16x128xf32>
    %463 = vector.shape_cast %462 : vector<1x16x128xf32> to vector<16x128xf32>
    %464 = vector.shape_cast %461 : vector<16x128xf32> to vector<1x16x128xf32>
    tpu.vector_store %arg25[%c7_120, %c0_121, %c0_122], %464 {strides = array<i32>} : memref<12x16x128xf32, #tpu.memory_space<vmem>>, vector<1x16x128xf32>,
    %465 = vector.extract_strided_slice %387 {offsets = [8, 0, 0], sizes = [1, 16, 128], strides = [1, 1, 1]} : vector<12x16x128xf32> to vector<1x16x128xf32>
    %466 = vector.shape_cast %465 : vector<1x16x128xf32> to vector<16x128xf32>
    %467 = arith.mulf %461, %466 : vector<16x128xf32>
    %468 = vector.extract_strided_slice %391 {offsets = [8, 0, 0], sizes = [1, 16, 128], strides = [1, 1, 1]} : vector<12x16x128xf32> to vector<1x16x128xf32>
    %469 = vector.shape_cast %468 : vector<1x16x128xf32> to vector<16x128xf32>
    %470 = arith.addf %467, %469 : vector<16x128xf32>
    %c8_123 = arith.constant 8 : index
    %c0_124 = arith.constant 0 : index
    %c0_125 = arith.constant 0 : index
    %471 = vector.load %arg25[%c8_123, %c0_124, %c0_125] : memref<12x16x128xf32, #tpu.memory_space<vmem>>, vector<1x16x128xf32>
    %472 = vector.shape_cast %471 : vector<1x16x128xf32> to vector<16x128xf32>
    %473 = vector.shape_cast %470 : vector<16x128xf32> to vector<1x16x128xf32>
    tpu.vector_store %arg25[%c8_123, %c0_124, %c0_125], %473 {strides = array<i32>} : memref<12x16x128xf32, #tpu.memory_space<vmem>>, vector<1x16x128xf32>,
    %474 = vector.extract_strided_slice %387 {offsets = [9, 0, 0], sizes = [1, 16, 128], strides = [1, 1, 1]} : vector<12x16x128xf32> to vector<1x16x128xf32>
    %475 = vector.shape_cast %474 : vector<1x16x128xf32> to vector<16x128xf32>
    %476 = arith.mulf %470, %475 : vector<16x128xf32>
    %477 = vector.extract_strided_slice %391 {offsets = [9, 0, 0], sizes = [1, 16, 128], strides = [1, 1, 1]} : vector<12x16x128xf32> to vector<1x16x128xf32>
    %478 = vector.shape_cast %477 : vector<1x16x128xf32> to vector<16x128xf32>
    %479 = arith.addf %476, %478 : vector<16x128xf32>
    %c9_126 = arith.constant 9 : index
    %c0_127 = arith.constant 0 : index
    %c0_128 = arith.constant 0 : index
    %480 = vector.load %arg25[%c9_126, %c0_127, %c0_128] : memref<12x16x128xf32, #tpu.memory_space<vmem>>, vector<1x16x128xf32>
    %481 = vector.shape_cast %480 : vector<1x16x128xf32> to vector<16x128xf32>
    %482 = vector.shape_cast %479 : vector<16x128xf32> to vector<1x16x128xf32>
    tpu.vector_store %arg25[%c9_126, %c0_127, %c0_128], %482 {strides = array<i32>} : memref<12x16x128xf32, #tpu.memory_space<vmem>>, vector<1x16x128xf32>,
    %483 = vector.extract_strided_slice %387 {offsets = [10, 0, 0], sizes = [1, 16, 128], strides = [1, 1, 1]} : vector<12x16x128xf32> to vector<1x16x128xf32>
    %484 = vector.shape_cast %483 : vector<1x16x128xf32> to vector<16x128xf32>
    %485 = arith.mulf %479, %484 : vector<16x128xf32>
    %486 = vector.extract_strided_slice %391 {offsets = [10, 0, 0], sizes = [1, 16, 128], strides = [1, 1, 1]} : vector<12x16x128xf32> to vector<1x16x128xf32>
    %487 = vector.shape_cast %486 : vector<1x16x128xf32> to vector<16x128xf32>
    %488 = arith.addf %485, %487 : vector<16x128xf32>
    %c10_129 = arith.constant 10 : index
    %c0_130 = arith.constant 0 : index
    %c0_131 = arith.constant 0 : index
    %489 = vector.load %arg25[%c10_129, %c0_130, %c0_131] : memref<12x16x128xf32, #tpu.memory_space<vmem>>, vector<1x16x128xf32>
    %490 = vector.shape_cast %489 : vector<1x16x128xf32> to vector<16x128xf32>
    %491 = vector.shape_cast %488 : vector<16x128xf32> to vector<1x16x128xf32>
    tpu.vector_store %arg25[%c10_129, %c0_130, %c0_131], %491 {strides = array<i32>} : memref<12x16x128xf32, #tpu.memory_space<vmem>>, vector<1x16x128xf32>,
    %492 = vector.extract_strided_slice %387 {offsets = [11, 0, 0], sizes = [1, 16, 128], strides = [1, 1, 1]} : vector<12x16x128xf32> to vector<1x16x128xf32>
    %493 = vector.shape_cast %492 : vector<1x16x128xf32> to vector<16x128xf32>
    %494 = arith.mulf %488, %493 : vector<16x128xf32>
    %495 = vector.extract_strided_slice %391 {offsets = [11, 0, 0], sizes = [1, 16, 128], strides = [1, 1, 1]} : vector<12x16x128xf32> to vector<1x16x128xf32>
    %496 = vector.shape_cast %495 : vector<1x16x128xf32> to vector<16x128xf32>
    %497 = arith.addf %494, %496 : vector<16x128xf32>
    %c11_132 = arith.constant 11 : index
    %c0_133 = arith.constant 0 : index
    %c0_134 = arith.constant 0 : index
    %498 = vector.load %arg25[%c11_132, %c0_133, %c0_134] : memref<12x16x128xf32, #tpu.memory_space<vmem>>, vector<1x16x128xf32>
    %499 = vector.shape_cast %498 : vector<1x16x128xf32> to vector<16x128xf32>
    %500 = vector.shape_cast %497 : vector<16x128xf32> to vector<1x16x128xf32>
    tpu.vector_store %arg25[%c11_132, %c0_133, %c0_134], %500 {strides = array<i32>} : memref<12x16x128xf32, #tpu.memory_space<vmem>>, vector<1x16x128xf32>,
    %cst_135 = arith.constant 0.000000e+00 : f32
    %501 = vector.broadcast %cst_135 : f32 to vector<12x16x128xf32>
    %502 = vector.extract_strided_slice %349 {offsets = [0, 80], sizes = [12, 16], strides = [1, 1]} : vector<24x96xf32> to vector<12x16xf32>
    %503 = vector.shape_cast %502 : vector<12x16xf32> to vector<12x16x1xf32>
    %504 = vector.broadcast %63 : vector<1x1x128xf32> to vector<12x16x128xf32>
    %505 = vector.broadcast %503 : vector<12x16x1xf32> to vector<12x16x128xf32>
    %506 = arith.mulf %504, %505 : vector<12x16x128xf32>
    %507 = arith.addf %501, %506 : vector<12x16x128xf32>
    %508 = vector.extract_strided_slice %349 {offsets = [12, 80], sizes = [12, 16], strides = [1, 1]} : vector<24x96xf32> to vector<12x16xf32>
    %509 = vector.shape_cast %508 : vector<12x16xf32> to vector<12x16x1xf32>
    %510 = vector.broadcast %70 : vector<1x1x128xf32> to vector<12x16x128xf32>
    %511 = vector.broadcast %509 : vector<12x16x1xf32> to vector<12x16x128xf32>
    %512 = arith.mulf %510, %511 : vector<12x16x128xf32>
    %513 = arith.addf %507, %512 : vector<12x16x128xf32>
    %c0_136 = arith.constant 0 : index
    %c0_137 = arith.constant 0 : index
    %c0_138 = arith.constant 0 : index
    %514 = vector.load %arg25[%c0_136, %c0_137, %c0_138] : memref<12x16x128xf32, #tpu.memory_space<vmem>>, vector<12x16x128xf32>
    %515 = arith.mulf %514, %513 : vector<12x16x128xf32>
    %cst_139 = arith.constant dense<0.000000e+00> : vector<12x128xf32>
    %516 = vector.multi_reduction <add>, %515, %cst_139 [1] : vector<12x16x128xf32> to vector<12x128xf32>
    %517 = vector.broadcast %307 : vector<1x128xf32> to vector<12x128xf32>
    %518 = arith.mulf %517, %345 : vector<12x128xf32>
    %519 = arith.addf %516, %518 : vector<12x128xf32>
    %520 = vector.extract_strided_slice %519 {offsets = [0, 0], sizes = [12, 64], strides = [1, 1]} : vector<12x128xf32> to vector<12x64xf32>
    %521 = vector.extract_strided_slice %519 {offsets = [0, 64], sizes = [12, 64], strides = [1, 1]} : vector<12x128xf32> to vector<12x64xf32>
    %522 = tpu.concatenate %520, %521 in 0 : vector<12x64xf32>, vector<12x64xf32> -> vector<24x64xf32>
    %523 = arith.negf %310 : vector<24x64xf32>
    %524 = math.exp %523 : vector<24x64xf32>
    %cst_140 = arith.constant 1.000000e+00 : f32
    %525 = vector.broadcast %cst_140 : f32 to vector<24x64xf32>
    %526 = arith.addf %525, %524 : vector<24x64xf32>
    %527 = arith.divf %525, %526 : vector<24x64xf32>
    %528 = arith.mulf %310, %527 : vector<24x64xf32>
    %529 = arith.mulf %522, %528 : vector<24x64xf32>
    %cst_141 = arith.constant dense<0.000000e+00> : vector<24x32xf32>
    %530 = tpu.matmul %529, %308, %cst_141 {dimension_numbers = #tpu.dot_dimension_numbers<[1], [0], [0], [1], [0, 0, 1, 1], [], []>} : vector<24x64xf32>, vector<64x32xf32>, vector<24x32xf32> -> vector<24x32xf32>
    %531 = vector.extract_strided_slice %530 {offsets = [0, 0], sizes = [1, 32], strides = [1, 1]} : vector<24x32xf32> to vector<1x32xf32>
    %532 = vector.extract_strided_slice %530 {offsets = [12, 0], sizes = [1, 32], strides = [1, 1]} : vector<24x32xf32> to vector<1x32xf32>
    %533 = tpu.concatenate %531, %532 in 0 : vector<1x32xf32>, vector<1x32xf32> -> vector<2x32xf32>
    %c0_142 = arith.constant 0 : index
    %c0_143 = arith.constant 0 : index
    %534 = vector.load %arg24[%c0_142, %c0_143] : memref<2x32xf32, #tpu.memory_space<vmem>>, vector<2x32xf32>
    tpu.vector_store %arg24[%c0_142, %c0_143], %533 {strides = array<i32>} : memref<2x32xf32, #tpu.memory_space<vmem>>, vector<2x32xf32>,
    %535 = vector.extract_strided_slice %530 {offsets = [1, 0], sizes = [11, 32], strides = [1, 1]} : vector<24x32xf32> to vector<11x32xf32>
    %536 = vector.extract_strided_slice %530 {offsets = [13, 0], sizes = [11, 32], strides = [1, 1]} : vector<24x32xf32> to vector<11x32xf32>
    %537 = tpu.concatenate %535, %536 in 0 : vector<11x32xf32>, vector<11x32xf32> -> vector<22x32xf32>
    %c0_144 = arith.constant 0 : index
    %c0_145 = arith.constant 0 : index
    %538 = vector.load %arg20[%c0_144, %c0_145] : memref<32x10xf32, #tpu.memory_space<vmem>>, vector<32x10xf32>
    %cst_146 = arith.constant dense<0.000000e+00> : vector<22x10xf32>
    %539 = tpu.matmul %537, %538, %cst_146 {dimension_numbers = #tpu.dot_dimension_numbers<[1], [0], [0], [1], [0, 0, 1, 1], [], []>} : vector<22x32xf32>, vector<32x10xf32>, vector<22x10xf32> -> vector<22x10xf32>
    %c0_147 = arith.constant 0 : index
    %c0_148 = arith.constant 0 : index
    %540 = vector.load %arg21[%c0_147, %c0_148] : memref<1x10xf32, #tpu.memory_space<vmem>>, vector<1x10xf32>
    %541 = vector.broadcast %540 : vector<1x10xf32> to vector<22x10xf32>
    %542 = arith.addf %539, %541 : vector<22x10xf32>
    %543 = vector.shape_cast %542 : vector<22x10xf32> to vector<2x11x10xf32>
    %c0_149 = arith.constant 0 : index
    %c0_150 = arith.constant 0 : index
    %c0_151 = arith.constant 0 : index
    %544 = vector.load %arg22[%c0_149, %c0_150, %c0_151] : memref<2x11x10xf32, #tpu.memory_space<vmem>>, vector<2x11x10xf32>
    tpu.vector_store %arg22[%c0_149, %c0_150, %c0_151], %543 {strides = array<i32>} : memref<2x11x10xf32, #tpu.memory_space<vmem>>, vector<2x11x10xf32>,
    %c4_i32 = arith.constant 4 : i32
    %545 = vector.broadcast %c4_i32 : i32 to vector<11x2xi32>
    %546 = arith.cmpi sge, %0, %545 : vector<11x2xi32>
    %547 = arith.extui %546 : vector<11x2xi1> to vector<11x2xi32>
    %548 = arith.sitofp %547 : vector<11x2xi32> to vector<11x2xf32>
    %549 = vector.extract_strided_slice %548 {offsets = [0, 0], sizes = [11, 1], strides = [1, 1]} : vector<11x2xf32> to vector<11x1xf32>
    %550 = vector.shape_cast %549 : vector<11x1xf32> to vector<11x1xf32>
    %551 = vector.broadcast %550 : vector<11x1xf32> to vector<11x10xf32>
    %552 = vector.shape_cast %551 : vector<11x10xf32> to vector<1x11x10xf32>
    %553 = vector.extract_strided_slice %548 {offsets = [0, 1], sizes = [11, 1], strides = [1, 1]} : vector<11x2xf32> to vector<11x1xf32>
    %554 = vector.shape_cast %553 : vector<11x1xf32> to vector<11x1xf32>
    %555 = vector.broadcast %554 : vector<11x1xf32> to vector<11x10xf32>
    %556 = vector.shape_cast %555 : vector<11x10xf32> to vector<1x11x10xf32>
    %557 = tpu.concatenate %552, %556 in 0 : vector<1x11x10xf32>, vector<1x11x10xf32> -> vector<2x11x10xf32>
    %c0_152 = arith.constant 0 : index
    %c0_153 = arith.constant 0 : index
    %c0_154 = arith.constant 0 : index
    %558 = vector.load %arg23[%c0_152, %c0_153, %c0_154] : memref<2x11x10xf32, #tpu.memory_space<vmem>>, vector<2x11x10xf32>
    tpu.vector_store %arg23[%c0_152, %c0_153, %c0_154], %557 {strides = array<i32>} : memref<2x11x10xf32, #tpu.memory_space<vmem>>, vector<2x11x10xf32>,
    return
  }
}

</mosaic_0001>

<llo_original>
// kernel: adt_decoder_forward.1
$region0: #{adt_decoder_forward.1}
  #allocation0 [shape = 'u32[]', space=smem, size = 0x4, offset = 0x4, fixed_abs, tag = 'smem constant byte address 0x4 - core index']
  #allocation1 [shape = 'u32[72,128]{1,0:T(1,128)}', space=vmem, size = 0x9000, scoped, tag = 'internal scratch']
  #allocation2 [shape = 'f32[12,16,128]{2,1,0:T(8,128)}', space=vmem, size = 0x18000, scoped, tag = 'scratch operand']
  %s0 = inlined_call_operand.vmem [shape: s32[11,2], index: 0, kind: input, shape index: {}]
  %s1 = inlined_call_operand.hbm [shape: f32[5,2,32], index: 1, kind: input, shape index: {}]
  %s2 = inlined_call_operand.vmem [shape: f32[1,32], index: 2, kind: input, shape index: {}]
  %s3 = inlined_call_operand.vmem [shape: f32[12,32], index: 3, kind: input, shape index: {}]
  %s4 = inlined_call_operand.vmem [shape: f32[32,128], index: 4, kind: input, shape index: {}]
  %s5 = inlined_call_operand.hbm [shape: f32[4,128], index: 5, kind: input, shape index: {}]
  %s6 = inlined_call_operand.hbm [shape: f32[1,128], index: 6, kind: input, shape index: {}]
  %s7 = inlined_call_operand.vmem [shape: f32[64,96], index: 7, kind: input, shape index: {}]
  %s8 = inlined_call_operand.hbm [shape: f32[1,128], index: 8, kind: input, shape index: {}]
  %s9 = inlined_call_operand.hbm [shape: f32[16,128], index: 9, kind: input, shape index: {}]
  %s10 = inlined_call_operand.hbm [shape: f32[1,128], index: 10, kind: input, shape index: {}]
  %s11 = inlined_call_operand.vmem [shape: f32[64,32], index: 11, kind: input, shape index: {}]
  %s12 = inlined_call_operand.hbm [shape: f32[32,128], index: 12, kind: input, shape index: {}]
  %s13 = inlined_call_operand.hbm [shape: f32[4,128], index: 13, kind: input, shape index: {}]
  %s14 = inlined_call_operand.hbm [shape: f32[1,128], index: 14, kind: input, shape index: {}]
  %s15 = inlined_call_operand.vmem [shape: f32[64,96], index: 15, kind: input, shape index: {}]
  %s16 = inlined_call_operand.hbm [shape: f32[1,128], index: 16, kind: input, shape index: {}]
  %s17 = inlined_call_operand.vmem [shape: f32[16,128], index: 17, kind: input, shape index: {}]
  %s18 = inlined_call_operand.vmem [shape: f32[1,128], index: 18, kind: input, shape index: {}]
  %s19 = inlined_call_operand.vmem [shape: f32[64,32], index: 19, kind: input, shape index: {}]
  %s20 = inlined_call_operand.vmem [shape: f32[32,10], index: 20, kind: input, shape index: {}]
  %s21 = inlined_call_operand.hbm [shape: f32[1,10], index: 21, kind: input, shape index: {}]
  %s22 = inlined_call_operand.vmem [shape: f32[2,11,10], index: 22, kind: output, shape index: {0}]
  %s23 = inlined_call_operand.vmem [shape: f32[2,11,10], index: 23, kind: output, shape index: {1}]
  %s24 = inlined_call_operand.hbm [shape: f32[2,32], index: 24, kind: output, shape index: {2}]
  %25 = xla_tuple %s22, %s23, %s24
  %s26 = sld [smem:[#allocation0]]
  $region158: #{adt_decoder_forward.1} parent=0
    _
  %s28 = ssub.s32 1, %s26
  %s29 = scalar_select 0, %s28, %s26
  $region1: #{adt_decoder_forward.1} parent=0
    #allocation3 [shape = 'u8[5120]{0}', space=vmem, size = 0x1400, scoped, tag = 'input window, operand 1, single buffered']
    #allocation4 [shape = 's32[1]{0}', space=sflag, size = 0x4, scoped, tag = 'scoped memory for adt_decoder_forward.1']
    #allocation5 [shape = 's32[1]{0}', space=sflag, size = 0x4, scoped, tag = 'scoped memory for adt_decoder_forward.1']
    #allocation6 [shape = 'u8[2048]{0}', space=vmem, size = 0x800, scoped, tag = 'input window, operand 5, single buffered']
    #allocation7 [shape = 's32[1]{0}', space=sflag, size = 0x4, scoped, tag = 'scoped memory for adt_decoder_forward.1']
    #allocation8 [shape = 'u8[512]{0}', space=vmem, size = 0x400, scoped, tag = 'input window, operand 6, single buffered']
    #allocation9 [shape = 'u8[512]{0}', space=vmem, size = 0x400, scoped, tag = 'input window, operand 8, single buffered']
    #allocation10 [shape = 's32[1]{0}', space=sflag, size = 0x4, scoped, tag = 'scoped memory for adt_decoder_forward.1']
    #allocation11 [shape = 'u8[8192]{0}', space=vmem, size = 0x2000, scoped, tag = 'input window, operand 9, single buffered']
    #allocation12 [shape = 'u8[512]{0}', space=vmem, size = 0x400, scoped, tag = 'input window, operand 10, single buffered']
    #allocation13 [shape = 's32[1]{0}', space=sflag, size = 0x4, scoped, tag = 'scoped memory for adt_decoder_forward.1']
    #allocation14 [shape = 'u8[16384]{0}', space=vmem, size = 0x4000, scoped, tag = 'input window, operand 12, single buffered']
    #allocation15 [shape = 'u8[2048]{0}', space=vmem, size = 0x800, scoped, tag = 'input window, operand 13, single buffered']
    #allocation16 [shape = 's32[1]{0}', space=sflag, size = 0x4, scoped, tag = 'scoped memory for adt_decoder_forward.1']
    #allocation17 [shape = 'u8[512]{0}', space=vmem, size = 0x400, scoped, tag = 'input window, operand 14, single buffered']
    #allocation18 [shape = 'u8[512]{0}', space=vmem, size = 0x400, scoped, tag = 'input window, operand 16, single buffered']
    #allocation19 [shape = 's32[1]{0}', space=sflag, size = 0x4, scoped, tag = 'scoped memory for adt_decoder_forward.1']
    #allocation20 [shape = 'u8[512]{0}', space=vmem, size = 0x400, scoped, tag = 'input window, operand 21, single buffered']
    #allocation21 [shape = 'u8[1024]{0}', space=vmem, size = 0x400, scoped, tag = 'output window, operand 2, single buffered']
    %30 = vsyncpa [#allocation4], 0
    %31 = vsyncpa [#allocation7], 0
    %32 = vsyncpa [#allocation10], 0
    %33 = vsyncpa [#allocation13], 0
    %34 = vsyncpa [#allocation16], 0
    %35 = vsyncpa [#allocation19], 0
    %36 = vsyncpa [#allocation5], 0
    // Predicated region
    $region2: #{adt_decoder_forward.1} parent=1 // pred_check
      _
    $region3: #{adt_decoder_forward.1} parent=1 // pred_check_branch
      %38 = sbr.rel (0) target = $region5
    $region4: #{adt_decoder_forward.1} parent=1 // pred_region
      _
    $region5: #{adt_decoder_forward.1} parent=1 // pred_fallthru
      _
    // Predicated region
    $region6: #{adt_decoder_forward.1} parent=1 // pred_check
      _
    $region7: #{adt_decoder_forward.1} parent=1 // pred_check_branch
      %40 = sbr.rel (0) target = $region9
    $region8: #{adt_decoder_forward.1} parent=1 // pred_region
      %42 = vsyncadd [#allocation4], 0
      %s43 = sshll.u32 %s1, 4
      %s44 = int_to_ptr.hbm [resolvable:$true] %s43
      %s45 = sshll.u32 [#allocation3], 4
      %s46 = int_to_ptr.vmem [resolvable:$true] %s45
      %51 = dma.hbm_to_vmem [thread:$0]  %s44, 160, %s46, [#allocation4], 32, 32, 2
    $region9: #{adt_decoder_forward.1} parent=1 // pred_fallthru
      _
    // Predicated region
    $region10: #{adt_decoder_forward.1} parent=1 // pred_check
      _
    $region11: #{adt_decoder_forward.1} parent=1 // pred_check_branch
      %53 = sbr.rel (0) target = $region13
    $region12: #{adt_decoder_forward.1} parent=1 // pred_region
      _
    $region13: #{adt_decoder_forward.1} parent=1 // pred_fallthru
      _
    // Predicated region
    $region14: #{adt_decoder_forward.1} parent=1 // pred_check
      _
    $region15: #{adt_decoder_forward.1} parent=1 // pred_check_branch
      %55 = sbr.rel (0) target = $region17
    $region16: #{adt_decoder_forward.1} parent=1 // pred_region
      _
    $region17: #{adt_decoder_forward.1} parent=1 // pred_fallthru
      _
    // Predicated region
    $region18: #{adt_decoder_forward.1} parent=1 // pred_check
      _
    $region19: #{adt_decoder_forward.1} parent=1 // pred_check_branch
      %57 = sbr.rel (0) target = $region21
    $region20: #{adt_decoder_forward.1} parent=1 // pred_region
      _
    $region21: #{adt_decoder_forward.1} parent=1 // pred_fallthru
      _
    // Predicated region
    $region22: #{adt_decoder_forward.1} parent=1 // pred_check
      _
    $region23: #{adt_decoder_forward.1} parent=1 // pred_check_branch
      %59 = sbr.rel (0) target = $region25
    $region24: #{adt_decoder_forward.1} parent=1 // pred_region
      %61 = vsyncadd [#allocation7], 0
      %s63 = sshll.u32 %s5, 4
      %s64 = int_to_ptr.hbm [resolvable:$true] %s63
      %s65 = sshll.u32 [#allocation6], 4
      %s66 = int_to_ptr.vmem [resolvable:$true] %s65
      %68 = dma.hbm_to_vmem [thread:$0]  %s64, 64, %s66, [#allocation7]
    $region25: #{adt_decoder_forward.1} parent=1 // pred_fallthru
      _
    // Predicated region
    $region26: #{adt_decoder_forward.1} parent=1 // pred_check
      _
    $region27: #{adt_decoder_forward.1} parent=1 // pred_check_branch
      %70 = sbr.rel (0) target = $region29
    $region28: #{adt_decoder_forward.1} parent=1 // pred_region
      %72 = vsyncadd [#allocation7], 0
      %s74 = sshll.u32 %s6, 4
      %s75 = int_to_ptr.hbm [resolvable:$true] %s74
      %s76 = sshll.u32 [#allocation8], 4
      %s77 = int_to_ptr.vmem [resolvable:$true] %s76
      %79 = dma.hbm_to_vmem [thread:$0]  %s75, 16, %s77, [#allocation7]
    $region29: #{adt_decoder_forward.1} parent=1 // pred_fallthru
      _
    // Predicated region
    $region30: #{adt_decoder_forward.1} parent=1 // pred_check
      _
    $region31: #{adt_decoder_forward.1} parent=1 // pred_check_branch
      %81 = sbr.rel (0) target = $region33
    $region32: #{adt_decoder_forward.1} parent=1 // pred_region
      _
    $region33: #{adt_decoder_forward.1} parent=1 // pred_fallthru
      _
    // Predicated region
    $region34: #{adt_decoder_forward.1} parent=1 // pred_check
      _
    $region35: #{adt_decoder_forward.1} parent=1 // pred_check_branch
      %83 = sbr.rel (0) target = $region37
    $region36: #{adt_decoder_forward.1} parent=1 // pred_region
      %85 = vsyncadd [#allocation10], 0
      %s87 = sshll.u32 %s8, 4
      %s88 = int_to_ptr.hbm [resolvable:$true] %s87
      %s89 = sshll.u32 [#allocation9], 4
      %s90 = int_to_ptr.vmem [resolvable:$true] %s89
      %92 = dma.hbm_to_vmem [thread:$0]  %s88, 16, %s90, [#allocation10]
    $region37: #{adt_decoder_forward.1} parent=1 // pred_fallthru
      _
    // Predicated region
    $region38: #{adt_decoder_forward.1} parent=1 // pred_check
      _
    $region39: #{adt_decoder_forward.1} parent=1 // pred_check_branch
      %94 = sbr.rel (0) target = $region41
    $region40: #{adt_decoder_forward.1} parent=1 // pred_region
      %96 = vsyncadd [#allocation10], 0
      %s97 = sshll.u32 %s9, 4
      %s98 = int_to_ptr.hbm [resolvable:$true] %s97
      %s99 = sshll.u32 [#allocation11], 4
      %s100 = int_to_ptr.vmem [resolvable:$true] %s99
      %105 = dma.hbm_to_vmem [thread:$0]  %s98, 256, %s100, [#allocation10], 128, 128, 8
    $region41: #{adt_decoder_forward.1} parent=1 // pred_fallthru
      _
    // Predicated region
    $region42: #{adt_decoder_forward.1} parent=1 // pred_check
      _
    $region43: #{adt_decoder_forward.1} parent=1 // pred_check_branch
      %107 = sbr.rel (0) target = $region45
    $region44: #{adt_decoder_forward.1} parent=1 // pred_region
      %109 = vsyncadd [#allocation13], 0
      %s111 = sshll.u32 %s10, 4
      %s112 = int_to_ptr.hbm [resolvable:$true] %s111
      %s113 = sshll.u32 [#allocation12], 4
      %s114 = int_to_ptr.vmem [resolvable:$true] %s113
      %116 = dma.hbm_to_vmem [thread:$0]  %s112, 16, %s114, [#allocation13]
    $region45: #{adt_decoder_forward.1} parent=1 // pred_fallthru
      _
    // Predicated region
    $region46: #{adt_decoder_forward.1} parent=1 // pred_check
      _
    $region47: #{adt_decoder_forward.1} parent=1 // pred_check_branch
      %118 = sbr.rel (0) target = $region49
    $region48: #{adt_decoder_forward.1} parent=1 // pred_region
      _
    $region49: #{adt_decoder_forward.1} parent=1 // pred_fallthru
      _
    // Predicated region
    $region50: #{adt_decoder_forward.1} parent=1 // pred_check
      _
    $region51: #{adt_decoder_forward.1} parent=1 // pred_check_branch
      %120 = sbr.rel (0) target = $region53
    $region52: #{adt_decoder_forward.1} parent=1 // pred_region
      %122 = vsyncadd [#allocation13], 0
      %s123 = sshll.u32 %s12, 4
      %s124 = int_to_ptr.hbm [resolvable:$true] %s123
      %s125 = sshll.u32 [#allocation14], 4
      %s126 = int_to_ptr.vmem [resolvable:$true] %s125
      %131 = dma.hbm_to_vmem [thread:$0]  %s124, 512, %s126, [#allocation13], 128, 128, 8
    $region53: #{adt_decoder_forward.1} parent=1 // pred_fallthru
      _
    // Predicated region
    $region54: #{adt_decoder_forward.1} parent=1 // pred_check
      _
    $region55: #{adt_decoder_forward.1} parent=1 // pred_check_branch
      %133 = sbr.rel (0) target = $region57
    $region56: #{adt_decoder_forward.1} parent=1 // pred_region
      %135 = vsyncadd [#allocation16], 0
      %s137 = sshll.u32 %s13, 4
      %s138 = int_to_ptr.hbm [resolvable:$true] %s137
      %s139 = sshll.u32 [#allocation15], 4
      %s140 = int_to_ptr.vmem [resolvable:$true] %s139
      %142 = dma.hbm_to_vmem [thread:$0]  %s138, 64, %s140, [#allocation16]
    $region57: #{adt_decoder_forward.1} parent=1 // pred_fallthru
      _
    // Predicated region
    $region58: #{adt_decoder_forward.1} parent=1 // pred_check
      _
    $region59: #{adt_decoder_forward.1} parent=1 // pred_check_branch
      %144 = sbr.rel (0) target = $region61
    $region60: #{adt_decoder_forward.1} parent=1 // pred_region
      %146 = vsyncadd [#allocation16], 0
      %s148 = sshll.u32 %s14, 4
      %s149 = int_to_ptr.hbm [resolvable:$true] %s148
      %s150 = sshll.u32 [#allocation17], 4
      %s151 = int_to_ptr.vmem [resolvable:$true] %s150
      %153 = dma.hbm_to_vmem [thread:$0]  %s149, 16, %s151, [#allocation16]
    $region61: #{adt_decoder_forward.1} parent=1 // pred_fallthru
      _
    // Predicated region
    $region62: #{adt_decoder_forward.1} parent=1 // pred_check
      _
    $region63: #{adt_decoder_forward.1} parent=1 // pred_check_branch
      %155 = sbr.rel (0) target = $region65
    $region64: #{adt_decoder_forward.1} parent=1 // pred_region
      _
    $region65: #{adt_decoder_forward.1} parent=1 // pred_fallthru
      _
    // Predicated region
    $region66: #{adt_decoder_forward.1} parent=1 // pred_check
      _
    $region67: #{adt_decoder_forward.1} parent=1 // pred_check_branch
      %157 = sbr.rel (0) target = $region69
    $region68: #{adt_decoder_forward.1} parent=1 // pred_region
      %159 = vsyncadd [#allocation19], 0
      %s161 = sshll.u32 %s16, 4
      %s162 = int_to_ptr.hbm [resolvable:$true] %s161
      %s163 = sshll.u32 [#allocation18], 4
      %s164 = int_to_ptr.vmem [resolvable:$true] %s163
      %166 = dma.hbm_to_vmem [thread:$0]  %s162, 16, %s164, [#allocation19]
    $region69: #{adt_decoder_forward.1} parent=1 // pred_fallthru
      _
    // Predicated region
    $region70: #{adt_decoder_forward.1} parent=1 // pred_check
      _
    $region71: #{adt_decoder_forward.1} parent=1 // pred_check_branch
      %168 = sbr.rel (0) target = $region73
    $region72: #{adt_decoder_forward.1} parent=1 // pred_region
      _
    $region73: #{adt_decoder_forward.1} parent=1 // pred_fallthru
      _
    // Predicated region
    $region74: #{adt_decoder_forward.1} parent=1 // pred_check
      _
    $region75: #{adt_decoder_forward.1} parent=1 // pred_check_branch
      %170 = sbr.rel (0) target = $region77
    $region76: #{adt_decoder_forward.1} parent=1 // pred_region
      _
    $region77: #{adt_decoder_forward.1} parent=1 // pred_fallthru
      _
    // Predicated region
    $region78: #{adt_decoder_forward.1} parent=1 // pred_check
      _
    $region79: #{adt_decoder_forward.1} parent=1 // pred_check_branch
      %172 = sbr.rel (0) target = $region81
    $region80: #{adt_decoder_forward.1} parent=1 // pred_region
      _
    $region81: #{adt_decoder_forward.1} parent=1 // pred_fallthru
      _
    // Predicated region
    $region82: #{adt_decoder_forward.1} parent=1 // pred_check
      _
    $region83: #{adt_decoder_forward.1} parent=1 // pred_check_branch
      %174 = sbr.rel (0) target = $region85
    $region84: #{adt_decoder_forward.1} parent=1 // pred_region
      _
    $region85: #{adt_decoder_forward.1} parent=1 // pred_fallthru
      _
    // Predicated region
    $region86: #{adt_decoder_forward.1} parent=1 // pred_check
      _
    $region87: #{adt_decoder_forward.1} parent=1 // pred_check_branch
      %176 = sbr.rel (0) target = $region89
    $region88: #{adt_decoder_forward.1} parent=1 // pred_region
      %178 = vsyncadd [#allocation19], 0
      %s180 = sshll.u32 %s21, 4
      %s181 = int_to_ptr.hbm [resolvable:$true] %s180
      %s182 = sshll.u32 [#allocation20], 4
      %s183 = int_to_ptr.vmem [resolvable:$true] %s182
      %185 = dma.hbm_to_vmem [thread:$0]  %s181, 16, %s183, [#allocation19]
    $region89: #{adt_decoder_forward.1} parent=1 // pred_fallthru
      _
    // Predicated region
    $region90: #{adt_decoder_forward.1} parent=1 // pred_check
      _
    $region91: #{adt_decoder_forward.1} parent=1 // pred_check_branch
      %187 = sbr.rel (0) target = $region93
    $region92: #{adt_decoder_forward.1} parent=1 // pred_region
      %189 = dma.done [#allocation4], 160
    $region93: #{adt_decoder_forward.1} parent=1 // pred_fallthru
      _
    // Predicated region
    $region94: #{adt_decoder_forward.1} parent=1 // pred_check
      _
    $region95: #{adt_decoder_forward.1} parent=1 // pred_check_branch
      %191 = sbr.rel (0) target = $region97
    $region96: #{adt_decoder_forward.1} parent=1 // pred_region
      %193 = dma.done [#allocation7], 64
    $region97: #{adt_decoder_forward.1} parent=1 // pred_fallthru
      _
    // Predicated region
    $region98: #{adt_decoder_forward.1} parent=1 // pred_check
      _
    $region99: #{adt_decoder_forward.1} parent=1 // pred_check_branch
      %195 = sbr.rel (0) target = $region101
    $region100: #{adt_decoder_forward.1} parent=1 // pred_region
      %197 = dma.done [#allocation7], 16
    $region101: #{adt_decoder_forward.1} parent=1 // pred_fallthru
      _
    // Predicated region
    $region102: #{adt_decoder_forward.1} parent=1 // pred_check
      _
    $region103: #{adt_decoder_forward.1} parent=1 // pred_check_branch
      %199 = sbr.rel (0) target = $region105
    $region104: #{adt_decoder_forward.1} parent=1 // pred_region
      %201 = dma.done [#allocation10], 16
    $region105: #{adt_decoder_forward.1} parent=1 // pred_fallthru
      _
    // Predicated region
    $region106: #{adt_decoder_forward.1} parent=1 // pred_check
      _
    $region107: #{adt_decoder_forward.1} parent=1 // pred_check_branch
      %203 = sbr.rel (0) target = $region109
    $region108: #{adt_decoder_forward.1} parent=1 // pred_region
      %205 = dma.done [#allocation10], 256
    $region109: #{adt_decoder_forward.1} parent=1 // pred_fallthru
      _
    // Predicated region
    $region110: #{adt_decoder_forward.1} parent=1 // pred_check
      _
    $region111: #{adt_decoder_forward.1} parent=1 // pred_check_branch
      %207 = sbr.rel (0) target = $region113
    $region112: #{adt_decoder_forward.1} parent=1 // pred_region
      %209 = dma.done [#allocation13], 16
    $region113: #{adt_decoder_forward.1} parent=1 // pred_fallthru
      _
    // Predicated region
    $region114: #{adt_decoder_forward.1} parent=1 // pred_check
      _
    $region115: #{adt_decoder_forward.1} parent=1 // pred_check_branch
      %211 = sbr.rel (0) target = $region117
    $region116: #{adt_decoder_forward.1} parent=1 // pred_region
      %213 = dma.done [#allocation13], 512
    $region117: #{adt_decoder_forward.1} parent=1 // pred_fallthru
      _
    // Predicated region
    $region118: #{adt_decoder_forward.1} parent=1 // pred_check
      _
    $region119: #{adt_decoder_forward.1} parent=1 // pred_check_branch
      %215 = sbr.rel (0) target = $region121
    $region120: #{adt_decoder_forward.1} parent=1 // pred_region
      %217 = dma.done [#allocation16], 64
    $region121: #{adt_decoder_forward.1} parent=1 // pred_fallthru
      _
    // Predicated region
    $region122: #{adt_decoder_forward.1} parent=1 // pred_check
      _
    $region123: #{adt_decoder_forward.1} parent=1 // pred_check_branch
      %219 = sbr.rel (0) target = $region125
    $region124: #{adt_decoder_forward.1} parent=1 // pred_region
      %221 = dma.done [#allocation16], 16
    $region125: #{adt_decoder_forward.1} parent=1 // pred_fallthru
      _
    // Predicated region
    $region126: #{adt_decoder_forward.1} parent=1 // pred_check
      _
    $region127: #{adt_decoder_forward.1} parent=1 // pred_check_branch
      %223 = sbr.rel (0) target = $region129
    $region128: #{adt_decoder_forward.1} parent=1 // pred_region
      %225 = dma.done [#allocation19], 16
    $region129: #{adt_decoder_forward.1} parent=1 // pred_fallthru
      _
    // Predicated region
    $region130: #{adt_decoder_forward.1} parent=1 // pred_check
      _
    $region131: #{adt_decoder_forward.1} parent=1 // pred_check_branch
      %227 = sbr.rel (0) target = $region133
    $region132: #{adt_decoder_forward.1} parent=1 // pred_region
      %229 = dma.done [#allocation19], 16
    $region133: #{adt_decoder_forward.1} parent=1 // pred_fallthru
      _
    %v230 = vld [vmem:[%s0] sm:$0xff]
    %v231 = vld [vmem:[%s0 + $0x8] sm:$0x7]
    %v232 = vld [vmem:[#allocation3] sm:$0x3]
    %v233 = vld [vmem:[#allocation3 + $0x2] sm:$0x3]
    %v234 = vld [vmem:[#allocation3 + $0x4] sm:$0x3]
    %v235 = vld [vmem:[#allocation3 + $0x6] sm:$0x3]
    %v236 = vld [vmem:[#allocation3 + $0x8] sm:$0x3]
    %v237 = vld [vmem:[%s2] sm:$0x1]
    %v238 = vld [vmem:[%s3] sm:$0xff]
    %v239 = vld [vmem:[%s3 + $0x8] sm:$0xf]
    %v240 = vlaneseq
    %v241 = vand.u32 %v240, 127
    %vm242 = vcmp.eq.s32.totalorder %v241, 0
    %v243 = vsel %vm242, 1, 0
    %v244 = vcvt.s32.f32 %v243
    %v245 = vadd.s32 %v230, 1
    %v246 = vadd.s32 %v231, 1
    %247 = vset.pattern.permute.xlu0 0
    %248 = vperm.xlu0 %247, %v245
    %v249 = vpop.permute.xlu0 %248
    %250 = vset.pattern.permute.xlu0 0
    %251 = vperm.xlu0 %250, %v246
    %v252 = vpop.permute.xlu0 %251
    %vm253 = vcmp.eq.s32.totalorder %v249, %v241
    %vm254 = vcmp.eq.s32.totalorder %v252, %v241
    %v255 = vsel %vm253, 1, 0
    %v256 = vsel %vm254, 1, 0
    %v257 = vcvt.s32.f32 %v255
    %v258 = vcvt.s32.f32 %v256
    %vm261 = vcmask 1040384
    %v262 = vrot.slane %v257, 7
    %v263 = vrot.slane %v258, 7
    %v264 = vsel %vm261, %v262, %v263
    %v266 = vsel %vm261, %v244, %v262
    %vm267 = vcmp.ge.s32.totalorder %v245, 5
    %vm268 = vcmp.ge.s32.totalorder %v246, 5
    %v269 = vsel %vm267, 1, 0
    %v270 = vsel %vm268, 1, 0
    %v271 = vcvt.s32.f32 %v269
    %v272 = vcvt.s32.f32 %v270
    %v275 = vrot.slane %v271, 7
    %v276 = vrot.slane %v272, 7
    %v277 = vsel %vm261, %v275, %v276
    %v279 = vsel %vm261, 0.0, %v275
    %281 = vset.pattern.permute.xlu0 0
    %282 = vperm.xlu0 %281, %v279
    %v283 = vpop.permute.xlu0 %282
    %285 = vset.pattern.permute.xlu0 0
    %286 = vperm.xlu0 %285, %v277
    %v287 = vpop.permute.xlu0 %286
    %v290 = vperm.slane %v237, 0
    %v292 = vmul.f32 %v283, %v290
    %v293 = vmul.f32 %v287, %v290
    %v299 = vrot.slane %v233, 7
    %vm300 = vcmask 1041409
    %v301 = vsel %vm300, %v299, %v232
    %v302 = vrot.slane %v234, 6
    %vm303 = vcmask 1042434
    %v304 = vsel %vm303, %v302, %v301
    %v305 = vrot.slane %v235, 5
    %vm306 = vcmask 1043459
    %v307 = vsel %vm306, %v305, %v304
    %v308 = vrot.slane %v236, 4
    %vm309 = vcmask 1044484
    %v310 = vsel %vm309, %v308, %v307
    %vm311 = vcmask 39936
    %v313 = vsel %vm311, %v266, 0
    %v315 = vsel %vm311, %v264, 0
    %vm317 = vcmask 1044480
    %v318 = vsel %vm317, %v310, 0
    %320 = vmatpush.msra.mxu0 0.0
    %321 = vmatpush.msra.mxu0 0.0
    %322 = vmatpush.msra.mxu0 0.0
    %323 = vmatpush.msra.mxu0 0.0
    %324 = vmatpush.msra.mxu0 0.0
    %325 = vmatpush.msra.mxu0 0.0
    %326 = vmatpush.msra.mxu0 0.0
    %327 = vmatpush.msra.mxu0 0.0
    %328 = vmatpush.msra.mxu0 0.0
    %329 = vmatpush.msra.mxu0 0.0
    %330 = vmatpush.msra.mxu0 0.0
    %331 = vmatpush.msra.mxu0 0.0
    %332 = vmatpush.msra.mxu0 0.0
    %333 = vmatpush.msra.mxu0 0.0
    %334 = vmatpush.msra.mxu0 0.0
    %335 = vmatpush.msra.mxu0 %v318
    %336 = vmatmul.f32.gmra.mxu0 %v313
    %v337 = vpop.f32.mrf.mxu0
    %v338 = vadd.f32 %v292, %v337
    %339 = vmatmul.f32.gmra.mxu0 %v315
    %v340 = vpop.f32.mrf.mxu0
    %v341 = vadd.f32 %v293, %v340
    %342 = vdwg.mxu0
    %v343 = vadd.f32 %v338, %v238
    %v344 = vadd.f32 %v341, %v239
    %345 = vset.pattern.permute.xlu0 1
    %346 = vperm.xlu0 %345, %v245
    %v347 = vpop.permute.xlu0 %346
    %348 = vset.pattern.permute.xlu0 1
    %349 = vperm.xlu0 %348, %v246
    %v350 = vpop.permute.xlu0 %349
    %vm351 = vcmp.eq.s32.totalorder %v347, %v241
    %vm352 = vcmp.eq.s32.totalorder %v350, %v241
    %v353 = vsel %vm351, 1, 0
    %v354 = vsel %vm352, 1, 0
    %v355 = vcvt.s32.f32 %v353
    %v356 = vcvt.s32.f32 %v354
    %v359 = vrot.slane %v355, 7
    %v360 = vrot.slane %v356, 7
    %v361 = vsel %vm261, %v359, %v360
    %v363 = vsel %vm261, %v244, %v359
    %364 = vrot.lane.b32.xlu0 %v275, 127
    %v365 = vpop.permute.xlu0 %364
    %366 = vrot.lane.b32.xlu0 %v277, 127
    %v367 = vpop.permute.xlu0 %366
    %v369 = vsel %vm261, 0.0, %v365
    %371 = vset.pattern.permute.xlu0 0
    %372 = vperm.xlu0 %371, %v369
    %v373 = vpop.permute.xlu0 %372
    %375 = vset.pattern.permute.xlu0 0
    %376 = vperm.xlu0 %375, %v367
    %v377 = vpop.permute.xlu0 %376
    %v379 = vmul.f32 %v373, %v290
    %v380 = vmul.f32 %v377, %v290
    %v381 = vrot.slane %v232, 1
    %v382 = vsel %vm300, %v233, %v381
    %v383 = vrot.slane %v234, 7
    %v384 = vsel %vm303, %v383, %v382
    %v385 = vrot.slane %v235, 6
    %v386 = vsel %vm306, %v385, %v384
    %v387 = vrot.slane %v236, 5
    %v388 = vsel %vm309, %v387, %v386
    %v390 = vsel %vm311, %v363, 0
    %v392 = vsel %vm311, %v361, 0
    %v394 = vsel %vm317, %v388, 0
    %396 = vmatpush.msra.mxu0 0.0
    %397 = vmatpush.msra.mxu0 0.0
    %398 = vmatpush.msra.mxu0 0.0
    %399 = vmatpush.msra.mxu0 0.0
    %400 = vmatpush.msra.mxu0 0.0
    %401 = vmatpush.msra.mxu0 0.0
    %402 = vmatpush.msra.mxu0 0.0
    %403 = vmatpush.msra.mxu0 0.0
    %404 = vmatpush.msra.mxu0 0.0
    %405 = vmatpush.msra.mxu0 0.0
    %406 = vmatpush.msra.mxu0 0.0
    %407 = vmatpush.msra.mxu0 0.0
    %408 = vmatpush.msra.mxu0 0.0
    %409 = vmatpush.msra.mxu0 0.0
    %410 = vmatpush.msra.mxu0 0.0
    %411 = vmatpush.msra.mxu0 %v394
    %412 = vmatmul.f32.gmra.mxu0 %v390
    %v413 = vpop.f32.mrf.mxu0
    %v414 = vadd.f32 %v379, %v413
    %415 = vmatmul.f32.gmra.mxu0 %v392
    %v416 = vpop.f32.mrf.mxu0
    %v417 = vadd.f32 %v380, %v416
    %418 = vdwg.mxu0
    %v419 = vadd.f32 %v414, %v238
    %v420 = vadd.f32 %v417, %v239
    %vm423 = vcmask 1043456
    %v424 = vrot.slane %v419, 4
    %v425 = vrot.slane %v420, 4
    %v426 = vsel %vm423, %v424, %v425
    %v428 = vsel %vm423, %v344, %v424
    %vm429 = vcmp.ge.s32.totalorder %v241, 0
    %vm430 = vcmp.lt.s32.totalorder %v241, 64
    %vm431 = vmand %vm429, %vm430
    %v432 = vsel %vm431, 1, 0
    %v433 = vcvt.s32.f32 %v432
    %vm434 = vcmp.ge.s32.totalorder %v241, 64
    %vm435 = vcmp.lt.s32.totalorder %v241, 128
    %vm436 = vmand %vm434, %vm435
    %v437 = vsel %vm436, 1, 0
    %v438 = vcvt.s32.f32 %v437
    %v439 = vld [vmem:[%s4] sm:$0xff]
    %v440 = vld [vmem:[%s4 + $0x8] sm:$0xff]
    %v441 = vld [vmem:[%s4 + $0x10] sm:$0xff]
    %v442 = vld [vmem:[%s4 + $0x18] sm:$0xff]
    %v443 = vld [vmem:[#allocation6] sm:$0xf]
    %v444 = vld [vmem:[#allocation8] sm:$0x1]
    %v445 = vld [vmem:[%s7] sm:$0xff]
    %v446 = vld [vmem:[%s7 + $0x8] sm:$0xff]
    %v447 = vld [vmem:[%s7 + $0x10] sm:$0xff]
    %v448 = vld [vmem:[%s7 + $0x18] sm:$0xff]
    %v449 = vld [vmem:[%s7 + $0x20] sm:$0xff]
    %v450 = vld [vmem:[%s7 + $0x28] sm:$0xff]
    %v451 = vld [vmem:[%s7 + $0x30] sm:$0xff]
    %v452 = vld [vmem:[%s7 + $0x38] sm:$0xff]
    %v453 = vld [vmem:[#allocation9] sm:$0x1]
    %v454 = vld [vmem:[#allocation11] sm:$0xff]
    %v455 = vld [vmem:[#allocation11 + $0x8] sm:$0xff]
    %v456 = vld [vmem:[#allocation12] sm:$0x1]
    %v457 = vld [vmem:[%s11] sm:$0xff]
    %v458 = vld [vmem:[%s11 + $0x8] sm:$0xff]
    %v459 = vld [vmem:[%s11 + $0x10] sm:$0xff]
    %v460 = vld [vmem:[%s11 + $0x18] sm:$0xff]
    %v461 = vld [vmem:[%s11 + $0x20] sm:$0xff]
    %v462 = vld [vmem:[%s11 + $0x28] sm:$0xff]
    %v463 = vld [vmem:[%s11 + $0x30] sm:$0xff]
    %v464 = vld [vmem:[%s11 + $0x38] sm:$0xff]
    %vm465 = vcmask 261120
    %v467 = vsel %vm465, %v343, 0
    %v470 = vsel %vm465, %v428, 0
    %v472 = vsel %vm465, %v426, 0
    %474 = vmatpush.msra.mxu0 0.0
    %475 = vmatpush.msra.mxu0 0.0
    %476 = vmatpush.msra.mxu0 0.0
    %477 = vmatpush.msra.mxu0 0.0
    %478 = vmatpush.msra.mxu0 0.0
    %479 = vmatpush.msra.mxu0 0.0
    %480 = vmatpush.msra.mxu0 0.0
    %481 = vmatpush.msra.mxu0 0.0
    %482 = vmatpush.msra.mxu0 0.0
    %483 = vmatpush.msra.mxu0 0.0
    %484 = vmatpush.msra.mxu0 0.0
    %485 = vmatpush.msra.mxu0 0.0
    %486 = vmatpush.msra.mxu0 %v442
    %487 = vmatpush.msra.mxu0 %v441
    %488 = vmatpush.msra.mxu0 %v440
    %489 = vmatpush.msra.mxu0 %v439
    %490 = vmatmul.f32.gmra.mxu0 %v467
    %v491 = vpop.f32.mrf.mxu0
    %v492 = vadd.f32 0.0, %v491
    %493 = vmatmul.f32.gmra.mxu0 %v470
    %v494 = vpop.f32.mrf.mxu0
    %v495 = vadd.f32 0.0, %v494
    %496 = vmatmul.f32.gmra.mxu0 %v472
    %v497 = vpop.f32.mrf.mxu0
    %v498 = vadd.f32 0.0, %v497
    %499 = vdwg.mxu0
    %v502 = vrot.slane %v495, 4
    %v503 = vrot.slane %v498, 4
    %v504 = vsel %vm423, %v502, %v503
    %505 = vrot.lane.b32.xlu0 %v504, 64
    %v506 = vpop.permute.xlu0 %505
    %507 = vrot.lane.b32.xlu0 %v503, 64
    %v508 = vpop.permute.xlu0 %507
    %vm511 = vcmask 523264
    %v512 = vsel %vm511, %v492, %v506
    %v513 = vsel %vm511, %v495, %v508
    %v514 = vperm.slane %v443, 3
    %v515 = vmul.f32 %v512, %v514
    %v516 = vmul.f32 %v513, %v514
    %v518 = vperm.slane %v444, 0
    %v520 = vadd.f32 %v518, %v515
    %v521 = vadd.f32 %v518, %v516
    %v524 = vrot.slane %v512, 7
    %v525 = vrot.slane %v513, 7
    %v526 = vsel %vm261, %v524, %v525
    %v529 = vsel %vm261, 0.0, %v524
    %v530 = vperm.slane %v443, 2
    %v531 = vmul.f32 %v529, %v530
    %v532 = vmul.f32 %v526, %v530
    %v533 = vadd.f32 %v520, %v531
    %v534 = vadd.f32 %v521, %v532
    %vm535 = vcmask 1041408
    %v536 = vrot.slane %v512, 6
    %v537 = vrot.slane %v513, 6
    %v538 = vsel %vm535, %v536, %v537
    %v541 = vsel %vm535, 0.0, %v536
    %v542 = vperm.slane %v443, 1
    %v543 = vmul.f32 %v541, %v542
    %v544 = vmul.f32 %v538, %v542
    %v545 = vadd.f32 %v533, %v543
    %v546 = vadd.f32 %v534, %v544
    %vm547 = vcmask 1042432
    %v548 = vrot.slane %v512, 5
    %v549 = vrot.slane %v513, 5
    %v550 = vsel %vm547, %v548, %v549
    %v553 = vsel %vm547, 0.0, %v548
    %v554 = vperm.slane %v443, 0
    %v555 = vmul.f32 %v553, %v554
    %v556 = vmul.f32 %v550, %v554
    %v557 = vadd.f32 %v545, %v555
    %v558 = vadd.f32 %v546, %v556
    %v559 = vxor.u32 %v557, 2147483648
    %v560 = vxor.u32 %v558, 2147483648
    %v561 = vmul.f32 %v559, 1.442695
    %v562 = vpow.pop %v561
    %v563 = vmul.f32 %v560, 1.442695
    %v564 = vpow.pop %v563
    %v565 = vadd.f32 %v562, 1.0
    %v566 = vadd.f32 %v564, 1.0
    %v567 = vrcp.pop %v565
    %v568 = vmul.f32 %v565, %v567
    %v569 = vsub.f32 1.0, %v568
    %v570 = vmul.f32 %v567, %v569
    %v571 = vadd.f32 %v567, %v570
    %vm572 = vweird.f32 %v565
    %vm573 = vweird.f32 %v567
    %vm574 = vmor %vm572, %vm573
    %v575 = vsel %vm574, %v567, %v571
    %v576 = vand.u32 2147483647, %v565
    %vm577 = vcmp.eq.f32.partialorder %v576, 8.507059e+37
    %v578 = vand.u32 %v565, 2147483648
    %v579 = vor.u32 1.1754944e-38, %v578
    %v580 = vsel %vm577, %v579, %v575
    %v581 = vmul.f32 1.0, %v580
    %v582 = vrcp.pop %v566
    %v583 = vmul.f32 %v566, %v582
    %v584 = vsub.f32 1.0, %v583
    %v585 = vmul.f32 %v582, %v584
    %v586 = vadd.f32 %v582, %v585
    %vm587 = vweird.f32 %v566
    %vm588 = vweird.f32 %v582
    %vm589 = vmor %vm587, %vm588
    %v590 = vsel %vm589, %v582, %v586
    %v591 = vand.u32 2147483647, %v566
    %vm592 = vcmp.eq.f32.partialorder %v591, 8.507059e+37
    %v593 = vand.u32 %v566, 2147483648
    %v594 = vor.u32 1.1754944e-38, %v593
    %v595 = vsel %vm592, %v594, %v590
    %v596 = vmul.f32 1.0, %v595
    %v597 = vmul.f32 %v557, %v581
    %v598 = vmul.f32 %v558, %v596
    %v601 = vrot.slane %v597, 4
    %v602 = vrot.slane %v598, 4
    %v603 = vsel %vm423, %v601, %v602
    %604 = vrot.lane.b32.xlu0 %v601, 64
    %v605 = vpop.permute.xlu0 %604
    %606 = vrot.lane.b32.xlu0 %v603, 64
    %v607 = vpop.permute.xlu0 %606
    %v609 = vsel %vm423, %v598, %v605
    %v610 = vsel %vm511, %v597, 0
    %v613 = vsel %vm511, %v609, 0
    %v615 = vsel %vm511, %v607, 0
    %617 = vmatpush.msra.mxu0 0.0
    %618 = vmatpush.msra.mxu0 0.0
    %619 = vmatpush.msra.mxu0 0.0
    %620 = vmatpush.msra.mxu0 0.0
    %621 = vmatpush.msra.mxu0 0.0
    %622 = vmatpush.msra.mxu0 0.0
    %623 = vmatpush.msra.mxu0 0.0
    %624 = vmatpush.msra.mxu0 0.0
    %625 = vmatpush.msra.mxu0 %v452
    %626 = vmatpush.msra.mxu0 %v451
    %627 = vmatpush.msra.mxu0 %v450
    %628 = vmatpush.msra.mxu0 %v449
    %629 = vmatpush.msra.mxu0 %v448
    %630 = vmatpush.msra.mxu0 %v447
    %631 = vmatpush.msra.mxu0 %v446
    %632 = vmatpush.msra.mxu0 %v445
    %633 = vmatmul.f32.gmra.mxu0 %v610
    %v634 = vpop.f32.mrf.mxu0
    %v635 = vadd.f32 0.0, %v634
    %636 = vmatmul.f32.gmra.mxu0 %v613
    %v637 = vpop.f32.mrf.mxu0
    %v638 = vadd.f32 0.0, %v637
    %639 = vmatmul.f32.gmra.mxu0 %v615
    %v640 = vpop.f32.mrf.mxu0
    %v641 = vadd.f32 0.0, %v640
    %642 = vdwg.mxu0
    %v645 = vrot.slane %v638, 4
    %v646 = vrot.slane %v641, 4
    %v647 = vsel %vm423, %v645, %v646
    %648 = vrot.lane.b32.xlu0 %v647, 64
    %v649 = vpop.permute.xlu0 %648
    %650 = vrot.lane.b32.xlu0 %v646, 64
    %v651 = vpop.permute.xlu0 %650
    %v654 = vsel %vm511, %v635, %v649
    %v655 = vsel %vm511, %v638, %v651
    %v657 = vperm.slane %v453, 0
    %v659 = vadd.f32 %v654, %v657
    %v660 = vadd.f32 %v655, %v657
    %v661 = vmax.f32 %v659, 0.0
    %v662 = vmax.f32 %v660, 0.0
    %vm663 = vcmp.ne.f32.partialorder %v659, %v659
    %vm664 = vcmp.ne.f32.partialorder %v660, %v660
    %v665 = vadd.f32 %v659, 0.0
    %v666 = vadd.f32 %v660, 0.0
    %v667 = vand.u32 2147483647, %v659
    %v668 = vand.u32 2147483647, %v660
    %v669 = vsub.f32 0.0, %v667
    %v670 = vsub.f32 0.0, %v668
    %v671 = vmul.f32 %v669, 1.442695
    %v672 = vpow.pop %v671
    %v673 = vmul.f32 %v670, 1.442695
    %v674 = vpow.pop %v673
    %v675 = vadd.f32 %v672, 1.0
    %v676 = vlog2.pop %v675
    %v677 = vmul.f32 %v676, 0.6931472
    %v678 = vmul.f32 -0.5, %v672
    %v679 = vadd.f32 %v678, 1.0
    %v680 = vmul.f32 %v679, %v672
    %v681 = vand.u32 2147483647, %v672
    %vm682 = vcmp.lt.f32.partialorder %v681, 0.0004427343
    %v683 = vsel %vm682, %v680, %v677
    %v684 = vadd.f32 %v674, 1.0
    %v685 = vlog2.pop %v684
    %v686 = vmul.f32 %v685, 0.6931472
    %v687 = vmul.f32 -0.5, %v674
    %v688 = vadd.f32 %v687, 1.0
    %v689 = vmul.f32 %v688, %v674
    %v690 = vand.u32 2147483647, %v674
    %vm691 = vcmp.lt.f32.partialorder %v690, 0.0004427343
    %v692 = vsel %vm691, %v689, %v686
    %v693 = vadd.f32 %v661, %v683
    %v694 = vadd.f32 %v662, %v692
    %v695 = vsel %vm663, %v665, %v693
    %v696 = vsel %vm664, %v666, %v694
    %v697 = vperm.slane %v635, 0
    %v698 = vlaneseq
    %v699 = vshrl.u32 %v698, 7
    %v700 = vadd.s32 %v699, 64
    %701 = vset.pattern.permute.xlu0 %v700
    %702 = vperm.xlu0 %701, %v697
    %v703 = vpop.permute.xlu0 %702
    %v704 = vlaneseq
    %v705 = vshrl.u32 %v704, 7
    %v706 = vadd.s32 %v705, 72
    %707 = vset.pattern.permute.xlu0 %v706
    %708 = vperm.xlu0 %707, %v697
    %v709 = vpop.permute.xlu0 %708
    %v710 = vperm.slane %v635, 1
    %v711 = vlaneseq
    %v712 = vshrl.u32 %v711, 7
    %v713 = vadd.s32 %v712, 64
    %714 = vset.pattern.permute.xlu0 %v713
    %715 = vperm.xlu0 %714, %v710
    %v716 = vpop.permute.xlu0 %715
    %v717 = vlaneseq
    %v718 = vshrl.u32 %v717, 7
    %v719 = vadd.s32 %v718, 72
    %720 = vset.pattern.permute.xlu0 %v719
    %721 = vperm.xlu0 %720, %v710
    %v722 = vpop.permute.xlu0 %721
    %v723 = vperm.slane %v635, 2
    %v724 = vlaneseq
    %v725 = vshrl.u32 %v724, 7
    %v726 = vadd.s32 %v725, 64
    %727 = vset.pattern.permute.xlu0 %v726
    %728 = vperm.xlu0 %727, %v723
    %v729 = vpop.permute.xlu0 %728
    %v730 = vlaneseq
    %v731 = vshrl.u32 %v730, 7
    %v732 = vadd.s32 %v731, 72
    %733 = vset.pattern.permute.xlu0 %v732
    %734 = vperm.xlu0 %733, %v723
    %v735 = vpop.permute.xlu0 %734
    %v736 = vperm.slane %v635, 3
    %v737 = vlaneseq
    %v738 = vshrl.u32 %v737, 7
    %v739 = vadd.s32 %v738, 64
    %740 = vset.pattern.permute.xlu0 %v739
    %741 = vperm.xlu0 %740, %v736
    %v742 = vpop.permute.xlu0 %741
    %v743 = vlaneseq
    %v744 = vshrl.u32 %v743, 7
    %v745 = vadd.s32 %v744, 72
    %746 = vset.pattern.permute.xlu0 %v745
    %747 = vperm.xlu0 %746, %v736
    %v748 = vpop.permute.xlu0 %747
    %v749 = vperm.slane %v635, 4
    %v750 = vlaneseq
    %v751 = vshrl.u32 %v750, 7
    %v752 = vadd.s32 %v751, 64
    %753 = vset.pattern.permute.xlu0 %v752
    %754 = vperm.xlu0 %753, %v749
    %v755 = vpop.permute.xlu0 %754
    %v756 = vlaneseq
    %v757 = vshrl.u32 %v756, 7
    %v758 = vadd.s32 %v757, 72
    %759 = vset.pattern.permute.xlu0 %v758
    %760 = vperm.xlu0 %759, %v749
    %v761 = vpop.permute.xlu0 %760
    %v762 = vperm.slane %v635, 5
    %v763 = vlaneseq
    %v764 = vshrl.u32 %v763, 7
    %v765 = vadd.s32 %v764, 64
    %766 = vset.pattern.permute.xlu0 %v765
    %767 = vperm.xlu0 %766, %v762
    %v768 = vpop.permute.xlu0 %767
    %v769 = vlaneseq
    %v770 = vshrl.u32 %v769, 7
    %v771 = vadd.s32 %v770, 72
    %772 = vset.pattern.permute.xlu0 %v771
    %773 = vperm.xlu0 %772, %v762
    %v774 = vpop.permute.xlu0 %773
    %v775 = vperm.slane %v635, 6
    %v776 = vlaneseq
    %v777 = vshrl.u32 %v776, 7
    %v778 = vadd.s32 %v777, 64
    %779 = vset.pattern.permute.xlu0 %v778
    %780 = vperm.xlu0 %779, %v775
    %v781 = vpop.permute.xlu0 %780
    %v782 = vlaneseq
    %v783 = vshrl.u32 %v782, 7
    %v784 = vadd.s32 %v783, 72
    %785 = vset.pattern.permute.xlu0 %v784
    %786 = vperm.xlu0 %785, %v775
    %v787 = vpop.permute.xlu0 %786
    %v788 = vperm.slane %v635, 7
    %v789 = vlaneseq
    %v790 = vshrl.u32 %v789, 7
    %v791 = vadd.s32 %v790, 64
    %792 = vset.pattern.permute.xlu0 %v791
    %793 = vperm.xlu0 %792, %v788
    %v794 = vpop.permute.xlu0 %793
    %v795 = vlaneseq
    %v796 = vshrl.u32 %v795, 7
    %v797 = vadd.s32 %v796, 72
    %798 = vset.pattern.permute.xlu0 %v797
    %799 = vperm.xlu0 %798, %v788
    %v800 = vpop.permute.xlu0 %799
    %v801 = vperm.slane %v638, 0
    %v802 = vlaneseq
    %v803 = vshrl.u32 %v802, 7
    %v804 = vadd.s32 %v803, 64
    %805 = vset.pattern.permute.xlu0 %v804
    %806 = vperm.xlu0 %805, %v801
    %v807 = vpop.permute.xlu0 %806
    %v808 = vlaneseq
    %v809 = vshrl.u32 %v808, 7
    %v810 = vadd.s32 %v809, 72
    %811 = vset.pattern.permute.xlu0 %v810
    %812 = vperm.xlu0 %811, %v801
    %v813 = vpop.permute.xlu0 %812
    %v814 = vperm.slane %v638, 1
    %v815 = vlaneseq
    %v816 = vshrl.u32 %v815, 7
    %v817 = vadd.s32 %v816, 64
    %818 = vset.pattern.permute.xlu0 %v817
    %819 = vperm.xlu0 %818, %v814
    %v820 = vpop.permute.xlu0 %819
    %v821 = vlaneseq
    %v822 = vshrl.u32 %v821, 7
    %v823 = vadd.s32 %v822, 72
    %824 = vset.pattern.permute.xlu0 %v823
    %825 = vperm.xlu0 %824, %v814
    %v826 = vpop.permute.xlu0 %825
    %v827 = vperm.slane %v638, 2
    %v828 = vlaneseq
    %v829 = vshrl.u32 %v828, 7
    %v830 = vadd.s32 %v829, 64
    %831 = vset.pattern.permute.xlu0 %v830
    %832 = vperm.xlu0 %831, %v827
    %v833 = vpop.permute.xlu0 %832
    %v834 = vlaneseq
    %v835 = vshrl.u32 %v834, 7
    %v836 = vadd.s32 %v835, 72
    %837 = vset.pattern.permute.xlu0 %v836
    %838 = vperm.xlu0 %837, %v827
    %v839 = vpop.permute.xlu0 %838
    %v840 = vperm.slane %v638, 3
    %v841 = vlaneseq
    %v842 = vshrl.u32 %v841, 7
    %v843 = vadd.s32 %v842, 64
    %844 = vset.pattern.permute.xlu0 %v843
    %845 = vperm.xlu0 %844, %v840
    %v846 = vpop.permute.xlu0 %845
    %v847 = vlaneseq
    %v848 = vshrl.u32 %v847, 7
    %v849 = vadd.s32 %v848, 72
    %850 = vset.pattern.permute.xlu0 %v849
    %851 = vperm.xlu0 %850, %v840
    %v852 = vpop.permute.xlu0 %851
    %v853 = vmul.f32 %v433, %v703
    %v854 = vmul.f32 %v433, %v709
    %v855 = vmul.f32 %v433, %v716
    %v856 = vmul.f32 %v433, %v722
    %v857 = vmul.f32 %v433, %v729
    %v858 = vmul.f32 %v433, %v735
    %v859 = vmul.f32 %v433, %v742
    %v860 = vmul.f32 %v433, %v748
    %v861 = vmul.f32 %v433, %v755
    %v862 = vmul.f32 %v433, %v761
    %v863 = vmul.f32 %v433, %v768
    %v864 = vmul.f32 %v433, %v774
    %v865 = vmul.f32 %v433, %v781
    %v866 = vmul.f32 %v433, %v787
    %v867 = vmul.f32 %v433, %v794
    %v868 = vmul.f32 %v433, %v800
    %v869 = vmul.f32 %v433, %v807
    %v870 = vmul.f32 %v433, %v813
    %v871 = vmul.f32 %v433, %v820
    %v872 = vmul.f32 %v433, %v826
    %v873 = vmul.f32 %v433, %v833
    %v874 = vmul.f32 %v433, %v839
    %v875 = vmul.f32 %v433, %v846
    %v876 = vmul.f32 %v433, %v852
    %v877 = vadd.f32 %v853, 0.0
    %v878 = vadd.f32 %v854, 0.0
    %v879 = vadd.f32 %v855, 0.0
    %v880 = vadd.f32 %v856, 0.0
    %v881 = vadd.f32 %v857, 0.0
    %v882 = vadd.f32 %v858, 0.0
    %v883 = vadd.f32 %v859, 0.0
    %v884 = vadd.f32 %v860, 0.0
    %v885 = vadd.f32 %v861, 0.0
    %v886 = vadd.f32 %v862, 0.0
    %v887 = vadd.f32 %v863, 0.0
    %v888 = vadd.f32 %v864, 0.0
    %v889 = vadd.f32 %v865, 0.0
    %v890 = vadd.f32 %v866, 0.0
    %v891 = vadd.f32 %v867, 0.0
    %v892 = vadd.f32 %v868, 0.0
    %v893 = vadd.f32 %v869, 0.0
    %v894 = vadd.f32 %v870, 0.0
    %v895 = vadd.f32 %v871, 0.0
    %v896 = vadd.f32 %v872, 0.0
    %v897 = vadd.f32 %v873, 0.0
    %v898 = vadd.f32 %v874, 0.0
    %v899 = vadd.f32 %v875, 0.0
    %v900 = vadd.f32 %v876, 0.0
    %v901 = vperm.slane %v638, 4
    %v902 = vlaneseq
    %v903 = vshrl.u32 %v902, 7
    %v904 = vadd.s32 %v903, 64
    %905 = vset.pattern.permute.xlu0 %v904
    %906 = vperm.xlu0 %905, %v901
    %v907 = vpop.permute.xlu0 %906
    %v908 = vlaneseq
    %v909 = vshrl.u32 %v908, 7
    %v910 = vadd.s32 %v909, 72
    %911 = vset.pattern.permute.xlu0 %v910
    %912 = vperm.xlu0 %911, %v901
    %v913 = vpop.permute.xlu0 %912
    %v914 = vperm.slane %v638, 5
    %v915 = vlaneseq
    %v916 = vshrl.u32 %v915, 7
    %v917 = vadd.s32 %v916, 64
    %918 = vset.pattern.permute.xlu0 %v917
    %919 = vperm.xlu0 %918, %v914
    %v920 = vpop.permute.xlu0 %919
    %v921 = vlaneseq
    %v922 = vshrl.u32 %v921, 7
    %v923 = vadd.s32 %v922, 72
    %924 = vset.pattern.permute.xlu0 %v923
    %925 = vperm.xlu0 %924, %v914
    %v926 = vpop.permute.xlu0 %925
    %v927 = vperm.slane %v638, 6
    %v928 = vlaneseq
    %v929 = vshrl.u32 %v928, 7
    %v930 = vadd.s32 %v929, 64
    %931 = vset.pattern.permute.xlu0 %v930
    %932 = vperm.xlu0 %931, %v927
    %v933 = vpop.permute.xlu0 %932
    %v934 = vlaneseq
    %v935 = vshrl.u32 %v934, 7
    %v936 = vadd.s32 %v935, 72
    %937 = vset.pattern.permute.xlu0 %v936
    %938 = vperm.xlu0 %937, %v927
    %v939 = vpop.permute.xlu0 %938
    %v940 = vperm.slane %v638, 7
    %v941 = vlaneseq
    %v942 = vshrl.u32 %v941, 7
    %v943 = vadd.s32 %v942, 64
    %944 = vset.pattern.permute.xlu0 %v943
    %945 = vperm.xlu0 %944, %v940
    %v946 = vpop.permute.xlu0 %945
    %v947 = vlaneseq
    %v948 = vshrl.u32 %v947, 7
    %v949 = vadd.s32 %v948, 72
    %950 = vset.pattern.permute.xlu0 %v949
    %951 = vperm.xlu0 %950, %v940
    %v952 = vpop.permute.xlu0 %951
    %v953 = vperm.slane %v641, 0
    %v954 = vlaneseq
    %v955 = vshrl.u32 %v954, 7
    %v956 = vadd.s32 %v955, 64
    %957 = vset.pattern.permute.xlu0 %v956
    %958 = vperm.xlu0 %957, %v953
    %v959 = vpop.permute.xlu0 %958
    %v960 = vlaneseq
    %v961 = vshrl.u32 %v960, 7
    %v962 = vadd.s32 %v961, 72
    %963 = vset.pattern.permute.xlu0 %v962
    %964 = vperm.xlu0 %963, %v953
    %v965 = vpop.permute.xlu0 %964
    %v966 = vperm.slane %v641, 1
    %v967 = vlaneseq
    %v968 = vshrl.u32 %v967, 7
    %v969 = vadd.s32 %v968, 64
    %970 = vset.pattern.permute.xlu0 %v969
    %971 = vperm.xlu0 %970, %v966
    %v972 = vpop.permute.xlu0 %971
    %v973 = vlaneseq
    %v974 = vshrl.u32 %v973, 7
    %v975 = vadd.s32 %v974, 72
    %976 = vset.pattern.permute.xlu0 %v975
    %977 = vperm.xlu0 %976, %v966
    %v978 = vpop.permute.xlu0 %977
    %v979 = vperm.slane %v641, 2
    %v980 = vlaneseq
    %v981 = vshrl.u32 %v980, 7
    %v982 = vadd.s32 %v981, 64
    %983 = vset.pattern.permute.xlu0 %v982
    %984 = vperm.xlu0 %983, %v979
    %v985 = vpop.permute.xlu0 %984
    %v986 = vlaneseq
    %v987 = vshrl.u32 %v986, 7
    %v988 = vadd.s32 %v987, 72
    %989 = vset.pattern.permute.xlu0 %v988
    %990 = vperm.xlu0 %989, %v979
    %v991 = vpop.permute.xlu0 %990
    %v992 = vperm.slane %v641, 3
    %v993 = vlaneseq
    %v994 = vshrl.u32 %v993, 7
    %v995 = vadd.s32 %v994, 64
    %996 = vset.pattern.permute.xlu0 %v995
    %997 = vperm.xlu0 %996, %v992
    %v998 = vpop.permute.xlu0 %997
    %v999 = vlaneseq
    %v1000 = vshrl.u32 %v999, 7
    %v1001 = vadd.s32 %v1000, 72
    %1002 = vset.pattern.permute.xlu0 %v1001
    %1003 = vperm.xlu0 %1002, %v992
    %v1004 = vpop.permute.xlu0 %1003
    %v1005 = vperm.slane %v641, 4
    %v1006 = vlaneseq
    %v1007 = vshrl.u32 %v1006, 7
    %v1008 = vadd.s32 %v1007, 64
    %1009 = vset.pattern.permute.xlu0 %v1008
    %1010 = vperm.xlu0 %1009, %v1005
    %v1011 = vpop.permute.xlu0 %1010
    %v1012 = vlaneseq
    %v1013 = vshrl.u32 %v1012, 7
    %v1014 = vadd.s32 %v1013, 72
    %1015 = vset.pattern.permute.xlu0 %v1014
    %1016 = vperm.xlu0 %1015, %v1005
    %v1017 = vpop.permute.xlu0 %1016
    %v1018 = vperm.slane %v641, 5
    %v1019 = vlaneseq
    %v1020 = vshrl.u32 %v1019, 7
    %v1021 = vadd.s32 %v1020, 64
    %1022 = vset.pattern.permute.xlu0 %v1021
    %1023 = vperm.xlu0 %1022, %v1018
    %v1024 = vpop.permute.xlu0 %1023
    %v1025 = vlaneseq
    %v1026 = vshrl.u32 %v1025, 7
    %v1027 = vadd.s32 %v1026, 72
    %1028 = vset.pattern.permute.xlu0 %v1027
    %1029 = vperm.xlu0 %1028, %v1018
    %v1030 = vpop.permute.xlu0 %1029
    %v1031 = vperm.slane %v641, 6
    %v1032 = vlaneseq
    %v1033 = vshrl.u32 %v1032, 7
    %v1034 = vadd.s32 %v1033, 64
    %1035 = vset.pattern.permute.xlu0 %v1034
    %1036 = vperm.xlu0 %1035, %v1031
    %v1037 = vpop.permute.xlu0 %1036
    %v1038 = vlaneseq
    %v1039 = vshrl.u32 %v1038, 7
    %v1040 = vadd.s32 %v1039, 72
    %1041 = vset.pattern.permute.xlu0 %v1040
    %1042 = vperm.xlu0 %1041, %v1031
    %v1043 = vpop.permute.xlu0 %1042
    %v1044 = vperm.slane %v641, 7
    %v1045 = vlaneseq
    %v1046 = vshrl.u32 %v1045, 7
    %v1047 = vadd.s32 %v1046, 64
    %1048 = vset.pattern.permute.xlu0 %v1047
    %1049 = vperm.xlu0 %1048, %v1044
    %v1050 = vpop.permute.xlu0 %1049
    %v1051 = vlaneseq
    %v1052 = vshrl.u32 %v1051, 7
    %v1053 = vadd.s32 %v1052, 72
    %1054 = vset.pattern.permute.xlu0 %v1053
    %1055 = vperm.xlu0 %1054, %v1044
    %v1056 = vpop.permute.xlu0 %1055
    %v1057 = vmul.f32 %v438, %v907
    %v1058 = vmul.f32 %v438, %v913
    %v1059 = vmul.f32 %v438, %v920
    %v1060 = vmul.f32 %v438, %v926
    %v1061 = vmul.f32 %v438, %v933
    %v1062 = vmul.f32 %v438, %v939
    %v1063 = vmul.f32 %v438, %v946
    %v1064 = vmul.f32 %v438, %v952
    %v1065 = vmul.f32 %v438, %v959
    %v1066 = vmul.f32 %v438, %v965
    %v1067 = vmul.f32 %v438, %v972
    %v1068 = vmul.f32 %v438, %v978
    %v1069 = vmul.f32 %v438, %v985
    %v1070 = vmul.f32 %v438, %v991
    %v1071 = vmul.f32 %v438, %v998
    %v1072 = vmul.f32 %v438, %v1004
    %v1073 = vmul.f32 %v438, %v1011
    %v1074 = vmul.f32 %v438, %v1017
    %v1075 = vmul.f32 %v438, %v1024
    %v1076 = vmul.f32 %v438, %v1030
    %v1077 = vmul.f32 %v438, %v1037
    %v1078 = vmul.f32 %v438, %v1043
    %v1079 = vmul.f32 %v438, %v1050
    %v1080 = vmul.f32 %v438, %v1056
    %v1081 = vadd.f32 %v877, %v1057
    %v1082 = vadd.f32 %v878, %v1058
    %v1083 = vadd.f32 %v879, %v1059
    %v1084 = vadd.f32 %v880, %v1060
    %v1085 = vadd.f32 %v881, %v1061
    %v1086 = vadd.f32 %v882, %v1062
    %v1087 = vadd.f32 %v883, %v1063
    %v1088 = vadd.f32 %v884, %v1064
    %v1089 = vadd.f32 %v885, %v1065
    %v1090 = vadd.f32 %v886, %v1066
    %v1091 = vadd.f32 %v887, %v1067
    %v1092 = vadd.f32 %v888, %v1068
    %v1093 = vadd.f32 %v889, %v1069
    %v1094 = vadd.f32 %v890, %v1070
    %v1095 = vadd.f32 %v891, %v1071
    %v1096 = vadd.f32 %v892, %v1072
    %v1097 = vadd.f32 %v893, %v1073
    %v1098 = vadd.f32 %v894, %v1074
    %v1099 = vadd.f32 %v895, %v1075
    %v1100 = vadd.f32 %v896, %v1076
    %v1101 = vadd.f32 %v897, %v1077
    %v1102 = vadd.f32 %v898, %v1078
    %v1103 = vadd.f32 %v899, %v1079
    %v1104 = vadd.f32 %v900, %v1080
    %v1107 = vrot.slane %v695, 1
    %v1108 = vrot.slane %v695, 2
    %v1109 = vrot.slane %v695, 3
    %v1110 = vrot.slane %v695, 4
    %v1111 = vrot.slane %v695, 5
    %v1112 = vrot.slane %v695, 6
    %v1113 = vrot.slane %v695, 7
    %v1114 = vrot.slane %v696, 1
    %v1115 = vrot.slane %v696, 2
    %v1116 = vrot.slane %v696, 3
    %v1117 = vperm.slane %v695, 0
    %v1118 = vperm.slane %v1107, 0
    %v1119 = vperm.slane %v1108, 0
    %v1120 = vperm.slane %v1109, 0
    %v1121 = vperm.slane %v1110, 0
    %v1122 = vperm.slane %v1111, 0
    %v1123 = vperm.slane %v1112, 0
    %v1124 = vperm.slane %v1113, 0
    %v1125 = vperm.slane %v696, 0
    %v1126 = vperm.slane %v1114, 0
    %v1127 = vperm.slane %v1115, 0
    %v1128 = vperm.slane %v1116, 0
    %v1141 = vmul.f32 %v1117, %v454
    %v1142 = vmul.f32 %v1117, %v455
    %v1143 = vmul.f32 %v1118, %v454
    %v1144 = vmul.f32 %v1118, %v455
    %v1145 = vmul.f32 %v1119, %v454
    %v1146 = vmul.f32 %v1119, %v455
    %v1147 = vmul.f32 %v1120, %v454
    %v1148 = vmul.f32 %v1120, %v455
    %v1149 = vmul.f32 %v1121, %v454
    %v1150 = vmul.f32 %v1121, %v455
    %v1151 = vmul.f32 %v1122, %v454
    %v1152 = vmul.f32 %v1122, %v455
    %v1153 = vmul.f32 %v1123, %v454
    %v1154 = vmul.f32 %v1123, %v455
    %v1155 = vmul.f32 %v1124, %v454
    %v1156 = vmul.f32 %v1124, %v455
    %v1157 = vmul.f32 %v1125, %v454
    %v1158 = vmul.f32 %v1125, %v455
    %v1159 = vmul.f32 %v1126, %v454
    %v1160 = vmul.f32 %v1126, %v455
    %v1161 = vmul.f32 %v1127, %v454
    %v1162 = vmul.f32 %v1127, %v455
    %v1163 = vmul.f32 %v1128, %v454
    %v1164 = vmul.f32 %v1128, %v455
    %v1165 = vmul.f32 %v1141, 1.442695
    %v1166 = vpow.pop %v1165
    %v1167 = vmul.f32 %v1142, 1.442695
    %v1168 = vpow.pop %v1167
    %v1169 = vmul.f32 %v1143, 1.442695
    %v1170 = vpow.pop %v1169
    %v1171 = vmul.f32 %v1144, 1.442695
    %v1172 = vpow.pop %v1171
    %v1173 = vmul.f32 %v1145, 1.442695
    %v1174 = vpow.pop %v1173
    %v1175 = vmul.f32 %v1146, 1.442695
    %v1176 = vpow.pop %v1175
    %v1177 = vmul.f32 %v1147, 1.442695
    %v1178 = vpow.pop %v1177
    %v1179 = vmul.f32 %v1148, 1.442695
    %v1180 = vpow.pop %v1179
    %v1181 = vmul.f32 %v1149, 1.442695
    %v1182 = vpow.pop %v1181
    %v1183 = vmul.f32 %v1150, 1.442695
    %v1184 = vpow.pop %v1183
    %v1185 = vmul.f32 %v1151, 1.442695
    %v1186 = vpow.pop %v1185
    %v1187 = vmul.f32 %v1152, 1.442695
    %v1188 = vpow.pop %v1187
    %v1189 = vmul.f32 %v1153, 1.442695
    %v1190 = vpow.pop %v1189
    %v1191 = vmul.f32 %v1154, 1.442695
    %v1192 = vpow.pop %v1191
    %v1193 = vmul.f32 %v1155, 1.442695
    %v1194 = vpow.pop %v1193
    %v1195 = vmul.f32 %v1156, 1.442695
    %v1196 = vpow.pop %v1195
    %v1197 = vmul.f32 %v1157, 1.442695
    %v1198 = vpow.pop %v1197
    %v1199 = vmul.f32 %v1158, 1.442695
    %v1200 = vpow.pop %v1199
    %v1201 = vmul.f32 %v1159, 1.442695
    %v1202 = vpow.pop %v1201
    %v1203 = vmul.f32 %v1160, 1.442695
    %v1204 = vpow.pop %v1203
    %v1205 = vmul.f32 %v1161, 1.442695
    %v1206 = vpow.pop %v1205
    %v1207 = vmul.f32 %v1162, 1.442695
    %v1208 = vpow.pop %v1207
    %v1209 = vmul.f32 %v1163, 1.442695
    %v1210 = vpow.pop %v1209
    %v1211 = vmul.f32 %v1164, 1.442695
    %v1212 = vpow.pop %v1211
    %v1213 = vmul.f32 %v695, %v597
    %v1214 = vmul.f32 %v696, %v598
    %v1217 = vrot.slane %v1213, 1
    %v1218 = vrot.slane %v1213, 2
    %v1219 = vrot.slane %v1213, 3
    %v1220 = vrot.slane %v1213, 4
    %v1221 = vrot.slane %v1213, 5
    %v1222 = vrot.slane %v1213, 6
    %v1223 = vrot.slane %v1213, 7
    %v1224 = vrot.slane %v1214, 1
    %v1225 = vrot.slane %v1214, 2
    %v1226 = vrot.slane %v1214, 3
    %v1227 = vperm.slane %v1213, 0
    %v1228 = vperm.slane %v1217, 0
    %v1229 = vperm.slane %v1218, 0
    %v1230 = vperm.slane %v1219, 0
    %v1231 = vperm.slane %v1220, 0
    %v1232 = vperm.slane %v1221, 0
    %v1233 = vperm.slane %v1222, 0
    %v1234 = vperm.slane %v1223, 0
    %v1235 = vperm.slane %v1214, 0
    %v1236 = vperm.slane %v1224, 0
    %v1237 = vperm.slane %v1225, 0
    %v1238 = vperm.slane %v1226, 0
    %v1251 = vmul.f32 %v1227, %v1081
    %v1252 = vmul.f32 %v1227, %v1082
    %v1253 = vmul.f32 %v1228, %v1083
    %v1254 = vmul.f32 %v1228, %v1084
    %v1255 = vmul.f32 %v1229, %v1085
    %v1256 = vmul.f32 %v1229, %v1086
    %v1257 = vmul.f32 %v1230, %v1087
    %v1258 = vmul.f32 %v1230, %v1088
    %v1259 = vmul.f32 %v1231, %v1089
    %v1260 = vmul.f32 %v1231, %v1090
    %v1261 = vmul.f32 %v1232, %v1091
    %v1262 = vmul.f32 %v1232, %v1092
    %v1263 = vmul.f32 %v1233, %v1093
    %v1264 = vmul.f32 %v1233, %v1094
    %v1265 = vmul.f32 %v1234, %v1095
    %v1266 = vmul.f32 %v1234, %v1096
    %v1267 = vmul.f32 %v1235, %v1097
    %v1268 = vmul.f32 %v1235, %v1098
    %v1269 = vmul.f32 %v1236, %v1099
    %v1270 = vmul.f32 %v1236, %v1100
    %v1271 = vmul.f32 %v1237, %v1101
    %v1272 = vmul.f32 %v1237, %v1102
    %v1273 = vmul.f32 %v1238, %v1103
    %v1274 = vmul.f32 %v1238, %v1104
    %v1275 = vmul.f32 %v1166, 0.0
    %v1276 = vmul.f32 %v1168, 0.0
    %v1277 = vadd.f32 %v1275, %v1251
    %v1278 = vadd.f32 %v1276, %v1252
    %1279 = vst [vmem:[#allocation2] sm:$0xff] %v1277
    %1280 = vst [vmem:[#allocation2 + $0x8] sm:$0xff] %v1278
    %v1281 = vmul.f32 %v1277, %v1170
    %v1282 = vmul.f32 %v1278, %v1172
    %v1283 = vadd.f32 %v1281, %v1253
    %v1284 = vadd.f32 %v1282, %v1254
    %s1285 = scalar_lea.vmem [#allocation2], 16
    %1286 = vst [vmem:[%s1285] sm:$0xff] %v1283
    %1287 = vst [vmem:[%s1285 + $0x8] sm:$0xff] %v1284
    %v1288 = vmul.f32 %v1283, %v1174
    %v1289 = vmul.f32 %v1284, %v1176
    %v1290 = vadd.f32 %v1288, %v1255
    %v1291 = vadd.f32 %v1289, %v1256
    %s1292 = scalar_lea.vmem [#allocation2], 32
    %1293 = vst [vmem:[%s1292] sm:$0xff] %v1290
    %1294 = vst [vmem:[%s1292 + $0x8] sm:$0xff] %v1291
    %v1295 = vmul.f32 %v1290, %v1178
    %v1296 = vmul.f32 %v1291, %v1180
    %v1297 = vadd.f32 %v1295, %v1257
    %v1298 = vadd.f32 %v1296, %v1258
    %s1299 = scalar_lea.vmem [#allocation2], 48
    %1300 = vst [vmem:[%s1299] sm:$0xff] %v1297
    %1301 = vst [vmem:[%s1299 + $0x8] sm:$0xff] %v1298
    %v1302 = vmul.f32 %v1297, %v1182
    %v1303 = vmul.f32 %v1298, %v1184
    %v1304 = vadd.f32 %v1302, %v1259
    %v1305 = vadd.f32 %v1303, %v1260
    %s1306 = scalar_lea.vmem [#allocation2], 64
    %1307 = vst [vmem:[%s1306] sm:$0xff] %v1304
    %1308 = vst [vmem:[%s1306 + $0x8] sm:$0xff] %v1305
    %v1309 = vmul.f32 %v1304, %v1186
    %v1310 = vmul.f32 %v1305, %v1188
    %v1311 = vadd.f32 %v1309, %v1261
    %v1312 = vadd.f32 %v1310, %v1262
    %s1313 = scalar_lea.vmem [#allocation2], 80
    %1314 = vst [vmem:[%s1313] sm:$0xff] %v1311
    %1315 = vst [vmem:[%s1313 + $0x8] sm:$0xff] %v1312
    %v1316 = vmul.f32 %v1311, %v1190
    %v1317 = vmul.f32 %v1312, %v1192
    %v1318 = vadd.f32 %v1316, %v1263
    %v1319 = vadd.f32 %v1317, %v1264
    %s1320 = scalar_lea.vmem [#allocation2], 96
    %1321 = vst [vmem:[%s1320] sm:$0xff] %v1318
    %1322 = vst [vmem:[%s1320 + $0x8] sm:$0xff] %v1319
    %v1323 = vmul.f32 %v1318, %v1194
    %v1324 = vmul.f32 %v1319, %v1196
    %v1325 = vadd.f32 %v1323, %v1265
    %v1326 = vadd.f32 %v1324, %v1266
    %s1327 = scalar_lea.vmem [#allocation2], 112
    %1328 = vst [vmem:[%s1327] sm:$0xff] %v1325
    %1329 = vst [vmem:[%s1327 + $0x8] sm:$0xff] %v1326
    %v1330 = vmul.f32 %v1325, %v1198
    %v1331 = vmul.f32 %v1326, %v1200
    %v1332 = vadd.f32 %v1330, %v1267
    %v1333 = vadd.f32 %v1331, %v1268
    %s1334 = scalar_lea.vmem [#allocation2], 128
    %1335 = vst [vmem:[%s1334] sm:$0xff] %v1332
    %1336 = vst [vmem:[%s1334 + $0x8] sm:$0xff] %v1333
    %v1337 = vmul.f32 %v1332, %v1202
    %v1338 = vmul.f32 %v1333, %v1204
    %v1339 = vadd.f32 %v1337, %v1269
    %v1340 = vadd.f32 %v1338, %v1270
    %s1341 = scalar_lea.vmem [#allocation2], 144
    %1342 = vst [vmem:[%s1341] sm:$0xff] %v1339
    %1343 = vst [vmem:[%s1341 + $0x8] sm:$0xff] %v1340
    %v1344 = vmul.f32 %v1339, %v1206
    %v1345 = vmul.f32 %v1340, %v1208
    %v1346 = vadd.f32 %v1344, %v1271
    %v1347 = vadd.f32 %v1345, %v1272
    %s1348 = scalar_lea.vmem [#allocation2], 160
    %1349 = vst [vmem:[%s1348] sm:$0xff] %v1346
    %1350 = vst [vmem:[%s1348 + $0x8] sm:$0xff] %v1347
    %v1351 = vmul.f32 %v1346, %v1210
    %v1352 = vmul.f32 %v1347, %v1212
    %v1353 = vadd.f32 %v1351, %v1273
    %v1354 = vadd.f32 %v1352, %v1274
    %s1355 = scalar_lea.vmem [#allocation2], 176
    %1356 = vst [vmem:[%s1355] sm:$0xff] %v1353
    %1357 = vst [vmem:[%s1355 + $0x8] sm:$0xff] %v1354
    %v1358 = vlaneseq
    %v1359 = vshrl.u32 %v1358, 7
    %v1360 = vadd.s32 %v1359, 80
    %1361 = vset.pattern.permute.xlu0 %v1360
    %1362 = vperm.xlu0 %1361, %v697
    %v1363 = vpop.permute.xlu0 %1362
    %v1364 = vlaneseq
    %v1365 = vshrl.u32 %v1364, 7
    %v1366 = vadd.s32 %v1365, 88
    %1367 = vset.pattern.permute.xlu0 %v1366
    %1368 = vperm.xlu0 %1367, %v697
    %v1369 = vpop.permute.xlu0 %1368
    %v1370 = vlaneseq
    %v1371 = vshrl.u32 %v1370, 7
    %v1372 = vadd.s32 %v1371, 80
    %1373 = vset.pattern.permute.xlu0 %v1372
    %1374 = vperm.xlu0 %1373, %v710
    %v1375 = vpop.permute.xlu0 %1374
    %v1376 = vlaneseq
    %v1377 = vshrl.u32 %v1376, 7
    %v1378 = vadd.s32 %v1377, 88
    %1379 = vset.pattern.permute.xlu0 %v1378
    %1380 = vperm.xlu0 %1379, %v710
    %v1381 = vpop.permute.xlu0 %1380
    %v1382 = vlaneseq
    %v1383 = vshrl.u32 %v1382, 7
    %v1384 = vadd.s32 %v1383, 80
    %1385 = vset.pattern.permute.xlu0 %v1384
    %1386 = vperm.xlu0 %1385, %v723
    %v1387 = vpop.permute.xlu0 %1386
    %v1388 = vlaneseq
    %v1389 = vshrl.u32 %v1388, 7
    %v1390 = vadd.s32 %v1389, 88
    %1391 = vset.pattern.permute.xlu0 %v1390
    %1392 = vperm.xlu0 %1391, %v723
    %v1393 = vpop.permute.xlu0 %1392
    %v1394 = vlaneseq
    %v1395 = vshrl.u32 %v1394, 7
    %v1396 = vadd.s32 %v1395, 80
    %1397 = vset.pattern.permute.xlu0 %v1396
    %1398 = vperm.xlu0 %1397, %v736
    %v1399 = vpop.permute.xlu0 %1398
    %v1400 = vlaneseq
    %v1401 = vshrl.u32 %v1400, 7
    %v1402 = vadd.s32 %v1401, 88
    %1403 = vset.pattern.permute.xlu0 %v1402
    %1404 = vperm.xlu0 %1403, %v736
    %v1405 = vpop.permute.xlu0 %1404
    %v1406 = vlaneseq
    %v1407 = vshrl.u32 %v1406, 7
    %v1408 = vadd.s32 %v1407, 80
    %1409 = vset.pattern.permute.xlu0 %v1408
    %1410 = vperm.xlu0 %1409, %v749
    %v1411 = vpop.permute.xlu0 %1410
    %v1412 = vlaneseq
    %v1413 = vshrl.u32 %v1412, 7
    %v1414 = vadd.s32 %v1413, 88
    %1415 = vset.pattern.permute.xlu0 %v1414
    %1416 = vperm.xlu0 %1415, %v749
    %v1417 = vpop.permute.xlu0 %1416
    %v1418 = vlaneseq
    %v1419 = vshrl.u32 %v1418, 7
    %v1420 = vadd.s32 %v1419, 80
    %1421 = vset.pattern.permute.xlu0 %v1420
    %1422 = vperm.xlu0 %1421, %v762
    %v1423 = vpop.permute.xlu0 %1422
    %v1424 = vlaneseq
    %v1425 = vshrl.u32 %v1424, 7
    %v1426 = vadd.s32 %v1425, 88
    %1427 = vset.pattern.permute.xlu0 %v1426
    %1428 = vperm.xlu0 %1427, %v762
    %v1429 = vpop.permute.xlu0 %1428
    %v1430 = vlaneseq
    %v1431 = vshrl.u32 %v1430, 7
    %v1432 = vadd.s32 %v1431, 80
    %1433 = vset.pattern.permute.xlu0 %v1432
    %1434 = vperm.xlu0 %1433, %v775
    %v1435 = vpop.permute.xlu0 %1434
    %v1436 = vlaneseq
    %v1437 = vshrl.u32 %v1436, 7
    %v1438 = vadd.s32 %v1437, 88
    %1439 = vset.pattern.permute.xlu0 %v1438
    %1440 = vperm.xlu0 %1439, %v775
    %v1441 = vpop.permute.xlu0 %1440
    %v1442 = vlaneseq
    %v1443 = vshrl.u32 %v1442, 7
    %v1444 = vadd.s32 %v1443, 80
    %1445 = vset.pattern.permute.xlu0 %v1444
    %1446 = vperm.xlu0 %1445, %v788
    %v1447 = vpop.permute.xlu0 %1446
    %v1448 = vlaneseq
    %v1449 = vshrl.u32 %v1448, 7
    %v1450 = vadd.s32 %v1449, 88
    %1451 = vset.pattern.permute.xlu0 %v1450
    %1452 = vperm.xlu0 %1451, %v788
    %v1453 = vpop.permute.xlu0 %1452
    %v1454 = vlaneseq
    %v1455 = vshrl.u32 %v1454, 7
    %v1456 = vadd.s32 %v1455, 80
    %1457 = vset.pattern.permute.xlu0 %v1456
    %1458 = vperm.xlu0 %1457, %v801
    %v1459 = vpop.permute.xlu0 %1458
    %v1460 = vlaneseq
    %v1461 = vshrl.u32 %v1460, 7
    %v1462 = vadd.s32 %v1461, 88
    %1463 = vset.pattern.permute.xlu0 %v1462
    %1464 = vperm.xlu0 %1463, %v801
    %v1465 = vpop.permute.xlu0 %1464
    %v1466 = vlaneseq
    %v1467 = vshrl.u32 %v1466, 7
    %v1468 = vadd.s32 %v1467, 80
    %1469 = vset.pattern.permute.xlu0 %v1468
    %1470 = vperm.xlu0 %1469, %v814
    %v1471 = vpop.permute.xlu0 %1470
    %v1472 = vlaneseq
    %v1473 = vshrl.u32 %v1472, 7
    %v1474 = vadd.s32 %v1473, 88
    %1475 = vset.pattern.permute.xlu0 %v1474
    %1476 = vperm.xlu0 %1475, %v814
    %v1477 = vpop.permute.xlu0 %1476
    %v1478 = vlaneseq
    %v1479 = vshrl.u32 %v1478, 7
    %v1480 = vadd.s32 %v1479, 80
    %1481 = vset.pattern.permute.xlu0 %v1480
    %1482 = vperm.xlu0 %1481, %v827
    %v1483 = vpop.permute.xlu0 %1482
    %v1484 = vlaneseq
    %v1485 = vshrl.u32 %v1484, 7
    %v1486 = vadd.s32 %v1485, 88
    %1487 = vset.pattern.permute.xlu0 %v1486
    %1488 = vperm.xlu0 %1487, %v827
    %v1489 = vpop.permute.xlu0 %1488
    %v1490 = vlaneseq
    %v1491 = vshrl.u32 %v1490, 7
    %v1492 = vadd.s32 %v1491, 80
    %1493 = vset.pattern.permute.xlu0 %v1492
    %1494 = vperm.xlu0 %1493, %v840
    %v1495 = vpop.permute.xlu0 %1494
    %v1496 = vlaneseq
    %v1497 = vshrl.u32 %v1496, 7
    %v1498 = vadd.s32 %v1497, 88
    %1499 = vset.pattern.permute.xlu0 %v1498
    %1500 = vperm.xlu0 %1499, %v840
    %v1501 = vpop.permute.xlu0 %1500
    %v1502 = vmul.f32 %v433, %v1363
    %v1503 = vmul.f32 %v433, %v1369
    %v1504 = vmul.f32 %v433, %v1375
    %v1505 = vmul.f32 %v433, %v1381
    %v1506 = vmul.f32 %v433, %v1387
    %v1507 = vmul.f32 %v433, %v1393
    %v1508 = vmul.f32 %v433, %v1399
    %v1509 = vmul.f32 %v433, %v1405
    %v1510 = vmul.f32 %v433, %v1411
    %v1511 = vmul.f32 %v433, %v1417
    %v1512 = vmul.f32 %v433, %v1423
    %v1513 = vmul.f32 %v433, %v1429
    %v1514 = vmul.f32 %v433, %v1435
    %v1515 = vmul.f32 %v433, %v1441
    %v1516 = vmul.f32 %v433, %v1447
    %v1517 = vmul.f32 %v433, %v1453
    %v1518 = vmul.f32 %v433, %v1459
    %v1519 = vmul.f32 %v433, %v1465
    %v1520 = vmul.f32 %v433, %v1471
    %v1521 = vmul.f32 %v433, %v1477
    %v1522 = vmul.f32 %v433, %v1483
    %v1523 = vmul.f32 %v433, %v1489
    %v1524 = vmul.f32 %v433, %v1495
    %v1525 = vmul.f32 %v433, %v1501
    %v1526 = vadd.f32 %v1502, 0.0
    %v1527 = vadd.f32 %v1503, 0.0
    %v1528 = vadd.f32 %v1504, 0.0
    %v1529 = vadd.f32 %v1505, 0.0
    %v1530 = vadd.f32 %v1506, 0.0
    %v1531 = vadd.f32 %v1507, 0.0
    %v1532 = vadd.f32 %v1508, 0.0
    %v1533 = vadd.f32 %v1509, 0.0
    %v1534 = vadd.f32 %v1510, 0.0
    %v1535 = vadd.f32 %v1511, 0.0
    %v1536 = vadd.f32 %v1512, 0.0
    %v1537 = vadd.f32 %v1513, 0.0
    %v1538 = vadd.f32 %v1514, 0.0
    %v1539 = vadd.f32 %v1515, 0.0
    %v1540 = vadd.f32 %v1516, 0.0
    %v1541 = vadd.f32 %v1517, 0.0
    %v1542 = vadd.f32 %v1518, 0.0
    %v1543 = vadd.f32 %v1519, 0.0
    %v1544 = vadd.f32 %v1520, 0.0
    %v1545 = vadd.f32 %v1521, 0.0
    %v1546 = vadd.f32 %v1522, 0.0
    %v1547 = vadd.f32 %v1523, 0.0
    %v1548 = vadd.f32 %v1524, 0.0
    %v1549 = vadd.f32 %v1525, 0.0
    %v1550 = vlaneseq
    %v1551 = vshrl.u32 %v1550, 7
    %v1552 = vadd.s32 %v1551, 80
    %1553 = vset.pattern.permute.xlu0 %v1552
    %1554 = vperm.xlu0 %1553, %v901
    %v1555 = vpop.permute.xlu0 %1554
    %v1556 = vlaneseq
    %v1557 = vshrl.u32 %v1556, 7
    %v1558 = vadd.s32 %v1557, 88
    %1559 = vset.pattern.permute.xlu0 %v1558
    %1560 = vperm.xlu0 %1559, %v901
    %v1561 = vpop.permute.xlu0 %1560
    %v1562 = vlaneseq
    %v1563 = vshrl.u32 %v1562, 7
    %v1564 = vadd.s32 %v1563, 80
    %1565 = vset.pattern.permute.xlu0 %v1564
    %1566 = vperm.xlu0 %1565, %v914
    %v1567 = vpop.permute.xlu0 %1566
    %v1568 = vlaneseq
    %v1569 = vshrl.u32 %v1568, 7
    %v1570 = vadd.s32 %v1569, 88
    %1571 = vset.pattern.permute.xlu0 %v1570
    %1572 = vperm.xlu0 %1571, %v914
    %v1573 = vpop.permute.xlu0 %1572
    %v1574 = vlaneseq
    %v1575 = vshrl.u32 %v1574, 7
    %v1576 = vadd.s32 %v1575, 80
    %1577 = vset.pattern.permute.xlu0 %v1576
    %1578 = vperm.xlu0 %1577, %v927
    %v1579 = vpop.permute.xlu0 %1578
    %v1580 = vlaneseq
    %v1581 = vshrl.u32 %v1580, 7
    %v1582 = vadd.s32 %v1581, 88
    %1583 = vset.pattern.permute.xlu0 %v1582
    %1584 = vperm.xlu0 %1583, %v927
    %v1585 = vpop.permute.xlu0 %1584
    %v1586 = vlaneseq
    %v1587 = vshrl.u32 %v1586, 7
    %v1588 = vadd.s32 %v1587, 80
    %1589 = vset.pattern.permute.xlu0 %v1588
    %1590 = vperm.xlu0 %1589, %v940
    %v1591 = vpop.permute.xlu0 %1590
    %v1592 = vlaneseq
    %v1593 = vshrl.u32 %v1592, 7
    %v1594 = vadd.s32 %v1593, 88
    %1595 = vset.pattern.permute.xlu0 %v1594
    %1596 = vperm.xlu0 %1595, %v940
    %v1597 = vpop.permute.xlu0 %1596
    %v1598 = vlaneseq
    %v1599 = vshrl.u32 %v1598, 7
    %v1600 = vadd.s32 %v1599, 80
    %1601 = vset.pattern.permute.xlu0 %v1600
    %1602 = vperm.xlu0 %1601, %v953
    %v1603 = vpop.permute.xlu0 %1602
    %v1604 = vlaneseq
    %v1605 = vshrl.u32 %v1604, 7
    %v1606 = vadd.s32 %v1605, 88
    %1607 = vset.pattern.permute.xlu0 %v1606
    %1608 = vperm.xlu0 %1607, %v953
    %v1609 = vpop.permute.xlu0 %1608
    %v1610 = vlaneseq
    %v1611 = vshrl.u32 %v1610, 7
    %v1612 = vadd.s32 %v1611, 80
    %1613 = vset.pattern.permute.xlu0 %v1612
    %1614 = vperm.xlu0 %1613, %v966
    %v1615 = vpop.permute.xlu0 %1614
    %v1616 = vlaneseq
    %v1617 = vshrl.u32 %v1616, 7
    %v1618 = vadd.s32 %v1617, 88
    %1619 = vset.pattern.permute.xlu0 %v1618
    %1620 = vperm.xlu0 %1619, %v966
    %v1621 = vpop.permute.xlu0 %1620
    %v1622 = vlaneseq
    %v1623 = vshrl.u32 %v1622, 7
    %v1624 = vadd.s32 %v1623, 80
    %1625 = vset.pattern.permute.xlu0 %v1624
    %1626 = vperm.xlu0 %1625, %v979
    %v1627 = vpop.permute.xlu0 %1626
    %v1628 = vlaneseq
    %v1629 = vshrl.u32 %v1628, 7
    %v1630 = vadd.s32 %v1629, 88
    %1631 = vset.pattern.permute.xlu0 %v1630
    %1632 = vperm.xlu0 %1631, %v979
    %v1633 = vpop.permute.xlu0 %1632
    %v1634 = vlaneseq
    %v1635 = vshrl.u32 %v1634, 7
    %v1636 = vadd.s32 %v1635, 80
    %1637 = vset.pattern.permute.xlu0 %v1636
    %1638 = vperm.xlu0 %1637, %v992
    %v1639 = vpop.permute.xlu0 %1638
    %v1640 = vlaneseq
    %v1641 = vshrl.u32 %v1640, 7
    %v1642 = vadd.s32 %v1641, 88
    %1643 = vset.pattern.permute.xlu0 %v1642
    %1644 = vperm.xlu0 %1643, %v992
    %v1645 = vpop.permute.xlu0 %1644
    %v1646 = vlaneseq
    %v1647 = vshrl.u32 %v1646, 7
    %v1648 = vadd.s32 %v1647, 80
    %1649 = vset.pattern.permute.xlu0 %v1648
    %1650 = vperm.xlu0 %1649, %v1005
    %v1651 = vpop.permute.xlu0 %1650
    %v1652 = vlaneseq
    %v1653 = vshrl.u32 %v1652, 7
    %v1654 = vadd.s32 %v1653, 88
    %1655 = vset.pattern.permute.xlu0 %v1654
    %1656 = vperm.xlu0 %1655, %v1005
    %v1657 = vpop.permute.xlu0 %1656
    %v1658 = vlaneseq
    %v1659 = vshrl.u32 %v1658, 7
    %v1660 = vadd.s32 %v1659, 80
    %1661 = vset.pattern.permute.xlu0 %v1660
    %1662 = vperm.xlu0 %1661, %v1018
    %v1663 = vpop.permute.xlu0 %1662
    %v1664 = vlaneseq
    %v1665 = vshrl.u32 %v1664, 7
    %v1666 = vadd.s32 %v1665, 88
    %1667 = vset.pattern.permute.xlu0 %v1666
    %1668 = vperm.xlu0 %1667, %v1018
    %v1669 = vpop.permute.xlu0 %1668
    %v1670 = vlaneseq
    %v1671 = vshrl.u32 %v1670, 7
    %v1672 = vadd.s32 %v1671, 80
    %1673 = vset.pattern.permute.xlu0 %v1672
    %1674 = vperm.xlu0 %1673, %v1031
    %v1675 = vpop.permute.xlu0 %1674
    %v1676 = vlaneseq
    %v1677 = vshrl.u32 %v1676, 7
    %v1678 = vadd.s32 %v1677, 88
    %1679 = vset.pattern.permute.xlu0 %v1678
    %1680 = vperm.xlu0 %1679, %v1031
    %v1681 = vpop.permute.xlu0 %1680
    %v1682 = vlaneseq
    %v1683 = vshrl.u32 %v1682, 7
    %v1684 = vadd.s32 %v1683, 80
    %1685 = vset.pattern.permute.xlu0 %v1684
    %1686 = vperm.xlu0 %1685, %v1044
    %v1687 = vpop.permute.xlu0 %1686
    %v1688 = vlaneseq
    %v1689 = vshrl.u32 %v1688, 7
    %v1690 = vadd.s32 %v1689, 88
    %1691 = vset.pattern.permute.xlu0 %v1690
    %1692 = vperm.xlu0 %1691, %v1044
    %v1693 = vpop.permute.xlu0 %1692
    %v1694 = vmul.f32 %v438, %v1555
    %v1695 = vmul.f32 %v438, %v1561
    %v1696 = vmul.f32 %v438, %v1567
    %v1697 = vmul.f32 %v438, %v1573
    %v1698 = vmul.f32 %v438, %v1579
    %v1699 = vmul.f32 %v438, %v1585
    %v1700 = vmul.f32 %v438, %v1591
    %v1701 = vmul.f32 %v438, %v1597
    %v1702 = vmul.f32 %v438, %v1603
    %v1703 = vmul.f32 %v438, %v1609
    %v1704 = vmul.f32 %v438, %v1615
    %v1705 = vmul.f32 %v438, %v1621
    %v1706 = vmul.f32 %v438, %v1627
    %v1707 = vmul.f32 %v438, %v1633
    %v1708 = vmul.f32 %v438, %v1639
    %v1709 = vmul.f32 %v438, %v1645
    %v1710 = vmul.f32 %v438, %v1651
    %v1711 = vmul.f32 %v438, %v1657
    %v1712 = vmul.f32 %v438, %v1663
    %v1713 = vmul.f32 %v438, %v1669
    %v1714 = vmul.f32 %v438, %v1675
    %v1715 = vmul.f32 %v438, %v1681
    %v1716 = vmul.f32 %v438, %v1687
    %v1717 = vmul.f32 %v438, %v1693
    %v1718 = vadd.f32 %v1526, %v1694
    %v1719 = vadd.f32 %v1527, %v1695
    %v1720 = vadd.f32 %v1528, %v1696
    %v1721 = vadd.f32 %v1529, %v1697
    %v1722 = vadd.f32 %v1530, %v1698
    %v1723 = vadd.f32 %v1531, %v1699
    %v1724 = vadd.f32 %v1532, %v1700
    %v1725 = vadd.f32 %v1533, %v1701
    %v1726 = vadd.f32 %v1534, %v1702
    %v1727 = vadd.f32 %v1535, %v1703
    %v1728 = vadd.f32 %v1536, %v1704
    %v1729 = vadd.f32 %v1537, %v1705
    %v1730 = vadd.f32 %v1538, %v1706
    %v1731 = vadd.f32 %v1539, %v1707
    %v1732 = vadd.f32 %v1540, %v1708
    %v1733 = vadd.f32 %v1541, %v1709
    %v1734 = vadd.f32 %v1542, %v1710
    %v1735 = vadd.f32 %v1543, %v1711
    %v1736 = vadd.f32 %v1544, %v1712
    %v1737 = vadd.f32 %v1545, %v1713
    %v1738 = vadd.f32 %v1546, %v1714
    %v1739 = vadd.f32 %v1547, %v1715
    %v1740 = vadd.f32 %v1548, %v1716
    %v1741 = vadd.f32 %v1549, %v1717
    %v1742 = vld [vmem:[#allocation2] sm:$0xff]
    %v1743 = vld [vmem:[#allocation2 + $0x8] sm:$0xff]
    %v1744 = vld [vmem:[#allocation2 + $0x10] sm:$0xff]
    %v1745 = vld [vmem:[#allocation2 + $0x18] sm:$0xff]
    %v1746 = vld [vmem:[#allocation2 + $0x20] sm:$0xff]
    %v1747 = vld [vmem:[#allocation2 + $0x28] sm:$0xff]
    %v1748 = vld [vmem:[#allocation2 + $0x30] sm:$0xff]
    %v1749 = vld [vmem:[#allocation2 + $0x38] sm:$0xff]
    %v1750 = vld [vmem:[#allocation2 + $0x40] sm:$0xff]
    %v1751 = vld [vmem:[#allocation2 + $0x48] sm:$0xff]
    %v1752 = vld [vmem:[#allocation2 + $0x50] sm:$0xff]
    %v1753 = vld [vmem:[#allocation2 + $0x58] sm:$0xff]
    %v1754 = vld [vmem:[#allocation2 + $0x60] sm:$0xff]
    %v1755 = vld [vmem:[#allocation2 + $0x68] sm:$0xff]
    %v1756 = vld [vmem:[#allocation2 + $0x70] sm:$0xff]
    %v1757 = vld [vmem:[#allocation2 + $0x78] sm:$0xff]
    %v1758 = vld [vmem:[#allocation2 + $0x80] sm:$0xff]
    %v1759 = vld [vmem:[#allocation2 + $0x88] sm:$0xff]
    %v1760 = vld [vmem:[#allocation2 + $0x90] sm:$0xff]
    %v1761 = vld [vmem:[#allocation2 + $0x98] sm:$0xff]
    %v1762 = vld [vmem:[#allocation2 + $0xa0] sm:$0xff]
    %v1763 = vld [vmem:[#allocation2 + $0xa8] sm:$0xff]
    %v1764 = vld [vmem:[#allocation2 + $0xb0] sm:$0xff]
    %v1765 = vld [vmem:[#allocation2 + $0xb8] sm:$0xff]
    %v1766 = vmul.f32 %v1742, %v1718
    %v1767 = vmul.f32 %v1743, %v1719
    %v1768 = vmul.f32 %v1744, %v1720
    %v1769 = vmul.f32 %v1745, %v1721
    %v1770 = vmul.f32 %v1746, %v1722
    %v1771 = vmul.f32 %v1747, %v1723
    %v1772 = vmul.f32 %v1748, %v1724
    %v1773 = vmul.f32 %v1749, %v1725
    %v1774 = vmul.f32 %v1750, %v1726
    %v1775 = vmul.f32 %v1751, %v1727
    %v1776 = vmul.f32 %v1752, %v1728
    %v1777 = vmul.f32 %v1753, %v1729
    %v1778 = vmul.f32 %v1754, %v1730
    %v1779 = vmul.f32 %v1755, %v1731
    %v1780 = vmul.f32 %v1756, %v1732
    %v1781 = vmul.f32 %v1757, %v1733
    %v1782 = vmul.f32 %v1758, %v1734
    %v1783 = vmul.f32 %v1759, %v1735
    %v1784 = vmul.f32 %v1760, %v1736
    %v1785 = vmul.f32 %v1761, %v1737
    %v1786 = vmul.f32 %v1762, %v1738
    %v1787 = vmul.f32 %v1763, %v1739
    %v1788 = vmul.f32 %v1764, %v1740
    %v1789 = vmul.f32 %v1765, %v1741
    %v1790 = vadd.f32 %v1766, %v1767
    %v1791 = vrot.slane %v1790, 4
    %v1792 = vadd.f32 %v1790, %v1791
    %v1793 = vrot.slane %v1792, 2
    %v1794 = vadd.f32 %v1792, %v1793
    %v1795 = vrot.slane %v1794, 1
    %v1796 = vadd.f32 %v1794, %v1795
    %v1797 = vadd.f32 %v1768, %v1769
    %v1798 = vrot.slane %v1797, 4
    %v1799 = vadd.f32 %v1797, %v1798
    %v1800 = vrot.slane %v1799, 2
    %v1801 = vadd.f32 %v1799, %v1800
    %v1802 = vrot.slane %v1801, 1
    %v1803 = vadd.f32 %v1801, %v1802
    %v1804 = vadd.f32 %v1770, %v1771
    %v1805 = vrot.slane %v1804, 4
    %v1806 = vadd.f32 %v1804, %v1805
    %v1807 = vrot.slane %v1806, 2
    %v1808 = vadd.f32 %v1806, %v1807
    %v1809 = vrot.slane %v1808, 1
    %v1810 = vadd.f32 %v1808, %v1809
    %v1811 = vadd.f32 %v1772, %v1773
    %v1812 = vrot.slane %v1811, 4
    %v1813 = vadd.f32 %v1811, %v1812
    %v1814 = vrot.slane %v1813, 2
    %v1815 = vadd.f32 %v1813, %v1814
    %v1816 = vrot.slane %v1815, 1
    %v1817 = vadd.f32 %v1815, %v1816
    %v1818 = vadd.f32 %v1774, %v1775
    %v1819 = vrot.slane %v1818, 4
    %v1820 = vadd.f32 %v1818, %v1819
    %v1821 = vrot.slane %v1820, 2
    %v1822 = vadd.f32 %v1820, %v1821
    %v1823 = vrot.slane %v1822, 1
    %v1824 = vadd.f32 %v1822, %v1823
    %v1825 = vadd.f32 %v1776, %v1777
    %v1826 = vrot.slane %v1825, 4
    %v1827 = vadd.f32 %v1825, %v1826
    %v1828 = vrot.slane %v1827, 2
    %v1829 = vadd.f32 %v1827, %v1828
    %v1830 = vrot.slane %v1829, 1
    %v1831 = vadd.f32 %v1829, %v1830
    %v1832 = vadd.f32 %v1778, %v1779
    %v1833 = vrot.slane %v1832, 4
    %v1834 = vadd.f32 %v1832, %v1833
    %v1835 = vrot.slane %v1834, 2
    %v1836 = vadd.f32 %v1834, %v1835
    %v1837 = vrot.slane %v1836, 1
    %v1838 = vadd.f32 %v1836, %v1837
    %v1839 = vadd.f32 %v1780, %v1781
    %v1840 = vrot.slane %v1839, 4
    %v1841 = vadd.f32 %v1839, %v1840
    %v1842 = vrot.slane %v1841, 2
    %v1843 = vadd.f32 %v1841, %v1842
    %v1844 = vrot.slane %v1843, 1
    %v1845 = vadd.f32 %v1843, %v1844
    %v1846 = vadd.f32 %v1782, %v1783
    %v1847 = vrot.slane %v1846, 4
    %v1848 = vadd.f32 %v1846, %v1847
    %v1849 = vrot.slane %v1848, 2
    %v1850 = vadd.f32 %v1848, %v1849
    %v1851 = vrot.slane %v1850, 1
    %v1852 = vadd.f32 %v1850, %v1851
    %v1853 = vadd.f32 %v1784, %v1785
    %v1854 = vrot.slane %v1853, 4
    %v1855 = vadd.f32 %v1853, %v1854
    %v1856 = vrot.slane %v1855, 2
    %v1857 = vadd.f32 %v1855, %v1856
    %v1858 = vrot.slane %v1857, 1
    %v1859 = vadd.f32 %v1857, %v1858
    %v1860 = vadd.f32 %v1786, %v1787
    %v1861 = vrot.slane %v1860, 4
    %v1862 = vadd.f32 %v1860, %v1861
    %v1863 = vrot.slane %v1862, 2
    %v1864 = vadd.f32 %v1862, %v1863
    %v1865 = vrot.slane %v1864, 1
    %v1866 = vadd.f32 %v1864, %v1865
    %v1867 = vadd.f32 %v1788, %v1789
    %v1868 = vrot.slane %v1867, 4
    %v1869 = vadd.f32 %v1867, %v1868
    %v1870 = vrot.slane %v1869, 2
    %v1871 = vadd.f32 %v1869, %v1870
    %v1872 = vrot.slane %v1871, 1
    %v1873 = vadd.f32 %v1871, %v1872
    %v1875 = vperm.slane %v456, 0
    %v1877 = vmul.f32 %v1875, %v597
    %v1878 = vmul.f32 %v1875, %v598
    %v1881 = vrot.slane %v1877, 1
    %v1882 = vrot.slane %v1877, 2
    %v1883 = vrot.slane %v1877, 3
    %v1884 = vrot.slane %v1877, 4
    %v1885 = vrot.slane %v1877, 5
    %v1886 = vrot.slane %v1877, 6
    %v1887 = vrot.slane %v1877, 7
    %v1888 = vrot.slane %v1878, 1
    %v1889 = vrot.slane %v1878, 2
    %v1890 = vrot.slane %v1878, 3
    %v1903 = vadd.f32 %v1796, %v1877
    %v1904 = vadd.f32 %v1803, %v1881
    %v1905 = vadd.f32 %v1810, %v1882
    %v1906 = vadd.f32 %v1817, %v1883
    %v1907 = vadd.f32 %v1824, %v1884
    %v1908 = vadd.f32 %v1831, %v1885
    %v1909 = vadd.f32 %v1838, %v1886
    %v1910 = vadd.f32 %v1845, %v1887
    %v1911 = vadd.f32 %v1852, %v1878
    %v1912 = vadd.f32 %v1859, %v1888
    %v1913 = vadd.f32 %v1866, %v1889
    %v1914 = vadd.f32 %v1873, %v1890
    %v1927 = vrot.slane %v1904, 7
    %v1928 = vsel %vm300, %v1927, %v1903
    %v1929 = vrot.slane %v1905, 6
    %v1930 = vsel %vm303, %v1929, %v1928
    %v1931 = vrot.slane %v1906, 5
    %v1932 = vsel %vm306, %v1931, %v1930
    %v1933 = vrot.slane %v1907, 4
    %v1934 = vsel %vm309, %v1933, %v1932
    %v1935 = vrot.slane %v1908, 3
    %vm1936 = vcmask 1045509
    %v1937 = vsel %vm1936, %v1935, %v1934
    %v1938 = vrot.slane %v1909, 2
    %vm1939 = vcmask 1046534
    %v1940 = vsel %vm1939, %v1938, %v1937
    %v1941 = vrot.slane %v1910, 1
    %vm1942 = vcmask 1047559
    %v1943 = vsel %vm1942, %v1941, %v1940
    %v1944 = vrot.slane %v1912, 7
    %v1945 = vsel %vm300, %v1944, %v1911
    %v1946 = vrot.slane %v1913, 6
    %v1947 = vsel %vm303, %v1946, %v1945
    %v1948 = vrot.slane %v1914, 5
    %v1949 = vsel %vm306, %v1948, %v1947
    %v1952 = vrot.slane %v1903, 4
    %v1953 = vrot.slane %v1904, 3
    %v1954 = vsel %vm1936, %v1953, %v1952
    %v1955 = vrot.slane %v1905, 2
    %v1956 = vsel %vm1939, %v1955, %v1954
    %v1957 = vrot.slane %v1906, 1
    %v1958 = vsel %vm1942, %v1957, %v1956
    %v1959 = vrot.slane %v1908, 7
    %v1960 = vsel %vm300, %v1959, %v1907
    %v1961 = vrot.slane %v1909, 6
    %v1962 = vsel %vm303, %v1961, %v1960
    %v1963 = vrot.slane %v1910, 5
    %v1964 = vsel %vm306, %v1963, %v1962
    %v1965 = vrot.slane %v1911, 4
    %v1966 = vsel %vm309, %v1965, %v1964
    %v1967 = vrot.slane %v1912, 3
    %v1968 = vsel %vm1936, %v1967, %v1966
    %v1969 = vrot.slane %v1913, 2
    %v1970 = vsel %vm1939, %v1969, %v1968
    %v1971 = vrot.slane %v1914, 1
    %v1972 = vsel %vm1942, %v1971, %v1970
    %1973 = vrot.lane.b32.xlu0 %v1958, 64
    %v1974 = vpop.permute.xlu0 %1973
    %1975 = vrot.lane.b32.xlu0 %v1972, 64
    %v1976 = vpop.permute.xlu0 %1975
    %v1979 = vsel %vm423, %v1949, %v1974
    %v1980 = vxor.u32 %v492, 2147483648
    %v1981 = vxor.u32 %v495, 2147483648
    %v1982 = vxor.u32 %v498, 2147483648
    %v1983 = vmul.f32 %v1980, 1.442695
    %v1984 = vpow.pop %v1983
    %v1985 = vmul.f32 %v1981, 1.442695
    %v1986 = vpow.pop %v1985
    %v1987 = vmul.f32 %v1982, 1.442695
    %v1988 = vpow.pop %v1987
    %v1989 = vadd.f32 %v1984, 1.0
    %v1990 = vadd.f32 %v1986, 1.0
    %v1991 = vadd.f32 %v1988, 1.0
    %v1992 = vrcp.pop %v1989
    %v1993 = vmul.f32 %v1989, %v1992
    %v1994 = vsub.f32 1.0, %v1993
    %v1995 = vmul.f32 %v1992, %v1994
    %v1996 = vadd.f32 %v1992, %v1995
    %vm1997 = vweird.f32 %v1989
    %vm1998 = vweird.f32 %v1992
    %vm1999 = vmor %vm1997, %vm1998
    %v2000 = vsel %vm1999, %v1992, %v1996
    %v2001 = vand.u32 2147483647, %v1989
    %vm2002 = vcmp.eq.f32.partialorder %v2001, 8.507059e+37
    %v2003 = vand.u32 %v1989, 2147483648
    %v2004 = vor.u32 1.1754944e-38, %v2003
    %v2005 = vsel %vm2002, %v2004, %v2000
    %v2006 = vmul.f32 1.0, %v2005
    %v2007 = vrcp.pop %v1990
    %v2008 = vmul.f32 %v1990, %v2007
    %v2009 = vsub.f32 1.0, %v2008
    %v2010 = vmul.f32 %v2007, %v2009
    %v2011 = vadd.f32 %v2007, %v2010
    %vm2012 = vweird.f32 %v1990
    %vm2013 = vweird.f32 %v2007
    %vm2014 = vmor %vm2012, %vm2013
    %v2015 = vsel %vm2014, %v2007, %v2011
    %v2016 = vand.u32 2147483647, %v1990
    %vm2017 = vcmp.eq.f32.partialorder %v2016, 8.507059e+37
    %v2018 = vand.u32 %v1990, 2147483648
    %v2019 = vor.u32 1.1754944e-38, %v2018
    %v2020 = vsel %vm2017, %v2019, %v2015
    %v2021 = vmul.f32 1.0, %v2020
    %v2022 = vrcp.pop %v1991
    %v2023 = vmul.f32 %v1991, %v2022
    %v2024 = vsub.f32 1.0, %v2023
    %v2025 = vmul.f32 %v2022, %v2024
    %v2026 = vadd.f32 %v2022, %v2025
    %vm2027 = vweird.f32 %v1991
    %vm2028 = vweird.f32 %v2022
    %vm2029 = vmor %vm2027, %vm2028
    %v2030 = vsel %vm2029, %v2022, %v2026
    %v2031 = vand.u32 2147483647, %v1991
    %vm2032 = vcmp.eq.f32.partialorder %v2031, 8.507059e+37
    %v2033 = vand.u32 %v1991, 2147483648
    %v2034 = vor.u32 1.1754944e-38, %v2033
    %v2035 = vsel %vm2032, %v2034, %v2030
    %v2036 = vmul.f32 1.0, %v2035
    %v2037 = vmul.f32 %v492, %v2006
    %v2038 = vmul.f32 %v495, %v2021
    %v2039 = vmul.f32 %v498, %v2036
    %2043 = vrot.lane.b32.xlu0 %v2037, 64
    %v2044 = vpop.permute.xlu0 %2043
    %2045 = vrot.lane.b32.xlu0 %v2038, 64
    %v2046 = vpop.permute.xlu0 %2045
    %2047 = vrot.lane.b32.xlu0 %v2039, 64
    %v2048 = vpop.permute.xlu0 %2047
    %v2052 = vmul.f32 %v1943, %v2044
    %v2053 = vmul.f32 %v1979, %v2046
    %v2054 = vmul.f32 %v1976, %v2048
    %v2056 = vsel %vm511, %v2052, 0
    %v2059 = vsel %vm511, %v2053, 0
    %v2062 = vsel %vm511, %v2054, 0
    %2064 = vmatpush.msra.mxu0 0.0
    %2065 = vmatpush.msra.mxu0 0.0
    %2066 = vmatpush.msra.mxu0 0.0
    %2067 = vmatpush.msra.mxu0 0.0
    %2068 = vmatpush.msra.mxu0 0.0
    %2069 = vmatpush.msra.mxu0 0.0
    %2070 = vmatpush.msra.mxu0 0.0
    %2071 = vmatpush.msra.mxu0 0.0
    %2072 = vmatpush.msra.mxu0 %v464
    %2073 = vmatpush.msra.mxu0 %v463
    %2074 = vmatpush.msra.mxu0 %v462
    %2075 = vmatpush.msra.mxu0 %v461
    %2076 = vmatpush.msra.mxu0 %v460
    %2077 = vmatpush.msra.mxu0 %v459
    %2078 = vmatpush.msra.mxu0 %v458
    %2079 = vmatpush.msra.mxu0 %v457
    %2080 = vmatmul.f32.gmra.mxu0 %v2056
    %v2081 = vpop.f32.mrf.mxu0
    %v2082 = vadd.f32 0.0, %v2081
    %2083 = vmatmul.f32.gmra.mxu0 %v2059
    %v2084 = vpop.f32.mrf.mxu0
    %v2085 = vadd.f32 0.0, %v2084
    %2086 = vmatmul.f32.gmra.mxu0 %v2062
    %v2087 = vpop.f32.mrf.mxu0
    %v2088 = vadd.f32 0.0, %v2087
    %2089 = vdwg.mxu0
    %v2090 = vld [vmem:[#allocation14] sm:$0xff]
    %v2091 = vld [vmem:[#allocation14 + $0x8] sm:$0xff]
    %v2092 = vld [vmem:[#allocation14 + $0x10] sm:$0xff]
    %v2093 = vld [vmem:[#allocation14 + $0x18] sm:$0xff]
    %v2094 = vld [vmem:[#allocation15] sm:$0xf]
    %v2095 = vld [vmem:[#allocation17] sm:$0x1]
    %v2096 = vld [vmem:[%s15] sm:$0xff]
    %v2097 = vld [vmem:[%s15 + $0x8] sm:$0xff]
    %v2098 = vld [vmem:[%s15 + $0x10] sm:$0xff]
    %v2099 = vld [vmem:[%s15 + $0x18] sm:$0xff]
    %v2100 = vld [vmem:[%s15 + $0x20] sm:$0xff]
    %v2101 = vld [vmem:[%s15 + $0x28] sm:$0xff]
    %v2102 = vld [vmem:[%s15 + $0x30] sm:$0xff]
    %v2103 = vld [vmem:[%s15 + $0x38] sm:$0xff]
    %v2104 = vld [vmem:[#allocation18] sm:$0x1]
    %v2105 = vld [vmem:[%s17] sm:$0xff]
    %v2106 = vld [vmem:[%s17 + $0x8] sm:$0xff]
    %v2107 = vld [vmem:[%s18] sm:$0x1]
    %v2108 = vld [vmem:[%s19] sm:$0xff]
    %v2109 = vld [vmem:[%s19 + $0x8] sm:$0xff]
    %v2110 = vld [vmem:[%s19 + $0x10] sm:$0xff]
    %v2111 = vld [vmem:[%s19 + $0x18] sm:$0xff]
    %v2112 = vld [vmem:[%s19 + $0x20] sm:$0xff]
    %v2113 = vld [vmem:[%s19 + $0x28] sm:$0xff]
    %v2114 = vld [vmem:[%s19 + $0x30] sm:$0xff]
    %v2115 = vld [vmem:[%s19 + $0x38] sm:$0xff]
    %v2117 = vsel %vm465, %v2082, 0
    %v2120 = vsel %vm465, %v2085, 0
    %v2123 = vsel %vm465, %v2088, 0
    %2125 = vmatpush.msra.mxu0 0.0
    %2126 = vmatpush.msra.mxu0 0.0
    %2127 = vmatpush.msra.mxu0 0.0
    %2128 = vmatpush.msra.mxu0 0.0
    %2129 = vmatpush.msra.mxu0 0.0
    %2130 = vmatpush.msra.mxu0 0.0
    %2131 = vmatpush.msra.mxu0 0.0
    %2132 = vmatpush.msra.mxu0 0.0
    %2133 = vmatpush.msra.mxu0 0.0
    %2134 = vmatpush.msra.mxu0 0.0
    %2135 = vmatpush.msra.mxu0 0.0
    %2136 = vmatpush.msra.mxu0 0.0
    %2137 = vmatpush.msra.mxu0 %v2093
    %2138 = vmatpush.msra.mxu0 %v2092
    %2139 = vmatpush.msra.mxu0 %v2091
    %2140 = vmatpush.msra.mxu0 %v2090
    %2141 = vmatmul.f32.gmra.mxu0 %v2117
    %v2142 = vpop.f32.mrf.mxu0
    %v2143 = vadd.f32 0.0, %v2142
    %2144 = vmatmul.f32.gmra.mxu0 %v2120
    %v2145 = vpop.f32.mrf.mxu0
    %v2146 = vadd.f32 0.0, %v2145
    %2147 = vmatmul.f32.gmra.mxu0 %v2123
    %v2148 = vpop.f32.mrf.mxu0
    %v2149 = vadd.f32 0.0, %v2148
    %2150 = vdwg.mxu0
    %v2153 = vrot.slane %v2146, 4
    %v2154 = vrot.slane %v2149, 4
    %v2155 = vsel %vm423, %v2153, %v2154
    %2156 = vrot.lane.b32.xlu0 %v2155, 64
    %v2157 = vpop.permute.xlu0 %2156
    %2158 = vrot.lane.b32.xlu0 %v2154, 64
    %v2159 = vpop.permute.xlu0 %2158
    %v2162 = vsel %vm511, %v2143, %v2157
    %v2163 = vsel %vm511, %v2146, %v2159
    %v2164 = vperm.slane %v2094, 3
    %v2165 = vmul.f32 %v2162, %v2164
    %v2166 = vmul.f32 %v2163, %v2164
    %v2168 = vperm.slane %v2095, 0
    %v2170 = vadd.f32 %v2168, %v2165
    %v2171 = vadd.f32 %v2168, %v2166
    %v2174 = vrot.slane %v2162, 7
    %v2175 = vrot.slane %v2163, 7
    %v2176 = vsel %vm261, %v2174, %v2175
    %v2179 = vsel %vm261, 0.0, %v2174
    %v2180 = vperm.slane %v2094, 2
    %v2181 = vmul.f32 %v2179, %v2180
    %v2182 = vmul.f32 %v2176, %v2180
    %v2183 = vadd.f32 %v2170, %v2181
    %v2184 = vadd.f32 %v2171, %v2182
    %v2185 = vrot.slane %v2162, 6
    %v2186 = vrot.slane %v2163, 6
    %v2187 = vsel %vm535, %v2185, %v2186
    %v2190 = vsel %vm535, 0.0, %v2185
    %v2191 = vperm.slane %v2094, 1
    %v2192 = vmul.f32 %v2190, %v2191
    %v2193 = vmul.f32 %v2187, %v2191
    %v2194 = vadd.f32 %v2183, %v2192
    %v2195 = vadd.f32 %v2184, %v2193
    %v2196 = vrot.slane %v2162, 5
    %v2197 = vrot.slane %v2163, 5
    %v2198 = vsel %vm547, %v2196, %v2197
    %v2201 = vsel %vm547, 0.0, %v2196
    %v2202 = vperm.slane %v2094, 0
    %v2203 = vmul.f32 %v2201, %v2202
    %v2204 = vmul.f32 %v2198, %v2202
    %v2205 = vadd.f32 %v2194, %v2203
    %v2206 = vadd.f32 %v2195, %v2204
    %v2207 = vxor.u32 %v2205, 2147483648
    %v2208 = vxor.u32 %v2206, 2147483648
    %v2209 = vmul.f32 %v2207, 1.442695
    %v2210 = vpow.pop %v2209
    %v2211 = vmul.f32 %v2208, 1.442695
    %v2212 = vpow.pop %v2211
    %v2213 = vadd.f32 %v2210, 1.0
    %v2214 = vadd.f32 %v2212, 1.0
    %v2215 = vrcp.pop %v2213
    %v2216 = vmul.f32 %v2213, %v2215
    %v2217 = vsub.f32 1.0, %v2216
    %v2218 = vmul.f32 %v2215, %v2217
    %v2219 = vadd.f32 %v2215, %v2218
    %vm2220 = vweird.f32 %v2213
    %vm2221 = vweird.f32 %v2215
    %vm2222 = vmor %vm2220, %vm2221
    %v2223 = vsel %vm2222, %v2215, %v2219
    %v2224 = vand.u32 2147483647, %v2213
    %vm2225 = vcmp.eq.f32.partialorder %v2224, 8.507059e+37
    %v2226 = vand.u32 %v2213, 2147483648
    %v2227 = vor.u32 1.1754944e-38, %v2226
    %v2228 = vsel %vm2225, %v2227, %v2223
    %v2229 = vmul.f32 1.0, %v2228
    %v2230 = vrcp.pop %v2214
    %v2231 = vmul.f32 %v2214, %v2230
    %v2232 = vsub.f32 1.0, %v2231
    %v2233 = vmul.f32 %v2230, %v2232
    %v2234 = vadd.f32 %v2230, %v2233
    %vm2235 = vweird.f32 %v2214
    %vm2236 = vweird.f32 %v2230
    %vm2237 = vmor %vm2235, %vm2236
    %v2238 = vsel %vm2237, %v2230, %v2234
    %v2239 = vand.u32 2147483647, %v2214
    %vm2240 = vcmp.eq.f32.partialorder %v2239, 8.507059e+37
    %v2241 = vand.u32 %v2214, 2147483648
    %v2242 = vor.u32 1.1754944e-38, %v2241
    %v2243 = vsel %vm2240, %v2242, %v2238
    %v2244 = vmul.f32 1.0, %v2243
    %v2245 = vmul.f32 %v2205, %v2229
    %v2246 = vmul.f32 %v2206, %v2244
    %v2249 = vrot.slane %v2245, 4
    %v2250 = vrot.slane %v2246, 4
    %v2251 = vsel %vm423, %v2249, %v2250
    %2252 = vrot.lane.b32.xlu0 %v2249, 64
    %v2253 = vpop.permute.xlu0 %2252
    %2254 = vrot.lane.b32.xlu0 %v2251, 64
    %v2255 = vpop.permute.xlu0 %2254
    %v2257 = vsel %vm423, %v2246, %v2253
    %v2258 = vsel %vm511, %v2245, 0
    %v2261 = vsel %vm511, %v2257, 0
    %v2263 = vsel %vm511, %v2255, 0
    %2265 = vmatpush.msra.mxu0 0.0
    %2266 = vmatpush.msra.mxu0 0.0
    %2267 = vmatpush.msra.mxu0 0.0
    %2268 = vmatpush.msra.mxu0 0.0
    %2269 = vmatpush.msra.mxu0 0.0
    %2270 = vmatpush.msra.mxu0 0.0
    %2271 = vmatpush.msra.mxu0 0.0
    %2272 = vmatpush.msra.mxu0 0.0
    %2273 = vmatpush.msra.mxu0 %v2103
    %2274 = vmatpush.msra.mxu0 %v2102
    %2275 = vmatpush.msra.mxu0 %v2101
    %2276 = vmatpush.msra.mxu0 %v2100
    %2277 = vmatpush.msra.mxu0 %v2099
    %2278 = vmatpush.msra.mxu0 %v2098
    %2279 = vmatpush.msra.mxu0 %v2097
    %2280 = vmatpush.msra.mxu0 %v2096
    %2281 = vmatmul.f32.gmra.mxu0 %v2258
    %v2282 = vpop.f32.mrf.mxu0
    %v2283 = vadd.f32 0.0, %v2282
    %2284 = vmatmul.f32.gmra.mxu0 %v2261
    %v2285 = vpop.f32.mrf.mxu0
    %v2286 = vadd.f32 0.0, %v2285
    %2287 = vmatmul.f32.gmra.mxu0 %v2263
    %v2288 = vpop.f32.mrf.mxu0
    %v2289 = vadd.f32 0.0, %v2288
    %2290 = vdwg.mxu0
    %v2293 = vrot.slane %v2286, 4
    %v2294 = vrot.slane %v2289, 4
    %v2295 = vsel %vm423, %v2293, %v2294
    %2296 = vrot.lane.b32.xlu0 %v2295, 64
    %v2297 = vpop.permute.xlu0 %2296
    %2298 = vrot.lane.b32.xlu0 %v2294, 64
    %v2299 = vpop.permute.xlu0 %2298
    %v2302 = vsel %vm511, %v2283, %v2297
    %v2303 = vsel %vm511, %v2286, %v2299
    %v2305 = vperm.slane %v2104, 0
    %v2307 = vadd.f32 %v2302, %v2305
    %v2308 = vadd.f32 %v2303, %v2305
    %v2309 = vmax.f32 %v2307, 0.0
    %v2310 = vmax.f32 %v2308, 0.0
    %vm2311 = vcmp.ne.f32.partialorder %v2307, %v2307
    %vm2312 = vcmp.ne.f32.partialorder %v2308, %v2308
    %v2313 = vadd.f32 %v2307, 0.0
    %v2314 = vadd.f32 %v2308, 0.0
    %v2315 = vand.u32 2147483647, %v2307
    %v2316 = vand.u32 2147483647, %v2308
    %v2317 = vsub.f32 0.0, %v2315
    %v2318 = vsub.f32 0.0, %v2316
    %v2319 = vmul.f32 %v2317, 1.442695
    %v2320 = vpow.pop %v2319
    %v2321 = vmul.f32 %v2318, 1.442695
    %v2322 = vpow.pop %v2321
    %v2323 = vadd.f32 %v2320, 1.0
    %v2324 = vlog2.pop %v2323
    %v2325 = vmul.f32 %v2324, 0.6931472
    %v2326 = vmul.f32 -0.5, %v2320
    %v2327 = vadd.f32 %v2326, 1.0
    %v2328 = vmul.f32 %v2327, %v2320
    %v2329 = vand.u32 2147483647, %v2320
    %vm2330 = vcmp.lt.f32.partialorder %v2329, 0.0004427343
    %v2331 = vsel %vm2330, %v2328, %v2325
    %v2332 = vadd.f32 %v2322, 1.0
    %v2333 = vlog2.pop %v2332
    %v2334 = vmul.f32 %v2333, 0.6931472
    %v2335 = vmul.f32 -0.5, %v2322
    %v2336 = vadd.f32 %v2335, 1.0
    %v2337 = vmul.f32 %v2336, %v2322
    %v2338 = vand.u32 2147483647, %v2322
    %vm2339 = vcmp.lt.f32.partialorder %v2338, 0.0004427343
    %v2340 = vsel %vm2339, %v2337, %v2334
    %v2341 = vadd.f32 %v2309, %v2331
    %v2342 = vadd.f32 %v2310, %v2340
    %v2343 = vsel %vm2311, %v2313, %v2341
    %v2344 = vsel %vm2312, %v2314, %v2342
    %v2345 = vperm.slane %v2283, 0
    %v2346 = vlaneseq
    %v2347 = vshrl.u32 %v2346, 7
    %v2348 = vadd.s32 %v2347, 64
    %2349 = vset.pattern.permute.xlu0 %v2348
    %2350 = vperm.xlu0 %2349, %v2345
    %v2351 = vpop.permute.xlu0 %2350
    %v2352 = vlaneseq
    %v2353 = vshrl.u32 %v2352, 7
    %v2354 = vadd.s32 %v2353, 72
    %2355 = vset.pattern.permute.xlu0 %v2354
    %2356 = vperm.xlu0 %2355, %v2345
    %v2357 = vpop.permute.xlu0 %2356
    %v2358 = vperm.slane %v2283, 1
    %v2359 = vlaneseq
    %v2360 = vshrl.u32 %v2359, 7
    %v2361 = vadd.s32 %v2360, 64
    %2362 = vset.pattern.permute.xlu0 %v2361
    %2363 = vperm.xlu0 %2362, %v2358
    %v2364 = vpop.permute.xlu0 %2363
    %v2365 = vlaneseq
    %v2366 = vshrl.u32 %v2365, 7
    %v2367 = vadd.s32 %v2366, 72
    %2368 = vset.pattern.permute.xlu0 %v2367
    %2369 = vperm.xlu0 %2368, %v2358
    %v2370 = vpop.permute.xlu0 %2369
    %v2371 = vperm.slane %v2283, 2
    %v2372 = vlaneseq
    %v2373 = vshrl.u32 %v2372, 7
    %v2374 = vadd.s32 %v2373, 64
    %2375 = vset.pattern.permute.xlu0 %v2374
    %2376 = vperm.xlu0 %2375, %v2371
    %v2377 = vpop.permute.xlu0 %2376
    %v2378 = vlaneseq
    %v2379 = vshrl.u32 %v2378, 7
    %v2380 = vadd.s32 %v2379, 72
    %2381 = vset.pattern.permute.xlu0 %v2380
    %2382 = vperm.xlu0 %2381, %v2371
    %v2383 = vpop.permute.xlu0 %2382
    %v2384 = vperm.slane %v2283, 3
    %v2385 = vlaneseq
    %v2386 = vshrl.u32 %v2385, 7
    %v2387 = vadd.s32 %v2386, 64
    %2388 = vset.pattern.permute.xlu0 %v2387
    %2389 = vperm.xlu0 %2388, %v2384
    %v2390 = vpop.permute.xlu0 %2389
    %v2391 = vlaneseq
    %v2392 = vshrl.u32 %v2391, 7
    %v2393 = vadd.s32 %v2392, 72
    %2394 = vset.pattern.permute.xlu0 %v2393
    %2395 = vperm.xlu0 %2394, %v2384
    %v2396 = vpop.permute.xlu0 %2395
    %v2397 = vperm.slane %v2283, 4
    %v2398 = vlaneseq
    %v2399 = vshrl.u32 %v2398, 7
    %v2400 = vadd.s32 %v2399, 64
    %2401 = vset.pattern.permute.xlu0 %v2400
    %2402 = vperm.xlu0 %2401, %v2397
    %v2403 = vpop.permute.xlu0 %2402
    %v2404 = vlaneseq
    %v2405 = vshrl.u32 %v2404, 7
    %v2406 = vadd.s32 %v2405, 72
    %2407 = vset.pattern.permute.xlu0 %v2406
    %2408 = vperm.xlu0 %2407, %v2397
    %v2409 = vpop.permute.xlu0 %2408
    %v2410 = vperm.slane %v2283, 5
    %v2411 = vlaneseq
    %v2412 = vshrl.u32 %v2411, 7
    %v2413 = vadd.s32 %v2412, 64
    %2414 = vset.pattern.permute.xlu0 %v2413
    %2415 = vperm.xlu0 %2414, %v2410
    %v2416 = vpop.permute.xlu0 %2415
    %v2417 = vlaneseq
    %v2418 = vshrl.u32 %v2417, 7
    %v2419 = vadd.s32 %v2418, 72
    %2420 = vset.pattern.permute.xlu0 %v2419
    %2421 = vperm.xlu0 %2420, %v2410
    %v2422 = vpop.permute.xlu0 %2421
    %v2423 = vperm.slane %v2283, 6
    %v2424 = vlaneseq
    %v2425 = vshrl.u32 %v2424, 7
    %v2426 = vadd.s32 %v2425, 64
    %2427 = vset.pattern.permute.xlu0 %v2426
    %2428 = vperm.xlu0 %2427, %v2423
    %v2429 = vpop.permute.xlu0 %2428
    %v2430 = vlaneseq
    %v2431 = vshrl.u32 %v2430, 7
    %v2432 = vadd.s32 %v2431, 72
    %2433 = vset.pattern.permute.xlu0 %v2432
    %2434 = vperm.xlu0 %2433, %v2423
    %v2435 = vpop.permute.xlu0 %2434
    %v2436 = vperm.slane %v2283, 7
    %v2437 = vlaneseq
    %v2438 = vshrl.u32 %v2437, 7
    %v2439 = vadd.s32 %v2438, 64
    %2440 = vset.pattern.permute.xlu0 %v2439
    %2441 = vperm.xlu0 %2440, %v2436
    %v2442 = vpop.permute.xlu0 %2441
    %v2443 = vlaneseq
    %v2444 = vshrl.u32 %v2443, 7
    %v2445 = vadd.s32 %v2444, 72
    %2446 = vset.pattern.permute.xlu0 %v2445
    %2447 = vperm.xlu0 %2446, %v2436
    %v2448 = vpop.permute.xlu0 %2447
    %v2449 = vperm.slane %v2286, 0
    %v2450 = vlaneseq
    %v2451 = vshrl.u32 %v2450, 7
    %v2452 = vadd.s32 %v2451, 64
    %2453 = vset.pattern.permute.xlu0 %v2452
    %2454 = vperm.xlu0 %2453, %v2449
    %v2455 = vpop.permute.xlu0 %2454
    %v2456 = vlaneseq
    %v2457 = vshrl.u32 %v2456, 7
    %v2458 = vadd.s32 %v2457, 72
    %2459 = vset.pattern.permute.xlu0 %v2458
    %2460 = vperm.xlu0 %2459, %v2449
    %v2461 = vpop.permute.xlu0 %2460
    %v2462 = vperm.slane %v2286, 1
    %v2463 = vlaneseq
    %v2464 = vshrl.u32 %v2463, 7
    %v2465 = vadd.s32 %v2464, 64
    %2466 = vset.pattern.permute.xlu0 %v2465
    %2467 = vperm.xlu0 %2466, %v2462
    %v2468 = vpop.permute.xlu0 %2467
    %v2469 = vlaneseq
    %v2470 = vshrl.u32 %v2469, 7
    %v2471 = vadd.s32 %v2470, 72
    %2472 = vset.pattern.permute.xlu0 %v2471
    %2473 = vperm.xlu0 %2472, %v2462
    %v2474 = vpop.permute.xlu0 %2473
    %v2475 = vperm.slane %v2286, 2
    %v2476 = vlaneseq
    %v2477 = vshrl.u32 %v2476, 7
    %v2478 = vadd.s32 %v2477, 64
    %2479 = vset.pattern.permute.xlu0 %v2478
    %2480 = vperm.xlu0 %2479, %v2475
    %v2481 = vpop.permute.xlu0 %2480
    %v2482 = vlaneseq
    %v2483 = vshrl.u32 %v2482, 7
    %v2484 = vadd.s32 %v2483, 72
    %2485 = vset.pattern.permute.xlu0 %v2484
    %2486 = vperm.xlu0 %2485, %v2475
    %v2487 = vpop.permute.xlu0 %2486
    %v2488 = vperm.slane %v2286, 3
    %v2489 = vlaneseq
    %v2490 = vshrl.u32 %v2489, 7
    %v2491 = vadd.s32 %v2490, 64
    %2492 = vset.pattern.permute.xlu0 %v2491
    %2493 = vperm.xlu0 %2492, %v2488
    %v2494 = vpop.permute.xlu0 %2493
    %v2495 = vlaneseq
    %v2496 = vshrl.u32 %v2495, 7
    %v2497 = vadd.s32 %v2496, 72
    %2498 = vset.pattern.permute.xlu0 %v2497
    %2499 = vperm.xlu0 %2498, %v2488
    %v2500 = vpop.permute.xlu0 %2499
    %v2501 = vmul.f32 %v433, %v2351
    %v2502 = vmul.f32 %v433, %v2357
    %v2503 = vmul.f32 %v433, %v2364
    %v2504 = vmul.f32 %v433, %v2370
    %v2505 = vmul.f32 %v433, %v2377
    %v2506 = vmul.f32 %v433, %v2383
    %v2507 = vmul.f32 %v433, %v2390
    %v2508 = vmul.f32 %v433, %v2396
    %v2509 = vmul.f32 %v433, %v2403
    %v2510 = vmul.f32 %v433, %v2409
    %v2511 = vmul.f32 %v433, %v2416
    %v2512 = vmul.f32 %v433, %v2422
    %v2513 = vmul.f32 %v433, %v2429
    %v2514 = vmul.f32 %v433, %v2435
    %v2515 = vmul.f32 %v433, %v2442
    %v2516 = vmul.f32 %v433, %v2448
    %v2517 = vmul.f32 %v433, %v2455
    %v2518 = vmul.f32 %v433, %v2461
    %v2519 = vmul.f32 %v433, %v2468
    %v2520 = vmul.f32 %v433, %v2474
    %v2521 = vmul.f32 %v433, %v2481
    %v2522 = vmul.f32 %v433, %v2487
    %v2523 = vmul.f32 %v433, %v2494
    %v2524 = vmul.f32 %v433, %v2500
    %v2525 = vadd.f32 %v2501, 0.0
    %v2526 = vadd.f32 %v2502, 0.0
    %v2527 = vadd.f32 %v2503, 0.0
    %v2528 = vadd.f32 %v2504, 0.0
    %v2529 = vadd.f32 %v2505, 0.0
    %v2530 = vadd.f32 %v2506, 0.0
    %v2531 = vadd.f32 %v2507, 0.0
    %v2532 = vadd.f32 %v2508, 0.0
    %v2533 = vadd.f32 %v2509, 0.0
    %v2534 = vadd.f32 %v2510, 0.0
    %v2535 = vadd.f32 %v2511, 0.0
    %v2536 = vadd.f32 %v2512, 0.0
    %v2537 = vadd.f32 %v2513, 0.0
    %v2538 = vadd.f32 %v2514, 0.0
    %v2539 = vadd.f32 %v2515, 0.0
    %v2540 = vadd.f32 %v2516, 0.0
    %v2541 = vadd.f32 %v2517, 0.0
    %v2542 = vadd.f32 %v2518, 0.0
    %v2543 = vadd.f32 %v2519, 0.0
    %v2544 = vadd.f32 %v2520, 0.0
    %v2545 = vadd.f32 %v2521, 0.0
    %v2546 = vadd.f32 %v2522, 0.0
    %v2547 = vadd.f32 %v2523, 0.0
    %v2548 = vadd.f32 %v2524, 0.0
    %v2549 = vperm.slane %v2286, 4
    %v2550 = vlaneseq
    %v2551 = vshrl.u32 %v2550, 7
    %v2552 = vadd.s32 %v2551, 64
    %2553 = vset.pattern.permute.xlu0 %v2552
    %2554 = vperm.xlu0 %2553, %v2549
    %v2555 = vpop.permute.xlu0 %2554
    %v2556 = vlaneseq
    %v2557 = vshrl.u32 %v2556, 7
    %v2558 = vadd.s32 %v2557, 72
    %2559 = vset.pattern.permute.xlu0 %v2558
    %2560 = vperm.xlu0 %2559, %v2549
    %v2561 = vpop.permute.xlu0 %2560
    %v2562 = vperm.slane %v2286, 5
    %v2563 = vlaneseq
    %v2564 = vshrl.u32 %v2563, 7
    %v2565 = vadd.s32 %v2564, 64
    %2566 = vset.pattern.permute.xlu0 %v2565
    %2567 = vperm.xlu0 %2566, %v2562
    %v2568 = vpop.permute.xlu0 %2567
    %v2569 = vlaneseq
    %v2570 = vshrl.u32 %v2569, 7
    %v2571 = vadd.s32 %v2570, 72
    %2572 = vset.pattern.permute.xlu0 %v2571
    %2573 = vperm.xlu0 %2572, %v2562
    %v2574 = vpop.permute.xlu0 %2573
    %v2575 = vperm.slane %v2286, 6
    %v2576 = vlaneseq
    %v2577 = vshrl.u32 %v2576, 7
    %v2578 = vadd.s32 %v2577, 64
    %2579 = vset.pattern.permute.xlu0 %v2578
    %2580 = vperm.xlu0 %2579, %v2575
    %v2581 = vpop.permute.xlu0 %2580
    %v2582 = vlaneseq
    %v2583 = vshrl.u32 %v2582, 7
    %v2584 = vadd.s32 %v2583, 72
    %2585 = vset.pattern.permute.xlu0 %v2584
    %2586 = vperm.xlu0 %2585, %v2575
    %v2587 = vpop.permute.xlu0 %2586
    %v2588 = vperm.slane %v2286, 7
    %v2589 = vlaneseq
    %v2590 = vshrl.u32 %v2589, 7
    %v2591 = vadd.s32 %v2590, 64
    %2592 = vset.pattern.permute.xlu0 %v2591
    %2593 = vperm.xlu0 %2592, %v2588
    %v2594 = vpop.permute.xlu0 %2593
    %v2595 = vlaneseq
    %v2596 = vshrl.u32 %v2595, 7
    %v2597 = vadd.s32 %v2596, 72
    %2598 = vset.pattern.permute.xlu0 %v2597
    %2599 = vperm.xlu0 %2598, %v2588
    %v2600 = vpop.permute.xlu0 %2599
    %v2601 = vperm.slane %v2289, 0
    %v2602 = vlaneseq
    %v2603 = vshrl.u32 %v2602, 7
    %v2604 = vadd.s32 %v2603, 64
    %2605 = vset.pattern.permute.xlu0 %v2604
    %2606 = vperm.xlu0 %2605, %v2601
    %v2607 = vpop.permute.xlu0 %2606
    %v2608 = vlaneseq
    %v2609 = vshrl.u32 %v2608, 7
    %v2610 = vadd.s32 %v2609, 72
    %2611 = vset.pattern.permute.xlu0 %v2610
    %2612 = vperm.xlu0 %2611, %v2601
    %v2613 = vpop.permute.xlu0 %2612
    %v2614 = vperm.slane %v2289, 1
    %v2615 = vlaneseq
    %v2616 = vshrl.u32 %v2615, 7
    %v2617 = vadd.s32 %v2616, 64
    %2618 = vset.pattern.permute.xlu0 %v2617
    %2619 = vperm.xlu0 %2618, %v2614
    %v2620 = vpop.permute.xlu0 %2619
    %v2621 = vlaneseq
    %v2622 = vshrl.u32 %v2621, 7
    %v2623 = vadd.s32 %v2622, 72
    %2624 = vset.pattern.permute.xlu0 %v2623
    %2625 = vperm.xlu0 %2624, %v2614
    %v2626 = vpop.permute.xlu0 %2625
    %v2627 = vperm.slane %v2289, 2
    %v2628 = vlaneseq
    %v2629 = vshrl.u32 %v2628, 7
    %v2630 = vadd.s32 %v2629, 64
    %2631 = vset.pattern.permute.xlu0 %v2630
    %2632 = vperm.xlu0 %2631, %v2627
    %v2633 = vpop.permute.xlu0 %2632
    %v2634 = vlaneseq
    %v2635 = vshrl.u32 %v2634, 7
    %v2636 = vadd.s32 %v2635, 72
    %2637 = vset.pattern.permute.xlu0 %v2636
    %2638 = vperm.xlu0 %2637, %v2627
    %v2639 = vpop.permute.xlu0 %2638
    %v2640 = vperm.slane %v2289, 3
    %v2641 = vlaneseq
    %v2642 = vshrl.u32 %v2641, 7
    %v2643 = vadd.s32 %v2642, 64
    %2644 = vset.pattern.permute.xlu0 %v2643
    %2645 = vperm.xlu0 %2644, %v2640
    %v2646 = vpop.permute.xlu0 %2645
    %v2647 = vlaneseq
    %v2648 = vshrl.u32 %v2647, 7
    %v2649 = vadd.s32 %v2648, 72
    %2650 = vset.pattern.permute.xlu0 %v2649
    %2651 = vperm.xlu0 %2650, %v2640
    %v2652 = vpop.permute.xlu0 %2651
    %v2653 = vperm.slane %v2289, 4
    %v2654 = vlaneseq
    %v2655 = vshrl.u32 %v2654, 7
    %v2656 = vadd.s32 %v2655, 64
    %2657 = vset.pattern.permute.xlu0 %v2656
    %2658 = vperm.xlu0 %2657, %v2653
    %v2659 = vpop.permute.xlu0 %2658
    %v2660 = vlaneseq
    %v2661 = vshrl.u32 %v2660, 7
    %v2662 = vadd.s32 %v2661, 72
    %2663 = vset.pattern.permute.xlu0 %v2662
    %2664 = vperm.xlu0 %2663, %v2653
    %v2665 = vpop.permute.xlu0 %2664
    %v2666 = vperm.slane %v2289, 5
    %v2667 = vlaneseq
    %v2668 = vshrl.u32 %v2667, 7
    %v2669 = vadd.s32 %v2668, 64
    %2670 = vset.pattern.permute.xlu0 %v2669
    %2671 = vperm.xlu0 %2670, %v2666
    %v2672 = vpop.permute.xlu0 %2671
    %v2673 = vlaneseq
    %v2674 = vshrl.u32 %v2673, 7
    %v2675 = vadd.s32 %v2674, 72
    %2676 = vset.pattern.permute.xlu0 %v2675
    %2677 = vperm.xlu0 %2676, %v2666
    %v2678 = vpop.permute.xlu0 %2677
    %v2679 = vperm.slane %v2289, 6
    %v2680 = vlaneseq
    %v2681 = vshrl.u32 %v2680, 7
    %v2682 = vadd.s32 %v2681, 64
    %2683 = vset.pattern.permute.xlu0 %v2682
    %2684 = vperm.xlu0 %2683, %v2679
    %v2685 = vpop.permute.xlu0 %2684
    %v2686 = vlaneseq
    %v2687 = vshrl.u32 %v2686, 7
    %v2688 = vadd.s32 %v2687, 72
    %2689 = vset.pattern.permute.xlu0 %v2688
    %2690 = vperm.xlu0 %2689, %v2679
    %v2691 = vpop.permute.xlu0 %2690
    %v2692 = vperm.slane %v2289, 7
    %v2693 = vlaneseq
    %v2694 = vshrl.u32 %v2693, 7
    %v2695 = vadd.s32 %v2694, 64
    %2696 = vset.pattern.permute.xlu0 %v2695
    %2697 = vperm.xlu0 %2696, %v2692
    %v2698 = vpop.permute.xlu0 %2697
    %v2699 = vlaneseq
    %v2700 = vshrl.u32 %v2699, 7
    %v2701 = vadd.s32 %v2700, 72
    %2702 = vset.pattern.permute.xlu0 %v2701
    %2703 = vperm.xlu0 %2702, %v2692
    %v2704 = vpop.permute.xlu0 %2703
    %v2705 = vmul.f32 %v438, %v2555
    %v2706 = vmul.f32 %v438, %v2561
    %v2707 = vmul.f32 %v438, %v2568
    %v2708 = vmul.f32 %v438, %v2574
    %v2709 = vmul.f32 %v438, %v2581
    %v2710 = vmul.f32 %v438, %v2587
    %v2711 = vmul.f32 %v438, %v2594
    %v2712 = vmul.f32 %v438, %v2600
    %v2713 = vmul.f32 %v438, %v2607
    %v2714 = vmul.f32 %v438, %v2613
    %v2715 = vmul.f32 %v438, %v2620
    %v2716 = vmul.f32 %v438, %v2626
    %v2717 = vmul.f32 %v438, %v2633
    %v2718 = vmul.f32 %v438, %v2639
    %v2719 = vmul.f32 %v438, %v2646
    %v2720 = vmul.f32 %v438, %v2652
    %v2721 = vmul.f32 %v438, %v2659
    %v2722 = vmul.f32 %v438, %v2665
    %v2723 = vmul.f32 %v438, %v2672
    %v2724 = vmul.f32 %v438, %v2678
    %v2725 = vmul.f32 %v438, %v2685
    %v2726 = vmul.f32 %v438, %v2691
    %v2727 = vmul.f32 %v438, %v2698
    %v2728 = vmul.f32 %v438, %v2704
    %v2729 = vadd.f32 %v2525, %v2705
    %v2730 = vadd.f32 %v2526, %v2706
    %v2731 = vadd.f32 %v2527, %v2707
    %v2732 = vadd.f32 %v2528, %v2708
    %v2733 = vadd.f32 %v2529, %v2709
    %v2734 = vadd.f32 %v2530, %v2710
    %v2735 = vadd.f32 %v2531, %v2711
    %v2736 = vadd.f32 %v2532, %v2712
    %v2737 = vadd.f32 %v2533, %v2713
    %v2738 = vadd.f32 %v2534, %v2714
    %v2739 = vadd.f32 %v2535, %v2715
    %v2740 = vadd.f32 %v2536, %v2716
    %v2741 = vadd.f32 %v2537, %v2717
    %v2742 = vadd.f32 %v2538, %v2718
    %v2743 = vadd.f32 %v2539, %v2719
    %v2744 = vadd.f32 %v2540, %v2720
    %v2745 = vadd.f32 %v2541, %v2721
    %v2746 = vadd.f32 %v2542, %v2722
    %v2747 = vadd.f32 %v2543, %v2723
    %v2748 = vadd.f32 %v2544, %v2724
    %v2749 = vadd.f32 %v2545, %v2725
    %v2750 = vadd.f32 %v2546, %v2726
    %v2751 = vadd.f32 %v2547, %v2727
    %v2752 = vadd.f32 %v2548, %v2728
    %v2755 = vrot.slane %v2343, 1
    %v2756 = vrot.slane %v2343, 2
    %v2757 = vrot.slane %v2343, 3
    %v2758 = vrot.slane %v2343, 4
    %v2759 = vrot.slane %v2343, 5
    %v2760 = vrot.slane %v2343, 6
    %v2761 = vrot.slane %v2343, 7
    %v2762 = vrot.slane %v2344, 1
    %v2763 = vrot.slane %v2344, 2
    %v2764 = vrot.slane %v2344, 3
    %v2765 = vperm.slane %v2343, 0
    %v2766 = vperm.slane %v2755, 0
    %v2767 = vperm.slane %v2756, 0
    %v2768 = vperm.slane %v2757, 0
    %v2769 = vperm.slane %v2758, 0
    %v2770 = vperm.slane %v2759, 0
    %v2771 = vperm.slane %v2760, 0
    %v2772 = vperm.slane %v2761, 0
    %v2773 = vperm.slane %v2344, 0
    %v2774 = vperm.slane %v2762, 0
    %v2775 = vperm.slane %v2763, 0
    %v2776 = vperm.slane %v2764, 0
    %v2789 = vmul.f32 %v2765, %v2105
    %v2790 = vmul.f32 %v2765, %v2106
    %v2791 = vmul.f32 %v2766, %v2105
    %v2792 = vmul.f32 %v2766, %v2106
    %v2793 = vmul.f32 %v2767, %v2105
    %v2794 = vmul.f32 %v2767, %v2106
    %v2795 = vmul.f32 %v2768, %v2105
    %v2796 = vmul.f32 %v2768, %v2106
    %v2797 = vmul.f32 %v2769, %v2105
    %v2798 = vmul.f32 %v2769, %v2106
    %v2799 = vmul.f32 %v2770, %v2105
    %v2800 = vmul.f32 %v2770, %v2106
    %v2801 = vmul.f32 %v2771, %v2105
    %v2802 = vmul.f32 %v2771, %v2106
    %v2803 = vmul.f32 %v2772, %v2105
    %v2804 = vmul.f32 %v2772, %v2106
    %v2805 = vmul.f32 %v2773, %v2105
    %v2806 = vmul.f32 %v2773, %v2106
    %v2807 = vmul.f32 %v2774, %v2105
    %v2808 = vmul.f32 %v2774, %v2106
    %v2809 = vmul.f32 %v2775, %v2105
    %v2810 = vmul.f32 %v2775, %v2106
    %v2811 = vmul.f32 %v2776, %v2105
    %v2812 = vmul.f32 %v2776, %v2106
    %v2813 = vmul.f32 %v2789, 1.442695
    %v2814 = vpow.pop %v2813
    %v2815 = vmul.f32 %v2790, 1.442695
    %v2816 = vpow.pop %v2815
    %v2817 = vmul.f32 %v2791, 1.442695
    %v2818 = vpow.pop %v2817
    %v2819 = vmul.f32 %v2792, 1.442695
    %v2820 = vpow.pop %v2819
    %v2821 = vmul.f32 %v2793, 1.442695
    %v2822 = vpow.pop %v2821
    %v2823 = vmul.f32 %v2794, 1.442695
    %v2824 = vpow.pop %v2823
    %v2825 = vmul.f32 %v2795, 1.442695
    %v2826 = vpow.pop %v2825
    %v2827 = vmul.f32 %v2796, 1.442695
    %v2828 = vpow.pop %v2827
    %v2829 = vmul.f32 %v2797, 1.442695
    %v2830 = vpow.pop %v2829
    %v2831 = vmul.f32 %v2798, 1.442695
    %v2832 = vpow.pop %v2831
    %v2833 = vmul.f32 %v2799, 1.442695
    %v2834 = vpow.pop %v2833
    %v2835 = vmul.f32 %v2800, 1.442695
    %v2836 = vpow.pop %v2835
    %v2837 = vmul.f32 %v2801, 1.442695
    %v2838 = vpow.pop %v2837
    %v2839 = vmul.f32 %v2802, 1.442695
    %v2840 = vpow.pop %v2839
    %v2841 = vmul.f32 %v2803, 1.442695
    %v2842 = vpow.pop %v2841
    %v2843 = vmul.f32 %v2804, 1.442695
    %v2844 = vpow.pop %v2843
    %v2845 = vmul.f32 %v2805, 1.442695
    %v2846 = vpow.pop %v2845
    %v2847 = vmul.f32 %v2806, 1.442695
    %v2848 = vpow.pop %v2847
    %v2849 = vmul.f32 %v2807, 1.442695
    %v2850 = vpow.pop %v2849
    %v2851 = vmul.f32 %v2808, 1.442695
    %v2852 = vpow.pop %v2851
    %v2853 = vmul.f32 %v2809, 1.442695
    %v2854 = vpow.pop %v2853
    %v2855 = vmul.f32 %v2810, 1.442695
    %v2856 = vpow.pop %v2855
    %v2857 = vmul.f32 %v2811, 1.442695
    %v2858 = vpow.pop %v2857
    %v2859 = vmul.f32 %v2812, 1.442695
    %v2860 = vpow.pop %v2859
    %v2861 = vmul.f32 %v2343, %v2245
    %v2862 = vmul.f32 %v2344, %v2246
    %v2865 = vrot.slane %v2861, 1
    %v2866 = vrot.slane %v2861, 2
    %v2867 = vrot.slane %v2861, 3
    %v2868 = vrot.slane %v2861, 4
    %v2869 = vrot.slane %v2861, 5
    %v2870 = vrot.slane %v2861, 6
    %v2871 = vrot.slane %v2861, 7
    %v2872 = vrot.slane %v2862, 1
    %v2873 = vrot.slane %v2862, 2
    %v2874 = vrot.slane %v2862, 3
    %v2875 = vperm.slane %v2861, 0
    %v2876 = vperm.slane %v2865, 0
    %v2877 = vperm.slane %v2866, 0
    %v2878 = vperm.slane %v2867, 0
    %v2879 = vperm.slane %v2868, 0
    %v2880 = vperm.slane %v2869, 0
    %v2881 = vperm.slane %v2870, 0
    %v2882 = vperm.slane %v2871, 0
    %v2883 = vperm.slane %v2862, 0
    %v2884 = vperm.slane %v2872, 0
    %v2885 = vperm.slane %v2873, 0
    %v2886 = vperm.slane %v2874, 0
    %v2899 = vmul.f32 %v2875, %v2729
    %v2900 = vmul.f32 %v2875, %v2730
    %v2901 = vmul.f32 %v2876, %v2731
    %v2902 = vmul.f32 %v2876, %v2732
    %v2903 = vmul.f32 %v2877, %v2733
    %v2904 = vmul.f32 %v2877, %v2734
    %v2905 = vmul.f32 %v2878, %v2735
    %v2906 = vmul.f32 %v2878, %v2736
    %v2907 = vmul.f32 %v2879, %v2737
    %v2908 = vmul.f32 %v2879, %v2738
    %v2909 = vmul.f32 %v2880, %v2739
    %v2910 = vmul.f32 %v2880, %v2740
    %v2911 = vmul.f32 %v2881, %v2741
    %v2912 = vmul.f32 %v2881, %v2742
    %v2913 = vmul.f32 %v2882, %v2743
    %v2914 = vmul.f32 %v2882, %v2744
    %v2915 = vmul.f32 %v2883, %v2745
    %v2916 = vmul.f32 %v2883, %v2746
    %v2917 = vmul.f32 %v2884, %v2747
    %v2918 = vmul.f32 %v2884, %v2748
    %v2919 = vmul.f32 %v2885, %v2749
    %v2920 = vmul.f32 %v2885, %v2750
    %v2921 = vmul.f32 %v2886, %v2751
    %v2922 = vmul.f32 %v2886, %v2752
    %v2923 = vmul.f32 %v2814, 0.0
    %v2924 = vmul.f32 %v2816, 0.0
    %v2925 = vadd.f32 %v2923, %v2899
    %v2926 = vadd.f32 %v2924, %v2900
    %2927 = vst [vmem:[#allocation2] sm:$0xff] %v2925
    %2928 = vst [vmem:[#allocation2 + $0x8] sm:$0xff] %v2926
    %v2929 = vmul.f32 %v2925, %v2818
    %v2930 = vmul.f32 %v2926, %v2820
    %v2931 = vadd.f32 %v2929, %v2901
    %v2932 = vadd.f32 %v2930, %v2902
    %2933 = vst [vmem:[%s1285] sm:$0xff] %v2931
    %2934 = vst [vmem:[%s1285 + $0x8] sm:$0xff] %v2932
    %v2935 = vmul.f32 %v2931, %v2822
    %v2936 = vmul.f32 %v2932, %v2824
    %v2937 = vadd.f32 %v2935, %v2903
    %v2938 = vadd.f32 %v2936, %v2904
    %2939 = vst [vmem:[%s1292] sm:$0xff] %v2937
    %2940 = vst [vmem:[%s1292 + $0x8] sm:$0xff] %v2938
    %v2941 = vmul.f32 %v2937, %v2826
    %v2942 = vmul.f32 %v2938, %v2828
    %v2943 = vadd.f32 %v2941, %v2905
    %v2944 = vadd.f32 %v2942, %v2906
    %2945 = vst [vmem:[%s1299] sm:$0xff] %v2943
    %2946 = vst [vmem:[%s1299 + $0x8] sm:$0xff] %v2944
    %v2947 = vmul.f32 %v2943, %v2830
    %v2948 = vmul.f32 %v2944, %v2832
    %v2949 = vadd.f32 %v2947, %v2907
    %v2950 = vadd.f32 %v2948, %v2908
    %2951 = vst [vmem:[%s1306] sm:$0xff] %v2949
    %2952 = vst [vmem:[%s1306 + $0x8] sm:$0xff] %v2950
    %v2953 = vmul.f32 %v2949, %v2834
    %v2954 = vmul.f32 %v2950, %v2836
    %v2955 = vadd.f32 %v2953, %v2909
    %v2956 = vadd.f32 %v2954, %v2910
    %2957 = vst [vmem:[%s1313] sm:$0xff] %v2955
    %2958 = vst [vmem:[%s1313 + $0x8] sm:$0xff] %v2956
    %v2959 = vmul.f32 %v2955, %v2838
    %v2960 = vmul.f32 %v2956, %v2840
    %v2961 = vadd.f32 %v2959, %v2911
    %v2962 = vadd.f32 %v2960, %v2912
    %2963 = vst [vmem:[%s1320] sm:$0xff] %v2961
    %2964 = vst [vmem:[%s1320 + $0x8] sm:$0xff] %v2962
    %v2965 = vmul.f32 %v2961, %v2842
    %v2966 = vmul.f32 %v2962, %v2844
    %v2967 = vadd.f32 %v2965, %v2913
    %v2968 = vadd.f32 %v2966, %v2914
    %2969 = vst [vmem:[%s1327] sm:$0xff] %v2967
    %2970 = vst [vmem:[%s1327 + $0x8] sm:$0xff] %v2968
    %v2971 = vmul.f32 %v2967, %v2846
    %v2972 = vmul.f32 %v2968, %v2848
    %v2973 = vadd.f32 %v2971, %v2915
    %v2974 = vadd.f32 %v2972, %v2916
    %2975 = vst [vmem:[%s1334] sm:$0xff] %v2973
    %2976 = vst [vmem:[%s1334 + $0x8] sm:$0xff] %v2974
    %v2977 = vmul.f32 %v2973, %v2850
    %v2978 = vmul.f32 %v2974, %v2852
    %v2979 = vadd.f32 %v2977, %v2917
    %v2980 = vadd.f32 %v2978, %v2918
    %2981 = vst [vmem:[%s1341] sm:$0xff] %v2979
    %2982 = vst [vmem:[%s1341 + $0x8] sm:$0xff] %v2980
    %v2983 = vmul.f32 %v2979, %v2854
    %v2984 = vmul.f32 %v2980, %v2856
    %v2985 = vadd.f32 %v2983, %v2919
    %v2986 = vadd.f32 %v2984, %v2920
    %2987 = vst [vmem:[%s1348] sm:$0xff] %v2985
    %2988 = vst [vmem:[%s1348 + $0x8] sm:$0xff] %v2986
    %v2989 = vmul.f32 %v2985, %v2858
    %v2990 = vmul.f32 %v2986, %v2860
    %v2991 = vadd.f32 %v2989, %v2921
    %v2992 = vadd.f32 %v2990, %v2922
    %2993 = vst [vmem:[%s1355] sm:$0xff] %v2991
    %2994 = vst [vmem:[%s1355 + $0x8] sm:$0xff] %v2992
    %v2995 = vlaneseq
    %v2996 = vshrl.u32 %v2995, 7
    %v2997 = vadd.s32 %v2996, 80
    %2998 = vset.pattern.permute.xlu0 %v2997
    %2999 = vperm.xlu0 %2998, %v2345
    %v3000 = vpop.permute.xlu0 %2999
    %v3001 = vlaneseq
    %v3002 = vshrl.u32 %v3001, 7
    %v3003 = vadd.s32 %v3002, 88
    %3004 = vset.pattern.permute.xlu0 %v3003
    %3005 = vperm.xlu0 %3004, %v2345
    %v3006 = vpop.permute.xlu0 %3005
    %v3007 = vlaneseq
    %v3008 = vshrl.u32 %v3007, 7
    %v3009 = vadd.s32 %v3008, 80
    %3010 = vset.pattern.permute.xlu0 %v3009
    %3011 = vperm.xlu0 %3010, %v2358
    %v3012 = vpop.permute.xlu0 %3011
    %v3013 = vlaneseq
    %v3014 = vshrl.u32 %v3013, 7
    %v3015 = vadd.s32 %v3014, 88
    %3016 = vset.pattern.permute.xlu0 %v3015
    %3017 = vperm.xlu0 %3016, %v2358
    %v3018 = vpop.permute.xlu0 %3017
    %v3019 = vlaneseq
    %v3020 = vshrl.u32 %v3019, 7
    %v3021 = vadd.s32 %v3020, 80
    %3022 = vset.pattern.permute.xlu0 %v3021
    %3023 = vperm.xlu0 %3022, %v2371
    %v3024 = vpop.permute.xlu0 %3023
    %v3025 = vlaneseq
    %v3026 = vshrl.u32 %v3025, 7
    %v3027 = vadd.s32 %v3026, 88
    %3028 = vset.pattern.permute.xlu0 %v3027
    %3029 = vperm.xlu0 %3028, %v2371
    %v3030 = vpop.permute.xlu0 %3029
    %v3031 = vlaneseq
    %v3032 = vshrl.u32 %v3031, 7
    %v3033 = vadd.s32 %v3032, 80
    %3034 = vset.pattern.permute.xlu0 %v3033
    %3035 = vperm.xlu0 %3034, %v2384
    %v3036 = vpop.permute.xlu0 %3035
    %v3037 = vlaneseq
    %v3038 = vshrl.u32 %v3037, 7
    %v3039 = vadd.s32 %v3038, 88
    %3040 = vset.pattern.permute.xlu0 %v3039
    %3041 = vperm.xlu0 %3040, %v2384
    %v3042 = vpop.permute.xlu0 %3041
    %v3043 = vlaneseq
    %v3044 = vshrl.u32 %v3043, 7
    %v3045 = vadd.s32 %v3044, 80
    %3046 = vset.pattern.permute.xlu0 %v3045
    %3047 = vperm.xlu0 %3046, %v2397
    %v3048 = vpop.permute.xlu0 %3047
    %v3049 = vlaneseq
    %v3050 = vshrl.u32 %v3049, 7
    %v3051 = vadd.s32 %v3050, 88
    %3052 = vset.pattern.permute.xlu0 %v3051
    %3053 = vperm.xlu0 %3052, %v2397
    %v3054 = vpop.permute.xlu0 %3053
    %v3055 = vlaneseq
    %v3056 = vshrl.u32 %v3055, 7
    %v3057 = vadd.s32 %v3056, 80
    %3058 = vset.pattern.permute.xlu0 %v3057
    %3059 = vperm.xlu0 %3058, %v2410
    %v3060 = vpop.permute.xlu0 %3059
    %v3061 = vlaneseq
    %v3062 = vshrl.u32 %v3061, 7
    %v3063 = vadd.s32 %v3062, 88
    %3064 = vset.pattern.permute.xlu0 %v3063
    %3065 = vperm.xlu0 %3064, %v2410
    %v3066 = vpop.permute.xlu0 %3065
    %v3067 = vlaneseq
    %v3068 = vshrl.u32 %v3067, 7
    %v3069 = vadd.s32 %v3068, 80
    %3070 = vset.pattern.permute.xlu0 %v3069
    %3071 = vperm.xlu0 %3070, %v2423
    %v3072 = vpop.permute.xlu0 %3071
    %v3073 = vlaneseq
    %v3074 = vshrl.u32 %v3073, 7
    %v3075 = vadd.s32 %v3074, 88
    %3076 = vset.pattern.permute.xlu0 %v3075
    %3077 = vperm.xlu0 %3076, %v2423
    %v3078 = vpop.permute.xlu0 %3077
    %v3079 = vlaneseq
    %v3080 = vshrl.u32 %v3079, 7
    %v3081 = vadd.s32 %v3080, 80
    %3082 = vset.pattern.permute.xlu0 %v3081
    %3083 = vperm.xlu0 %3082, %v2436
    %v3084 = vpop.permute.xlu0 %3083
    %v3085 = vlaneseq
    %v3086 = vshrl.u32 %v3085, 7
    %v3087 = vadd.s32 %v3086, 88
    %3088 = vset.pattern.permute.xlu0 %v3087
    %3089 = vperm.xlu0 %3088, %v2436
    %v3090 = vpop.permute.xlu0 %3089
    %v3091 = vlaneseq
    %v3092 = vshrl.u32 %v3091, 7
    %v3093 = vadd.s32 %v3092, 80
    %3094 = vset.pattern.permute.xlu0 %v3093
    %3095 = vperm.xlu0 %3094, %v2449
    %v3096 = vpop.permute.xlu0 %3095
    %v3097 = vlaneseq
    %v3098 = vshrl.u32 %v3097, 7
    %v3099 = vadd.s32 %v3098, 88
    %3100 = vset.pattern.permute.xlu0 %v3099
    %3101 = vperm.xlu0 %3100, %v2449
    %v3102 = vpop.permute.xlu0 %3101
    %v3103 = vlaneseq
    %v3104 = vshrl.u32 %v3103, 7
    %v3105 = vadd.s32 %v3104, 80
    %3106 = vset.pattern.permute.xlu0 %v3105
    %3107 = vperm.xlu0 %3106, %v2462
    %v3108 = vpop.permute.xlu0 %3107
    %v3109 = vlaneseq
    %v3110 = vshrl.u32 %v3109, 7
    %v3111 = vadd.s32 %v3110, 88
    %3112 = vset.pattern.permute.xlu0 %v3111
    %3113 = vperm.xlu0 %3112, %v2462
    %v3114 = vpop.permute.xlu0 %3113
    %v3115 = vlaneseq
    %v3116 = vshrl.u32 %v3115, 7
    %v3117 = vadd.s32 %v3116, 80
    %3118 = vset.pattern.permute.xlu0 %v3117
    %3119 = vperm.xlu0 %3118, %v2475
    %v3120 = vpop.permute.xlu0 %3119
    %v3121 = vlaneseq
    %v3122 = vshrl.u32 %v3121, 7
    %v3123 = vadd.s32 %v3122, 88
    %3124 = vset.pattern.permute.xlu0 %v3123
    %3125 = vperm.xlu0 %3124, %v2475
    %v3126 = vpop.permute.xlu0 %3125
    %v3127 = vlaneseq
    %v3128 = vshrl.u32 %v3127, 7
    %v3129 = vadd.s32 %v3128, 80
    %3130 = vset.pattern.permute.xlu0 %v3129
    %3131 = vperm.xlu0 %3130, %v2488
    %v3132 = vpop.permute.xlu0 %3131
    %v3133 = vlaneseq
    %v3134 = vshrl.u32 %v3133, 7
    %v3135 = vadd.s32 %v3134, 88
    %3136 = vset.pattern.permute.xlu0 %v3135
    %3137 = vperm.xlu0 %3136, %v2488
    %v3138 = vpop.permute.xlu0 %3137
    %v3139 = vmul.f32 %v433, %v3000
    %v3140 = vmul.f32 %v433, %v3006
    %v3141 = vmul.f32 %v433, %v3012
    %v3142 = vmul.f32 %v433, %v3018
    %v3143 = vmul.f32 %v433, %v3024
    %v3144 = vmul.f32 %v433, %v3030
    %v3145 = vmul.f32 %v433, %v3036
    %v3146 = vmul.f32 %v433, %v3042
    %v3147 = vmul.f32 %v433, %v3048
    %v3148 = vmul.f32 %v433, %v3054
    %v3149 = vmul.f32 %v433, %v3060
    %v3150 = vmul.f32 %v433, %v3066
    %v3151 = vmul.f32 %v433, %v3072
    %v3152 = vmul.f32 %v433, %v3078
    %v3153 = vmul.f32 %v433, %v3084
    %v3154 = vmul.f32 %v433, %v3090
    %v3155 = vmul.f32 %v433, %v3096
    %v3156 = vmul.f32 %v433, %v3102
    %v3157 = vmul.f32 %v433, %v3108
    %v3158 = vmul.f32 %v433, %v3114
    %v3159 = vmul.f32 %v433, %v3120
    %v3160 = vmul.f32 %v433, %v3126
    %v3161 = vmul.f32 %v433, %v3132
    %v3162 = vmul.f32 %v433, %v3138
    %v3163 = vadd.f32 %v3139, 0.0
    %v3164 = vadd.f32 %v3140, 0.0
    %v3165 = vadd.f32 %v3141, 0.0
    %v3166 = vadd.f32 %v3142, 0.0
    %v3167 = vadd.f32 %v3143, 0.0
    %v3168 = vadd.f32 %v3144, 0.0
    %v3169 = vadd.f32 %v3145, 0.0
    %v3170 = vadd.f32 %v3146, 0.0
    %v3171 = vadd.f32 %v3147, 0.0
    %v3172 = vadd.f32 %v3148, 0.0
    %v3173 = vadd.f32 %v3149, 0.0
    %v3174 = vadd.f32 %v3150, 0.0
    %v3175 = vadd.f32 %v3151, 0.0
    %v3176 = vadd.f32 %v3152, 0.0
    %v3177 = vadd.f32 %v3153, 0.0
    %v3178 = vadd.f32 %v3154, 0.0
    %v3179 = vadd.f32 %v3155, 0.0
    %v3180 = vadd.f32 %v3156, 0.0
    %v3181 = vadd.f32 %v3157, 0.0
    %v3182 = vadd.f32 %v3158, 0.0
    %v3183 = vadd.f32 %v3159, 0.0
    %v3184 = vadd.f32 %v3160, 0.0
    %v3185 = vadd.f32 %v3161, 0.0
    %v3186 = vadd.f32 %v3162, 0.0
    %v3187 = vlaneseq
    %v3188 = vshrl.u32 %v3187, 7
    %v3189 = vadd.s32 %v3188, 80
    %3190 = vset.pattern.permute.xlu0 %v3189
    %3191 = vperm.xlu0 %3190, %v2549
    %v3192 = vpop.permute.xlu0 %3191
    %v3193 = vlaneseq
    %v3194 = vshrl.u32 %v3193, 7
    %v3195 = vadd.s32 %v3194, 88
    %3196 = vset.pattern.permute.xlu0 %v3195
    %3197 = vperm.xlu0 %3196, %v2549
    %v3198 = vpop.permute.xlu0 %3197
    %v3199 = vlaneseq
    %v3200 = vshrl.u32 %v3199, 7
    %v3201 = vadd.s32 %v3200, 80
    %3202 = vset.pattern.permute.xlu0 %v3201
    %3203 = vperm.xlu0 %3202, %v2562
    %v3204 = vpop.permute.xlu0 %3203
    %v3205 = vlaneseq
    %v3206 = vshrl.u32 %v3205, 7
    %v3207 = vadd.s32 %v3206, 88
    %3208 = vset.pattern.permute.xlu0 %v3207
    %3209 = vperm.xlu0 %3208, %v2562
    %v3210 = vpop.permute.xlu0 %3209
    %v3211 = vlaneseq
    %v3212 = vshrl.u32 %v3211, 7
    %v3213 = vadd.s32 %v3212, 80
    %3214 = vset.pattern.permute.xlu0 %v3213
    %3215 = vperm.xlu0 %3214, %v2575
    %v3216 = vpop.permute.xlu0 %3215
    %v3217 = vlaneseq
    %v3218 = vshrl.u32 %v3217, 7
    %v3219 = vadd.s32 %v3218, 88
    %3220 = vset.pattern.permute.xlu0 %v3219
    %3221 = vperm.xlu0 %3220, %v2575
    %v3222 = vpop.permute.xlu0 %3221
    %v3223 = vlaneseq
    %v3224 = vshrl.u32 %v3223, 7
    %v3225 = vadd.s32 %v3224, 80
    %3226 = vset.pattern.permute.xlu0 %v3225
    %3227 = vperm.xlu0 %3226, %v2588
    %v3228 = vpop.permute.xlu0 %3227
    %v3229 = vlaneseq
    %v3230 = vshrl.u32 %v3229, 7
    %v3231 = vadd.s32 %v3230, 88
    %3232 = vset.pattern.permute.xlu0 %v3231
    %3233 = vperm.xlu0 %3232, %v2588
    %v3234 = vpop.permute.xlu0 %3233
    %v3235 = vlaneseq
    %v3236 = vshrl.u32 %v3235, 7
    %v3237 = vadd.s32 %v3236, 80
    %3238 = vset.pattern.permute.xlu0 %v3237
    %3239 = vperm.xlu0 %3238, %v2601
    %v3240 = vpop.permute.xlu0 %3239
    %v3241 = vlaneseq
    %v3242 = vshrl.u32 %v3241, 7
    %v3243 = vadd.s32 %v3242, 88
    %3244 = vset.pattern.permute.xlu0 %v3243
    %3245 = vperm.xlu0 %3244, %v2601
    %v3246 = vpop.permute.xlu0 %3245
    %v3247 = vlaneseq
    %v3248 = vshrl.u32 %v3247, 7
    %v3249 = vadd.s32 %v3248, 80
    %3250 = vset.pattern.permute.xlu0 %v3249
    %3251 = vperm.xlu0 %3250, %v2614
    %v3252 = vpop.permute.xlu0 %3251
    %v3253 = vlaneseq
    %v3254 = vshrl.u32 %v3253, 7
    %v3255 = vadd.s32 %v3254, 88
    %3256 = vset.pattern.permute.xlu0 %v3255
    %3257 = vperm.xlu0 %3256, %v2614
    %v3258 = vpop.permute.xlu0 %3257
    %v3259 = vlaneseq
    %v3260 = vshrl.u32 %v3259, 7
    %v3261 = vadd.s32 %v3260, 80
    %3262 = vset.pattern.permute.xlu0 %v3261
    %3263 = vperm.xlu0 %3262, %v2627
    %v3264 = vpop.permute.xlu0 %3263
    %v3265 = vlaneseq
    %v3266 = vshrl.u32 %v3265, 7
    %v3267 = vadd.s32 %v3266, 88
    %3268 = vset.pattern.permute.xlu0 %v3267
    %3269 = vperm.xlu0 %3268, %v2627
    %v3270 = vpop.permute.xlu0 %3269
    %v3271 = vlaneseq
    %v3272 = vshrl.u32 %v3271, 7
    %v3273 = vadd.s32 %v3272, 80
    %3274 = vset.pattern.permute.xlu0 %v3273
    %3275 = vperm.xlu0 %3274, %v2640
    %v3276 = vpop.permute.xlu0 %3275
    %v3277 = vlaneseq
    %v3278 = vshrl.u32 %v3277, 7
    %v3279 = vadd.s32 %v3278, 88
    %3280 = vset.pattern.permute.xlu0 %v3279
    %3281 = vperm.xlu0 %3280, %v2640
    %v3282 = vpop.permute.xlu0 %3281
    %v3283 = vlaneseq
    %v3284 = vshrl.u32 %v3283, 7
    %v3285 = vadd.s32 %v3284, 80
    %3286 = vset.pattern.permute.xlu0 %v3285
    %3287 = vperm.xlu0 %3286, %v2653
    %v3288 = vpop.permute.xlu0 %3287
    %v3289 = vlaneseq
    %v3290 = vshrl.u32 %v3289, 7
    %v3291 = vadd.s32 %v3290, 88
    %3292 = vset.pattern.permute.xlu0 %v3291
    %3293 = vperm.xlu0 %3292, %v2653
    %v3294 = vpop.permute.xlu0 %3293
    %v3295 = vlaneseq
    %v3296 = vshrl.u32 %v3295, 7
    %v3297 = vadd.s32 %v3296, 80
    %3298 = vset.pattern.permute.xlu0 %v3297
    %3299 = vperm.xlu0 %3298, %v2666
    %v3300 = vpop.permute.xlu0 %3299
    %v3301 = vlaneseq
    %v3302 = vshrl.u32 %v3301, 7
    %v3303 = vadd.s32 %v3302, 88
    %3304 = vset.pattern.permute.xlu0 %v3303
    %3305 = vperm.xlu0 %3304, %v2666
    %v3306 = vpop.permute.xlu0 %3305
    %v3307 = vlaneseq
    %v3308 = vshrl.u32 %v3307, 7
    %v3309 = vadd.s32 %v3308, 80
    %3310 = vset.pattern.permute.xlu0 %v3309
    %3311 = vperm.xlu0 %3310, %v2679
    %v3312 = vpop.permute.xlu0 %3311
    %v3313 = vlaneseq
    %v3314 = vshrl.u32 %v3313, 7
    %v3315 = vadd.s32 %v3314, 88
    %3316 = vset.pattern.permute.xlu0 %v3315
    %3317 = vperm.xlu0 %3316, %v2679
    %v3318 = vpop.permute.xlu0 %3317
    %v3319 = vlaneseq
    %v3320 = vshrl.u32 %v3319, 7
    %v3321 = vadd.s32 %v3320, 80
    %3322 = vset.pattern.permute.xlu0 %v3321
    %3323 = vperm.xlu0 %3322, %v2692
    %v3324 = vpop.permute.xlu0 %3323
    %v3325 = vlaneseq
    %v3326 = vshrl.u32 %v3325, 7
    %v3327 = vadd.s32 %v3326, 88
    %3328 = vset.pattern.permute.xlu0 %v3327
    %3329 = vperm.xlu0 %3328, %v2692
    %v3330 = vpop.permute.xlu0 %3329
    %v3331 = vmul.f32 %v438, %v3192
    %v3332 = vmul.f32 %v438, %v3198
    %v3333 = vmul.f32 %v438, %v3204
    %v3334 = vmul.f32 %v438, %v3210
    %v3335 = vmul.f32 %v438, %v3216
    %v3336 = vmul.f32 %v438, %v3222
    %v3337 = vmul.f32 %v438, %v3228
    %v3338 = vmul.f32 %v438, %v3234
    %v3339 = vmul.f32 %v438, %v3240
    %v3340 = vmul.f32 %v438, %v3246
    %v3341 = vmul.f32 %v438, %v3252
    %v3342 = vmul.f32 %v438, %v3258
    %v3343 = vmul.f32 %v438, %v3264
    %v3344 = vmul.f32 %v438, %v3270
    %v3345 = vmul.f32 %v438, %v3276
    %v3346 = vmul.f32 %v438, %v3282
    %v3347 = vmul.f32 %v438, %v3288
    %v3348 = vmul.f32 %v438, %v3294
    %v3349 = vmul.f32 %v438, %v3300
    %v3350 = vmul.f32 %v438, %v3306
    %v3351 = vmul.f32 %v438, %v3312
    %v3352 = vmul.f32 %v438, %v3318
    %v3353 = vmul.f32 %v438, %v3324
    %v3354 = vmul.f32 %v438, %v3330
    %v3355 = vadd.f32 %v3163, %v3331
    %v3356 = vadd.f32 %v3164, %v3332
    %v3357 = vadd.f32 %v3165, %v3333
    %v3358 = vadd.f32 %v3166, %v3334
    %v3359 = vadd.f32 %v3167, %v3335
    %v3360 = vadd.f32 %v3168, %v3336
    %v3361 = vadd.f32 %v3169, %v3337
    %v3362 = vadd.f32 %v3170, %v3338
    %v3363 = vadd.f32 %v3171, %v3339
    %v3364 = vadd.f32 %v3172, %v3340
    %v3365 = vadd.f32 %v3173, %v3341
    %v3366 = vadd.f32 %v3174, %v3342
    %v3367 = vadd.f32 %v3175, %v3343
    %v3368 = vadd.f32 %v3176, %v3344
    %v3369 = vadd.f32 %v3177, %v3345
    %v3370 = vadd.f32 %v3178, %v3346
    %v3371 = vadd.f32 %v3179, %v3347
    %v3372 = vadd.f32 %v3180, %v3348
    %v3373 = vadd.f32 %v3181, %v3349
    %v3374 = vadd.f32 %v3182, %v3350
    %v3375 = vadd.f32 %v3183, %v3351
    %v3376 = vadd.f32 %v3184, %v3352
    %v3377 = vadd.f32 %v3185, %v3353
    %v3378 = vadd.f32 %v3186, %v3354
    %v3379 = vld [vmem:[#allocation2] sm:$0xff]
    %v3380 = vld [vmem:[#allocation2 + $0x8] sm:$0xff]
    %v3381 = vld [vmem:[#allocation2 + $0x10] sm:$0xff]
    %v3382 = vld [vmem:[#allocation2 + $0x18] sm:$0xff]
    %v3383 = vld [vmem:[#allocation2 + $0x20] sm:$0xff]
    %v3384 = vld [vmem:[#allocation2 + $0x28] sm:$0xff]
    %v3385 = vld [vmem:[#allocation2 + $0x30] sm:$0xff]
    %v3386 = vld [vmem:[#allocation2 + $0x38] sm:$0xff]
    %v3387 = vld [vmem:[#allocation2 + $0x40] sm:$0xff]
    %v3388 = vld [vmem:[#allocation2 + $0x48] sm:$0xff]
    %v3389 = vld [vmem:[#allocation2 + $0x50] sm:$0xff]
    %v3390 = vld [vmem:[#allocation2 + $0x58] sm:$0xff]
    %v3391 = vld [vmem:[#allocation2 + $0x60] sm:$0xff]
    %v3392 = vld [vmem:[#allocation2 + $0x68] sm:$0xff]
    %v3393 = vld [vmem:[#allocation2 + $0x70] sm:$0xff]
    %v3394 = vld [vmem:[#allocation2 + $0x78] sm:$0xff]
    %v3395 = vld [vmem:[#allocation2 + $0x80] sm:$0xff]
    %v3396 = vld [vmem:[#allocation2 + $0x88] sm:$0xff]
    %v3397 = vld [vmem:[#allocation2 + $0x90] sm:$0xff]
    %v3398 = vld [vmem:[#allocation2 + $0x98] sm:$0xff]
    %v3399 = vld [vmem:[#allocation2 + $0xa0] sm:$0xff]
    %v3400 = vld [vmem:[#allocation2 + $0xa8] sm:$0xff]
    %v3401 = vld [vmem:[#allocation2 + $0xb0] sm:$0xff]
    %v3402 = vld [vmem:[#allocation2 + $0xb8] sm:$0xff]
    %v3403 = vmul.f32 %v3379, %v3355
    %v3404 = vmul.f32 %v3380, %v3356
    %v3405 = vmul.f32 %v3381, %v3357
    %v3406 = vmul.f32 %v3382, %v3358
    %v3407 = vmul.f32 %v3383, %v3359
    %v3408 = vmul.f32 %v3384, %v3360
    %v3409 = vmul.f32 %v3385, %v3361
    %v3410 = vmul.f32 %v3386, %v3362
    %v3411 = vmul.f32 %v3387, %v3363
    %v3412 = vmul.f32 %v3388, %v3364
    %v3413 = vmul.f32 %v3389, %v3365
    %v3414 = vmul.f32 %v3390, %v3366
    %v3415 = vmul.f32 %v3391, %v3367
    %v3416 = vmul.f32 %v3392, %v3368
    %v3417 = vmul.f32 %v3393, %v3369
    %v3418 = vmul.f32 %v3394, %v3370
    %v3419 = vmul.f32 %v3395, %v3371
    %v3420 = vmul.f32 %v3396, %v3372
    %v3421 = vmul.f32 %v3397, %v3373
    %v3422 = vmul.f32 %v3398, %v3374
    %v3423 = vmul.f32 %v3399, %v3375
    %v3424 = vmul.f32 %v3400, %v3376
    %v3425 = vmul.f32 %v3401, %v3377
    %v3426 = vmul.f32 %v3402, %v3378
    %v3427 = vadd.f32 %v3403, %v3404
    %v3428 = vrot.slane %v3427, 4
    %v3429 = vadd.f32 %v3427, %v3428
    %v3430 = vrot.slane %v3429, 2
    %v3431 = vadd.f32 %v3429, %v3430
    %v3432 = vrot.slane %v3431, 1
    %v3433 = vadd.f32 %v3431, %v3432
    %v3434 = vadd.f32 %v3405, %v3406
    %v3435 = vrot.slane %v3434, 4
    %v3436 = vadd.f32 %v3434, %v3435
    %v3437 = vrot.slane %v3436, 2
    %v3438 = vadd.f32 %v3436, %v3437
    %v3439 = vrot.slane %v3438, 1
    %v3440 = vadd.f32 %v3438, %v3439
    %v3441 = vadd.f32 %v3407, %v3408
    %v3442 = vrot.slane %v3441, 4
    %v3443 = vadd.f32 %v3441, %v3442
    %v3444 = vrot.slane %v3443, 2
    %v3445 = vadd.f32 %v3443, %v3444
    %v3446 = vrot.slane %v3445, 1
    %v3447 = vadd.f32 %v3445, %v3446
    %v3448 = vadd.f32 %v3409, %v3410
    %v3449 = vrot.slane %v3448, 4
    %v3450 = vadd.f32 %v3448, %v3449
    %v3451 = vrot.slane %v3450, 2
    %v3452 = vadd.f32 %v3450, %v3451
    %v3453 = vrot.slane %v3452, 1
    %v3454 = vadd.f32 %v3452, %v3453
    %v3455 = vadd.f32 %v3411, %v3412
    %v3456 = vrot.slane %v3455, 4
    %v3457 = vadd.f32 %v3455, %v3456
    %v3458 = vrot.slane %v3457, 2
    %v3459 = vadd.f32 %v3457, %v3458
    %v3460 = vrot.slane %v3459, 1
    %v3461 = vadd.f32 %v3459, %v3460
    %v3462 = vadd.f32 %v3413, %v3414
    %v3463 = vrot.slane %v3462, 4
    %v3464 = vadd.f32 %v3462, %v3463
    %v3465 = vrot.slane %v3464, 2
    %v3466 = vadd.f32 %v3464, %v3465
    %v3467 = vrot.slane %v3466, 1
    %v3468 = vadd.f32 %v3466, %v3467
    %v3469 = vadd.f32 %v3415, %v3416
    %v3470 = vrot.slane %v3469, 4
    %v3471 = vadd.f32 %v3469, %v3470
    %v3472 = vrot.slane %v3471, 2
    %v3473 = vadd.f32 %v3471, %v3472
    %v3474 = vrot.slane %v3473, 1
    %v3475 = vadd.f32 %v3473, %v3474
    %v3476 = vadd.f32 %v3417, %v3418
    %v3477 = vrot.slane %v3476, 4
    %v3478 = vadd.f32 %v3476, %v3477
    %v3479 = vrot.slane %v3478, 2
    %v3480 = vadd.f32 %v3478, %v3479
    %v3481 = vrot.slane %v3480, 1
    %v3482 = vadd.f32 %v3480, %v3481
    %v3483 = vadd.f32 %v3419, %v3420
    %v3484 = vrot.slane %v3483, 4
    %v3485 = vadd.f32 %v3483, %v3484
    %v3486 = vrot.slane %v3485, 2
    %v3487 = vadd.f32 %v3485, %v3486
    %v3488 = vrot.slane %v3487, 1
    %v3489 = vadd.f32 %v3487, %v3488
    %v3490 = vadd.f32 %v3421, %v3422
    %v3491 = vrot.slane %v3490, 4
    %v3492 = vadd.f32 %v3490, %v3491
    %v3493 = vrot.slane %v3492, 2
    %v3494 = vadd.f32 %v3492, %v3493
    %v3495 = vrot.slane %v3494, 1
    %v3496 = vadd.f32 %v3494, %v3495
    %v3497 = vadd.f32 %v3423, %v3424
    %v3498 = vrot.slane %v3497, 4
    %v3499 = vadd.f32 %v3497, %v3498
    %v3500 = vrot.slane %v3499, 2
    %v3501 = vadd.f32 %v3499, %v3500
    %v3502 = vrot.slane %v3501, 1
    %v3503 = vadd.f32 %v3501, %v3502
    %v3504 = vadd.f32 %v3425, %v3426
    %v3505 = vrot.slane %v3504, 4
    %v3506 = vadd.f32 %v3504, %v3505
    %v3507 = vrot.slane %v3506, 2
    %v3508 = vadd.f32 %v3506, %v3507
    %v3509 = vrot.slane %v3508, 1
    %v3510 = vadd.f32 %v3508, %v3509
    %v3512 = vperm.slane %v2107, 0
    %v3514 = vmul.f32 %v3512, %v2245
    %v3515 = vmul.f32 %v3512, %v2246
    %v3518 = vrot.slane %v3514, 1
    %v3519 = vrot.slane %v3514, 2
    %v3520 = vrot.slane %v3514, 3
    %v3521 = vrot.slane %v3514, 4
    %v3522 = vrot.slane %v3514, 5
    %v3523 = vrot.slane %v3514, 6
    %v3524 = vrot.slane %v3514, 7
    %v3525 = vrot.slane %v3515, 1
    %v3526 = vrot.slane %v3515, 2
    %v3527 = vrot.slane %v3515, 3
    %v3540 = vadd.f32 %v3433, %v3514
    %v3541 = vadd.f32 %v3440, %v3518
    %v3542 = vadd.f32 %v3447, %v3519
    %v3543 = vadd.f32 %v3454, %v3520
    %v3544 = vadd.f32 %v3461, %v3521
    %v3545 = vadd.f32 %v3468, %v3522
    %v3546 = vadd.f32 %v3475, %v3523
    %v3547 = vadd.f32 %v3482, %v3524
    %v3548 = vadd.f32 %v3489, %v3515
    %v3549 = vadd.f32 %v3496, %v3525
    %v3550 = vadd.f32 %v3503, %v3526
    %v3551 = vadd.f32 %v3510, %v3527
    %v3564 = vrot.slane %v3541, 7
    %v3565 = vsel %vm300, %v3564, %v3540
    %v3566 = vrot.slane %v3542, 6
    %v3567 = vsel %vm303, %v3566, %v3565
    %v3568 = vrot.slane %v3543, 5
    %v3569 = vsel %vm306, %v3568, %v3567
    %v3570 = vrot.slane %v3544, 4
    %v3571 = vsel %vm309, %v3570, %v3569
    %v3572 = vrot.slane %v3545, 3
    %v3573 = vsel %vm1936, %v3572, %v3571
    %v3574 = vrot.slane %v3546, 2
    %v3575 = vsel %vm1939, %v3574, %v3573
    %v3576 = vrot.slane %v3547, 1
    %v3577 = vsel %vm1942, %v3576, %v3575
    %v3578 = vrot.slane %v3549, 7
    %v3579 = vsel %vm300, %v3578, %v3548
    %v3580 = vrot.slane %v3550, 6
    %v3581 = vsel %vm303, %v3580, %v3579
    %v3582 = vrot.slane %v3551, 5
    %v3583 = vsel %vm306, %v3582, %v3581
    %v3586 = vrot.slane %v3540, 4
    %v3587 = vrot.slane %v3541, 3
    %v3588 = vsel %vm1936, %v3587, %v3586
    %v3589 = vrot.slane %v3542, 2
    %v3590 = vsel %vm1939, %v3589, %v3588
    %v3591 = vrot.slane %v3543, 1
    %v3592 = vsel %vm1942, %v3591, %v3590
    %v3593 = vrot.slane %v3545, 7
    %v3594 = vsel %vm300, %v3593, %v3544
    %v3595 = vrot.slane %v3546, 6
    %v3596 = vsel %vm303, %v3595, %v3594
    %v3597 = vrot.slane %v3547, 5
    %v3598 = vsel %vm306, %v3597, %v3596
    %v3599 = vrot.slane %v3548, 4
    %v3600 = vsel %vm309, %v3599, %v3598
    %v3601 = vrot.slane %v3549, 3
    %v3602 = vsel %vm1936, %v3601, %v3600
    %v3603 = vrot.slane %v3550, 2
    %v3604 = vsel %vm1939, %v3603, %v3602
    %v3605 = vrot.slane %v3551, 1
    %v3606 = vsel %vm1942, %v3605, %v3604
    %3607 = vrot.lane.b32.xlu0 %v3592, 64
    %v3608 = vpop.permute.xlu0 %3607
    %3609 = vrot.lane.b32.xlu0 %v3606, 64
    %v3610 = vpop.permute.xlu0 %3609
    %v3613 = vsel %vm423, %v3583, %v3608
    %v3614 = vxor.u32 %v2143, 2147483648
    %v3615 = vxor.u32 %v2146, 2147483648
    %v3616 = vxor.u32 %v2149, 2147483648
    %v3617 = vmul.f32 %v3614, 1.442695
    %v3618 = vpow.pop %v3617
    %v3619 = vmul.f32 %v3615, 1.442695
    %v3620 = vpow.pop %v3619
    %v3621 = vmul.f32 %v3616, 1.442695
    %v3622 = vpow.pop %v3621
    %v3623 = vadd.f32 %v3618, 1.0
    %v3624 = vadd.f32 %v3620, 1.0
    %v3625 = vadd.f32 %v3622, 1.0
    %v3626 = vrcp.pop %v3623
    %v3627 = vmul.f32 %v3623, %v3626
    %v3628 = vsub.f32 1.0, %v3627
    %v3629 = vmul.f32 %v3626, %v3628
    %v3630 = vadd.f32 %v3626, %v3629
    %vm3631 = vweird.f32 %v3623
    %vm3632 = vweird.f32 %v3626
    %vm3633 = vmor %vm3631, %vm3632
    %v3634 = vsel %vm3633, %v3626, %v3630
    %v3635 = vand.u32 2147483647, %v3623
    %vm3636 = vcmp.eq.f32.partialorder %v3635, 8.507059e+37
    %v3637 = vand.u32 %v3623, 2147483648
    %v3638 = vor.u32 1.1754944e-38, %v3637
    %v3639 = vsel %vm3636, %v3638, %v3634
    %v3640 = vmul.f32 1.0, %v3639
    %v3641 = vrcp.pop %v3624
    %v3642 = vmul.f32 %v3624, %v3641
    %v3643 = vsub.f32 1.0, %v3642
    %v3644 = vmul.f32 %v3641, %v3643
    %v3645 = vadd.f32 %v3641, %v3644
    %vm3646 = vweird.f32 %v3624
    %vm3647 = vweird.f32 %v3641
    %vm3648 = vmor %vm3646, %vm3647
    %v3649 = vsel %vm3648, %v3641, %v3645
    %v3650 = vand.u32 2147483647, %v3624
    %vm3651 = vcmp.eq.f32.partialorder %v3650, 8.507059e+37
    %v3652 = vand.u32 %v3624, 2147483648
    %v3653 = vor.u32 1.1754944e-38, %v3652
    %v3654 = vsel %vm3651, %v3653, %v3649
    %v3655 = vmul.f32 1.0, %v3654
    %v3656 = vrcp.pop %v3625
    %v3657 = vmul.f32 %v3625, %v3656
    %v3658 = vsub.f32 1.0, %v3657
    %v3659 = vmul.f32 %v3656, %v3658
    %v3660 = vadd.f32 %v3656, %v3659
    %vm3661 = vweird.f32 %v3625
    %vm3662 = vweird.f32 %v3656
    %vm3663 = vmor %vm3661, %vm3662
    %v3664 = vsel %vm3663, %v3656, %v3660
    %v3665 = vand.u32 2147483647, %v3625
    %vm3666 = vcmp.eq.f32.partialorder %v3665, 8.507059e+37
    %v3667 = vand.u32 %v3625, 2147483648
    %v3668 = vor.u32 1.1754944e-38, %v3667
    %v3669 = vsel %vm3666, %v3668, %v3664
    %v3670 = vmul.f32 1.0, %v3669
    %v3671 = vmul.f32 %v2143, %v3640
    %v3672 = vmul.f32 %v2146, %v3655
    %v3673 = vmul.f32 %v2149, %v3670
    %3677 = vrot.lane.b32.xlu0 %v3671, 64
    %v3678 = vpop.permute.xlu0 %3677
    %3679 = vrot.lane.b32.xlu0 %v3672, 64
    %v3680 = vpop.permute.xlu0 %3679
    %3681 = vrot.lane.b32.xlu0 %v3673, 64
    %v3682 = vpop.permute.xlu0 %3681
    %v3686 = vmul.f32 %v3577, %v3678
    %v3687 = vmul.f32 %v3613, %v3680
    %v3688 = vmul.f32 %v3610, %v3682
    %v3690 = vsel %vm511, %v3686, 0
    %v3693 = vsel %vm511, %v3687, 0
    %v3696 = vsel %vm511, %v3688, 0
    %3698 = vmatpush.msra.mxu0 0.0
    %3699 = vmatpush.msra.mxu0 0.0
    %3700 = vmatpush.msra.mxu0 0.0
    %3701 = vmatpush.msra.mxu0 0.0
    %3702 = vmatpush.msra.mxu0 0.0
    %3703 = vmatpush.msra.mxu0 0.0
    %3704 = vmatpush.msra.mxu0 0.0
    %3705 = vmatpush.msra.mxu0 0.0
    %3706 = vmatpush.msra.mxu0 %v2115
    %3707 = vmatpush.msra.mxu0 %v2114
    %3708 = vmatpush.msra.mxu0 %v2113
    %3709 = vmatpush.msra.mxu0 %v2112
    %3710 = vmatpush.msra.mxu0 %v2111
    %3711 = vmatpush.msra.mxu0 %v2110
    %3712 = vmatpush.msra.mxu0 %v2109
    %3713 = vmatpush.msra.mxu0 %v2108
    %3714 = vmatmul.f32.gmra.mxu0 %v3690
    %v3715 = vpop.f32.mrf.mxu0
    %v3716 = vadd.f32 0.0, %v3715
    %3717 = vmatmul.f32.gmra.mxu0 %v3693
    %v3718 = vpop.f32.mrf.mxu0
    %v3719 = vadd.f32 0.0, %v3718
    %3720 = vmatmul.f32.gmra.mxu0 %v3696
    %v3721 = vpop.f32.mrf.mxu0
    %v3722 = vadd.f32 0.0, %v3721
    %3723 = vdwg.mxu0
    %v3725 = vrot.slane %v3719, 3
    %v3727 = vsel %vm261, %v3716, %v3725
    %vm3728 = vcmask 254976
    %3729 = vst.msk [vmem:[#allocation21] sm:$0x3] %vm3728, %v3727
    %vm3731 = vcmask 1046528
    %v3732 = vrot.slane %v3716, 1
    %v3733 = vrot.slane %v3719, 1
    %v3734 = vsel %vm3731, %v3732, %v3733
    %vm3737 = vcmask 1045504
    %v3738 = vrot.slane %v3719, 2
    %v3739 = vrot.slane %v3722, 2
    %v3740 = vsel %vm3737, %v3738, %v3739
    %v3742 = vsel %vm547, %v3733, %v3740
    %v3743 = vld [vmem:[%s20] sm:$0xff]
    %v3744 = vld [vmem:[%s20 + $0x8] sm:$0xff]
    %v3745 = vld [vmem:[%s20 + $0x10] sm:$0xff]
    %v3746 = vld [vmem:[%s20 + $0x18] sm:$0xff]
    %v3747 = vld [vmem:[#allocation20] sm:$0x1]
    %v3749 = vperm.slane %v3747, 0
    %v3751 = vsel %vm465, %v3734, 0
    %v3754 = vsel %vm465, %v3742, 0
    %v3756 = vsel %vm465, %v3739, 0
    %3758 = vmatpush.msra.mxu0 0.0
    %3759 = vmatpush.msra.mxu0 0.0
    %3760 = vmatpush.msra.mxu0 0.0
    %3761 = vmatpush.msra.mxu0 0.0
    %3762 = vmatpush.msra.mxu0 0.0
    %3763 = vmatpush.msra.mxu0 0.0
    %3764 = vmatpush.msra.mxu0 0.0
    %3765 = vmatpush.msra.mxu0 0.0
    %3766 = vmatpush.msra.mxu0 0.0
    %3767 = vmatpush.msra.mxu0 0.0
    %3768 = vmatpush.msra.mxu0 0.0
    %3769 = vmatpush.msra.mxu0 0.0
    %3770 = vmatpush.msra.mxu0 %v3746
    %3771 = vmatpush.msra.mxu0 %v3745
    %3772 = vmatpush.msra.mxu0 %v3744
    %3773 = vmatpush.msra.mxu0 %v3743
    %3774 = vmatmul.f32.gmra.mxu0 %v3751
    %v3775 = vpop.f32.mrf.mxu0
    %v3776 = vadd.f32 %v3749, %v3775
    %3777 = vmatmul.f32.gmra.mxu0 %v3754
    %v3778 = vpop.f32.mrf.mxu0
    %v3779 = vadd.f32 %v3749, %v3778
    %3780 = vmatmul.f32.gmra.mxu0 %v3756
    %v3781 = vpop.f32.mrf.mxu0
    %v3782 = vadd.f32 %v3749, %v3781
    %3783 = vdwg.mxu0
    %v3787 = vrot.slane %v3776, 1
    %v3788 = vrot.slane %v3776, 2
    %v3789 = vrot.slane %v3776, 3
    %v3790 = vrot.slane %v3776, 4
    %v3791 = vrot.slane %v3776, 5
    %v3792 = vrot.slane %v3776, 6
    %v3793 = vrot.slane %v3776, 7
    %v3794 = vrot.slane %v3779, 1
    %v3795 = vrot.slane %v3779, 2
    %v3796 = vrot.slane %v3779, 3
    %v3797 = vrot.slane %v3779, 4
    %v3798 = vrot.slane %v3779, 5
    %v3799 = vrot.slane %v3779, 6
    %v3800 = vrot.slane %v3779, 7
    %v3801 = vrot.slane %v3782, 1
    %v3802 = vrot.slane %v3782, 2
    %v3803 = vrot.slane %v3782, 3
    %v3804 = vrot.slane %v3782, 4
    %v3805 = vrot.slane %v3782, 5
    %3806 = vst [vmem:[#allocation1] ss:$9 sm:$0xff] %v3776
    %s3807 = scalar_lea.vmem [#allocation1], 1
    %3808 = vst [vmem:[%s3807] ss:$9 sm:$0xff] %v3787
    %s3809 = scalar_lea.vmem [#allocation1], 2
    %3810 = vst [vmem:[%s3809] ss:$9 sm:$0xff] %v3788
    %s3811 = scalar_lea.vmem [#allocation1], 3
    %3812 = vst [vmem:[%s3811] ss:$9 sm:$0xff] %v3789
    %s3813 = scalar_lea.vmem [#allocation1], 4
    %3814 = vst [vmem:[%s3813] ss:$9 sm:$0xff] %v3790
    %s3815 = scalar_lea.vmem [#allocation1], 5
    %3816 = vst [vmem:[%s3815] ss:$9 sm:$0xff] %v3791
    %s3817 = scalar_lea.vmem [#allocation1], 6
    %3818 = vst [vmem:[%s3817] ss:$9 sm:$0xff] %v3792
    %s3819 = scalar_lea.vmem [#allocation1], 7
    %3820 = vst [vmem:[%s3819] ss:$9 sm:$0xff] %v3793
    %v3821 = vld [vmem:[#allocation1] sm:$0xff]
    %3822 = vst [vmem:[#allocation1] ss:$9 sm:$0xff] %v3779
    %3823 = vst [vmem:[%s3807] ss:$9 sm:$0xff] %v3794
    %3824 = vst [vmem:[%s3809] ss:$9 sm:$0xff] %v3795
    %v3825 = vld [vmem:[#allocation1] sm:$0xff]
    %3826 = vst [vmem:[#allocation1] ss:$9 sm:$0xff] %v3796
    %3827 = vst [vmem:[%s3807] ss:$9 sm:$0xff] %v3797
    %3828 = vst [vmem:[%s3809] ss:$9 sm:$0xff] %v3798
    %3829 = vst [vmem:[%s3811] ss:$9 sm:$0xff] %v3799
    %3830 = vst [vmem:[%s3813] ss:$9 sm:$0xff] %v3800
    %3831 = vst [vmem:[%s3815] ss:$9 sm:$0xff] %v3782
    %3832 = vst [vmem:[%s3817] ss:$9 sm:$0xff] %v3801
    %3833 = vst [vmem:[%s3819] ss:$9 sm:$0xff] %v3802
    %v3834 = vld [vmem:[#allocation1] sm:$0xff]
    %3835 = vst [vmem:[#allocation1] ss:$9 sm:$0xff] %v3803
    %3836 = vst [vmem:[%s3807] ss:$9 sm:$0xff] %v3804
    %3837 = vst [vmem:[%s3809] ss:$9 sm:$0xff] %v3805
    %v3838 = vld [vmem:[#allocation1] sm:$0xff]
    %vm3843 = vcmask 80896
    %3844 = vst.msk [vmem:[%s22] sm:$0xff] %vm3843, %v3821
    %vm3845 = vcmask 75776
    %3846 = vst.msk [vmem:[%s22 + $0x8] sm:$0x7] %vm3845, %v3825
    %3847 = vst.msk [vmem:[%s22 + $0x10] sm:$0xff] %vm3843, %v3834
    %3848 = vst.msk [vmem:[%s22 + $0x18] sm:$0x7] %vm3845, %v3838
    %vm3849 = vcmp.ge.s32.totalorder %v230, 4
    %vm3850 = vcmp.ge.s32.totalorder %v231, 4
    %v3851 = vsel %vm3849, 1, 0
    %v3852 = vsel %vm3850, 1, 0
    %v3853 = vcvt.s32.f32 %v3851
    %v3854 = vcvt.s32.f32 %v3852
    %3856 = vset.pattern.permute.xlu0 0
    %3857 = vperm.xlu0 %3856, %v3853
    %v3858 = vpop.permute.xlu0 %3857
    %3861 = vset.pattern.permute.xlu0 0
    %3862 = vperm.xlu0 %3861, %v3854
    %v3863 = vpop.permute.xlu0 %3862
    %3865 = vset.pattern.permute.xlu0 1
    %3866 = vperm.xlu0 %3865, %v3853
    %v3867 = vpop.permute.xlu0 %3866
    %3869 = vset.pattern.permute.xlu0 1
    %3870 = vperm.xlu0 %3869, %v3854
    %v3871 = vpop.permute.xlu0 %3870
    %3873 = vst.msk [vmem:[%s23] sm:$0xff] %vm3843, %v3858
    %3874 = vst.msk [vmem:[%s23 + $0x8] sm:$0x7] %vm3845, %v3863
    %3875 = vst.msk [vmem:[%s23 + $0x10] sm:$0xff] %vm3843, %v3867
    %3876 = vst.msk [vmem:[%s23 + $0x18] sm:$0x7] %vm3845, %v3871
    // Predicated region
    $region134: #{adt_decoder_forward.1} parent=1 // pred_check
      _
    $region135: #{adt_decoder_forward.1} parent=1 // pred_check_branch
      %3878 = sbr.rel (0) target = $region137
    $region136: #{adt_decoder_forward.1} parent=1 // pred_region
      _
    $region137: #{adt_decoder_forward.1} parent=1 // pred_fallthru
      _
    // Predicated region
    $region138: #{adt_decoder_forward.1} parent=1 // pred_check
      _
    $region139: #{adt_decoder_forward.1} parent=1 // pred_check_branch
      %3880 = sbr.rel (0) target = $region141
    $region140: #{adt_decoder_forward.1} parent=1 // pred_region
      _
    $region141: #{adt_decoder_forward.1} parent=1 // pred_fallthru
      _
    // Predicated region
    $region142: #{adt_decoder_forward.1} parent=1 // pred_check
      _
    $region143: #{adt_decoder_forward.1} parent=1 // pred_check_branch
      %3882 = sbr.rel (0) target = $region145
    $region144: #{adt_decoder_forward.1} parent=1 // pred_region
      %3884 = vsyncadd [#allocation5], 0
      %s3886 = sshll.u32 [#allocation21], 4
      %s3887 = int_to_ptr.vmem [resolvable:$true] %s3886
      %s3888 = sshll.u32 %s24, 4
      %s3889 = int_to_ptr.hbm [resolvable:$true] %s3888
      %3891 = dma.vmem_to_hbm [thread:$0]  %s3887, 32, %s3889, [#allocation5]
    $region145: #{adt_decoder_forward.1} parent=1 // pred_fallthru
      _
    // Predicated region
    $region146: #{adt_decoder_forward.1} parent=1 // pred_check
      _
    $region147: #{adt_decoder_forward.1} parent=1 // pred_check_branch
      %3893 = sbr.rel (0) target = $region149
    $region148: #{adt_decoder_forward.1} parent=1 // pred_region
      _
    $region149: #{adt_decoder_forward.1} parent=1 // pred_fallthru
      _
    // Predicated region
    $region150: #{adt_decoder_forward.1} parent=1 // pred_check
      _
    $region151: #{adt_decoder_forward.1} parent=1 // pred_check_branch
      %3895 = sbr.rel (0) target = $region153
    $region152: #{adt_decoder_forward.1} parent=1 // pred_region
      _
    $region153: #{adt_decoder_forward.1} parent=1 // pred_fallthru
      _
    // Predicated region
    $region154: #{adt_decoder_forward.1} parent=1 // pred_check
      _
    $region155: #{adt_decoder_forward.1} parent=1 // pred_check_branch
      %3897 = sbr.rel (0) target = $region157
    $region156: #{adt_decoder_forward.1} parent=1 // pred_region
      %3899 = dma.done [#allocation5], 32
    $region157: #{adt_decoder_forward.1} parent=1 // pred_fallthru
      _
    %3900 = vsyncpa [#allocation4], 1
    %3901 = vsyncpa [#allocation7], 1
    %3902 = vsyncpa [#allocation10], 1
    %3903 = vsyncpa [#allocation13], 1
    %3904 = vsyncpa [#allocation16], 1
    %3905 = vsyncpa [#allocation19], 1
    %3906 = vsyncpa [#allocation5], 1

</llo_original>
